<compile_context>
chip_gen: v7x
topology: tpu7x:2x2x1
jax: 0.10.0
libtpu: 0.0.40
codegen_flags: <defaults>
</compile_context>

<pallas_src>
import numpy as np
import jax
import jax.numpy as jnp
from jax.experimental import pallas as pl
from jax.experimental.pallas import tpu as pltpu


def _round_up(n, m):
    return ((n + m - 1) // m) * m


def _leaky(v):
    # nn.LeakyReLU default negative_slope = 0.01
    return jnp.where(v > 0, v, 0.01 * v)


# --------------------------------------------------------------------------- #
# Kernel
# --------------------------------------------------------------------------- #
def _tsception_kernel(x_ref, mconv_ref, ppool_ref, gs1_ref, gs2_ref, gf_ref,
                      w1_ref, w2_ref, bias_ref, o_ref):
    """One batch tile (TB examples) of the TSception forward pass."""
    f32 = jnp.float32
    cdt = mconv_ref.dtype                # matmul operand dtype (bf16 or f32)

    E, TB, T = x_ref.shape
    Eh = E // 2
    Lcp = mconv_ref.shape[1]             # padded conv-output columns
    Ns1 = gs1_ref.shape[2]               # padded num_S*Wt
    NF = gf_ref.shape[2]                 # padded num_S*W2
    Hp = w1_ref.shape[1]                 # padded hidden
    Cls = w2_ref.shape[1]                # padded num_classes

    # (E, TB, T) -> (E*TB, T): electrode+batch on sublanes, time on lanes
    # (leading-dim merge only; TB is a multiple of 8 so this is layout-free).
    x2 = x_ref[...].reshape(E * TB, T)

    # Tception1/2/3 (temporal convs) as one banded-conv-matrix matmul (MXU).
    h = jnp.dot(x2, mconv_ref[...], preferred_element_type=f32)
    h = _leaky(h + bias_ref[0:1, :Lcp])
    # AvgPool(1,8) + branch concat + BN_t scale as a second matmul.
    ot = jnp.dot(h.astype(cdt), ppool_ref[...], preferred_element_type=f32)
    otc = ot.astype(cdt)                 # (E*TB, Cp_pad); cast once, reuse.

    # Sception1 / Sception2: weight-stationary per-electrode column matmuls on
    # aligned row-block slices of otc, summed over electrodes.  BN_t shift is
    # folded into the bias rows.
    def sception(g_ref, elec_ids):
        acc = jnp.zeros((TB, Ns1), f32)
        for idx, e in enumerate(elec_ids):
            blk = otc[e * TB:(e + 1) * TB, :]
            acc = acc + jnp.dot(blk, g_ref[idx], preferred_element_type=f32)
        return acc

    z1 = _leaky(sception(gs1_ref, range(E)) + bias_ref[1:2, :Ns1])
    z2a = _leaky(sception(gs2_ref, range(Eh)) + bias_ref[2:3, :Ns1])
    z2b = _leaky(sception(gs2_ref, range(Eh, E)) + bias_ref[2:3, :Ns1])

    # AvgPool(1,2) + BN_s + fusion conv fused into three matmuls (one per
    # stacked Sception row), then LeakyReLU.
    f = (jnp.dot(z1.astype(cdt), gf_ref[0], preferred_element_type=f32)
         + jnp.dot(z2a.astype(cdt), gf_ref[1], preferred_element_type=f32)
         + jnp.dot(z2b.astype(cdt), gf_ref[2], preferred_element_type=f32))
    f = _leaky(f + bias_ref[3:4, :NF])

    # AvgPool(1,4) + BN_fusion + mean-over-time folded into the fc1 weights.
    h1 = jnp.dot(f.astype(cdt), w1_ref[...], preferred_element_type=f32)
    h1 = jnp.maximum(h1 + bias_ref[4:5, :Hp], 0.0)
    # TODO(synk): nn.Dropout is stochastic in training mode; identity here (eval).
    logits = (jnp.dot(h1.astype(cdt), w2_ref[...], preferred_element_type=f32)
              + bias_ref[5:6, :Cls])
    o_ref[...] = logits                  # lane-dense (TB, Cls) store


# --------------------------------------------------------------------------- #
# Host-side folding of convs, pooling and eval-mode BNs into matmul operands.
# --------------------------------------------------------------------------- #
def _prepare_constants(p, cfg):
    E, T = cfg["E"], cfg["T"]
    num_T, num_S = cfg["num_T"], cfg["num_S"]
    pool, pool_s, pool_f = cfg["pool"], cfg["pool_s"], cfg["pool_f"]
    kTs = cfg["kTs"]

    wt = [np.asarray(p["wt%d" % (i + 1)], np.float32) for i in range(3)]
    bt = [np.asarray(p["bt%d" % (i + 1)], np.float32) for i in range(3)]
    bnt_scale = np.asarray(p["bnt_scale"], np.float32)
    bnt_shift = np.asarray(p["bnt_shift"], np.float32)
    ws1 = np.asarray(p["ws1"], np.float32)          # (num_S, num_T, E)
    bs1 = np.asarray(p["bs1"], np.float32)
    ws2 = np.asarray(p["ws2"], np.float32)          # (num_S, num_T, Eh)
    bs2 = np.asarray(p["bs2"], np.float32)
    bns_scale = np.asarray(p["bns_scale"], np.float32)
    bns_shift = np.asarray(p["bns_shift"], np.float32)
    wf = np.asarray(p["wf"], np.float32)            # (num_S, num_S, 3)
    bf = np.asarray(p["bf"], np.float32)
    bnf_scale = np.asarray(p["bnf_scale"], np.float32)
    bnf_shift = np.asarray(p["bnf_shift"], np.float32)
    w1 = np.asarray(p["w1"], np.float32)            # (hidden, num_S)
    b1 = np.asarray(p["b1"], np.float32)
    w2 = np.asarray(p["w2"], np.float32)            # (num_classes, hidden)
    b2 = np.asarray(p["b2"], np.float32)
    hidden, ncls = w1.shape[0], w2.shape[0]

    T_outs = [T - k + 1 for k in kTs]
    n_pool = [to // pool for to in T_outs]
    Wt = int(sum(n_pool))
    W2 = Wt // pool_s
    Wf = W2 // pool_f
    valid_w = Wf * pool_f

    Lc = num_T * int(sum(T_outs))
    Lc_pad = _round_up(Lc, 128)
    Cp_pad = _round_up(num_T * Wt, 128)
    Ns1 = _round_up(num_S * Wt, 128)
    NF = _round_up(num_S * W2, 128)
    Hp = _round_up(hidden, 128)
    Cls = _round_up(ncls, 128)
    maxw = max(Lc_pad, Cp_pad, Ns1, NF, Hp, Cls)

    col_off = np.cumsum([0] + [num_T * to for to in T_outs])
    w_off = np.cumsum([0] + n_pool)

    # Banded temporal-conv matrix + bias row (cols: branch-major, channel, t').
    # TODO(synk): for realistic EEG T (>=256) split this per branch (K = kT
    # im2col matmuls) to cut the O(num_T*T^2) constant/VMEM footprint on v7x.
    mconv = np.zeros((T, Lc_pad), np.float32)
    bconv = np.zeros((maxw,), np.float32)
    # AvgPool(1,8) + branch concat + BN_t scale (cols: channel-major, width).
    ppool = np.zeros((Lc_pad, Cp_pad), np.float32)
    for i in range(3):
        to, kT = T_outs[i], kTs[i]
        for c in range(num_T):
            c0 = int(col_off[i]) + c * to
            for k in range(kT):
                mconv[k + np.arange(to), c0 + np.arange(to)] = wt[i][c, k]
            bconv[c0:c0 + to] = bt[i][c]
            for j in range(n_pool[i]):
                wcol = c * Wt + int(w_off[i]) + j
                ppool[c0 + pool * j:c0 + pool * (j + 1), wcol] = bnt_scale[c] / pool

    # Per-electrode Sception column matrices: rows (c, w) -> cols (s, w).
    def sception_mats(ws):
        n_e = ws.shape[2]
        g = np.zeros((n_e, Cp_pad, Ns1), np.float32)
        rng = np.arange(Wt)
        for e in range(n_e):
            for s in range(num_S):
                for c in range(num_T):
                    g[e, c * Wt + rng, s * Wt + rng] = ws[s, c, e]
        return g

    gs1 = sception_mats(ws1)                        # (E,  Cp_pad, Ns1)
    gs2 = sception_mats(ws2)                        # (Eh, Cp_pad, Ns1)

    # Sception biases with the BN_t shift folded in (constant over width).
    bias1 = np.zeros((maxw,), np.float32)
    bias2 = np.zeros((maxw,), np.float32)
    add1 = bs1 + np.einsum('sce,c->s', ws1, bnt_shift)
    add2 = bs2 + np.einsum('sce,c->s', ws2, bnt_shift)
    for s in range(num_S):
        bias1[s * Wt:(s + 1) * Wt] = add1[s]
        bias2[s * Wt:(s + 1) * Wt] = add2[s]

    # AvgPool(1,2) + BN_s scale + fusion conv, one matrix per stacked row
    # (row 0 = Sception1, rows 1/2 = the two Sception2 halves).
    gf = np.zeros((3, Ns1, NF), np.float32)
    for h in range(3):
        for so in range(num_S):
            for si in range(num_S):
                coef = wf[so, si, h] * bns_scale[si] / pool_s
                for v in range(W2):
                    for w in range(pool_s * v, pool_s * (v + 1)):
                        gf[h, si * Wt + w, so * W2 + v] = coef
    bfuse = np.zeros((maxw,), np.float32)
    addf = bf + np.einsum('oih,i->o', wf, bns_shift)
    for s in range(num_S):
        bfuse[s * W2:(s + 1) * W2] = addf[s]

    # fc1 with AvgPool(1,4), BN_fusion and the final time-mean folded in.
    w1f = np.zeros((NF, Hp), np.float32)
    for s in range(num_S):
        for v in range(valid_w):
            w1f[s * W2 + v, :hidden] = w1[:, s] * bnf_scale[s] / valid_w
    b1row = np.zeros((maxw,), np.float32)
    b1row[:hidden] = b1 + w1 @ bnf_shift

    w2f = np.zeros((Hp, Cls), np.float32)
    w2f[:hidden, :ncls] = w2.T
    b2row = np.zeros((maxw,), np.float32)
    b2row[:ncls] = b2

    bias = np.zeros((8, maxw), np.float32)
    bias[0] = bconv
    bias[1] = bias1
    bias[2] = bias2
    bias[3] = bfuse
    bias[4] = b1row
    bias[5] = b2row

    mats = dict(mconv=mconv, ppool=ppool, gs1=gs1, gs2=gs2, gf=gf,
                w1=w1f, w2=w2f)
    dims = dict(Lc_pad=Lc_pad, Cp_pad=Cp_pad, Ns1=Ns1, NF=NF, Hp=Hp, Cls=Cls)
    return mats, bias, dims


# --------------------------------------------------------------------------- #
# Pallas wrapper
# --------------------------------------------------------------------------- #
def tsception_pallas(x, params, cfg, batch_tile=None, use_bf16=True):
    """Eval-mode TSception forward.  x: (B, num_electrodes, num_datapoints)."""
    x = jnp.asarray(x, jnp.float32)
    B, E, T = x.shape
    ncls = cfg["num_classes"]
    mdtype = jnp.bfloat16 if use_bf16 else jnp.float32

    mats, bias, dims = _prepare_constants(params, cfg)
    consts = [jnp.asarray(mats[k], mdtype)
              for k in ("mconv", "ppool", "gs1", "gs2", "gf", "w1", "w2")]
    consts.append(jnp.asarray(bias, jnp.float32))

    # Batch tile: big enough to amortize per-step overhead, but (when B allows)
    # at least 2 grid steps so v7x's two TensorCores both get work.
    if batch_tile is None:
        b8 = _round_up(B, 8)
        batch_tile = min(128, _round_up(b8 // 2, 8)) if b8 >= 16 else b8
    TB = max(8, _round_up(batch_tile, 8))
    B_pad = _round_up(B, TB)
    grid = (B_pad // TB,)

    xt = jnp.transpose(
        jnp.pad(x, ((0, B_pad - B), (0, 0), (0, 0))), (1, 0, 2)).astype(mdtype)

    Cls = dims["Cls"]
    x_spec = pl.BlockSpec((E, TB, T), lambda i: (0, i, 0))
    out_spec = pl.BlockSpec((TB, Cls), lambda i: (i, 0))

    # Advisory cost estimate for the XLA scheduler.
    mm = (E * TB * T * dims["Lc_pad"]
          + E * TB * dims["Lc_pad"] * dims["Cp_pad"]
          + 2 * E * TB * dims["Cp_pad"] * dims["Ns1"]
          + 3 * TB * dims["Ns1"] * dims["NF"]
          + TB * dims["NF"] * dims["Hp"] + TB * dims["Hp"] * Cls)
    cost = pl.CostEstimate(
        flops=int(2 * mm * grid[0]),
        transcendentals=0,
        bytes_accessed=int(xt.size * xt.dtype.itemsize
                           + sum(c.size * c.dtype.itemsize for c in consts)
                           + B_pad * Cls * 4))

    def build(single_buffer_consts):
        def cspec(a):
            idx = lambda i, _n=a.ndim: (0,) * _n
            if single_buffer_consts:
                # Constant operands: their block index never changes, so a
                # single VMEM buffer suffices (saves VMEM; matters on v7x).
                return pl.BlockSpec(a.shape, idx, pipeline_mode=pl.Buffered(1))
            return pl.BlockSpec(a.shape, idx)

        return pl.pallas_call(
            _tsception_kernel,
            out_shape=jax.ShapeDtypeStruct((B_pad, Cls), jnp.float32),
            grid_spec=pltpu.PrefetchScalarGridSpec(
                num_scalar_prefetch=0,
                grid=grid,
                in_specs=[x_spec] + [cspec(c) for c in consts],
                out_specs=out_spec),
            compiler_params=pltpu.CompilerParams(
                dimension_semantics=("parallel",),
                vmem_limit_bytes=64 * 1024 * 1024),
            cost_estimate=cost,
        )

    try:
        out = build(True)(xt, *consts)
    except Exception:
        # Fallback if this Pallas version rejects Buffered(1) on inputs.
        out = build(False)(xt, *consts)

    return out[:B, :ncls]


# --------------------------------------------------------------------------- #
# Parameter init (PyTorch-like raw parameters, eval-mode BN as scale/shift)
# --------------------------------------------------------------------------- #
def init_params(key, E, T, num_T, num_S, hidden, num_classes):
    kTs = (int(0.5 * T), int(0.25 * T), int(0.125 * T))
    Eh = E // 2
    keys = iter(jax.random.split(key, 40))

    def nrm(shape, scale=0.1):
        return scale * jax.random.normal(next(keys), shape, dtype=jnp.float32)

    def bn(C):
        gamma = 1.0 + 0.1 * jax.random.normal(next(keys), (C,), jnp.float32)
        beta = 0.1 * jax.random.normal(next(keys), (C,), jnp.float32)
        mean = 0.05 * jax.random.normal(next(keys), (C,), jnp.float32)
        var = 0.5 + jax.random.uniform(next(keys), (C,), jnp.float32)
        scale = gamma / jnp.sqrt(var + 1e-5)
        shift = beta - mean * scale
        return scale, shift

    p = {}
    p["wt1"], p["bt1"] = nrm((num_T, kTs[0])), nrm((num_T,))
    p["wt2"], p["bt2"] = nrm((num_T, kTs[1])), nrm((num_T,))
    p["wt3"], p["bt3"] = nrm((num_T, kTs[2])), nrm((num_T,))
    p["bnt_scale"], p["bnt_shift"] = bn(num_T)
    p["ws1"], p["bs1"] = nrm((num_S, num_T, E)), nrm((num_S,))
    p["ws2"], p["bs2"] = nrm((num_S, num_T, Eh)), nrm((num_S,))
    p["bns_scale"], p["bns_shift"] = bn(num_S)
    p["wf"], p["bf"] = nrm((num_S, num_S, 3)), nrm((num_S,))
    p["bnf_scale"], p["bnf_shift"] = bn(num_S)
    p["w1"], p["b1"] = nrm((hidden, num_S)), nrm((hidden,))
    p["w2"], p["b2"] = nrm((num_classes, hidden)), nrm((num_classes,))
    return p, kTs


# --------------------------------------------------------------------------- #
# Pure-JAX reference (mirrors the PyTorch forward, eval-mode BN/Dropout)
# --------------------------------------------------------------------------- #
def tsception_reference(x, p, cfg):
    B, E, T = x.shape
    pool, pool_s, pool_f = cfg["pool"], cfg["pool_s"], cfg["pool_f"]
    kTs = cfg["kTs"]
    Eh = E // 2

    def pool_last(y, pp):
        n = y.shape[-1] // pp
        y = y[..., :n * pp]
        return y.reshape(y.shape[:-1] + (n, pp)).mean(-1)

    def tcep(W, b, kT):
        T_out = T - kT + 1
        win = jnp.stack([x[:, :, k:k + T_out] for k in range(kT)], axis=-1)
        y = jnp.einsum('betk,ck->bcet', win, W) + b[None, :, None, None]
        return pool_last(_leaky(y), pool)

    y1 = tcep(p["wt1"], p["bt1"], kTs[0])
    y2 = tcep(p["wt2"], p["bt2"], kTs[1])
    y3 = tcep(p["wt3"], p["bt3"], kTs[2])
    out_t = jnp.concatenate([y1, y2, y3], axis=-1)                # (B,num_T,E,Wt)
    out_t = (out_t * p["bnt_scale"][None, :, None, None]
             + p["bnt_shift"][None, :, None, None])

    def scep(W, b, sub):
        y = jnp.einsum('bcew,sce->bsw', sub, W) + b[None, :, None]
        return pool_last(_leaky(y), pool_s)

    z1 = scep(p["ws1"], p["bs1"], out_t)
    z2a = scep(p["ws2"], p["bs2"], out_t[:, :, :Eh, :])
    z2b = scep(p["ws2"], p["bs2"], out_t[:, :, Eh:, :])
    out_s = jnp.stack([z1, z2a, z2b], axis=2)                     # (B,num_S,3,W2)
    out_s = (out_s * p["bns_scale"][None, :, None, None]
             + p["bns_shift"][None, :, None, None])

    fused = jnp.einsum('bphw,sph->bsw', out_s, p["wf"]) + p["bf"][None, :, None]
    fused = pool_last(_leaky(fused), pool_f)
    fused = (fused * p["bnf_scale"][None, :, None]
             + p["bnf_shift"][None, :, None])
    feat = fused.mean(-1)                                         # (B, num_S)
    h = jnp.maximum(feat @ p["w1"].T + p["b1"][None, :], 0.0)
    return h @ p["w2"].T + p["b2"][None, :]


if __name__ == "__main__":
    # Small shapes consistent with the module:
    #   batch=2, electrodes=4, datapoints=64, num_T=num_S=6, hidden=32, classes=3
    B, E, T = 2, 4, 64
    num_T, num_S, hidden, num_classes = 6, 6, 32, 3

    key = jax.random.PRNGKey(0)
    kx, kp = jax.random.split(key)
    x = jax.random.normal(kx, (B, E, T), dtype=jnp.float32)
    params, kTs = init_params(kp, E, T, num_T, num_S, hidden, num_classes)
    cfg = dict(E=E, T=T, num_T=num_T, num_S=num_S, num_classes=num_classes,
               pool=8, pool_s=2, pool_f=4, kTs=kTs)

    ref = tsception_reference(x, params, cfg)

    # f32 matmul operands: tight check of the folded/fused restructuring.
    out_f32 = jax.block_until_ready(
        tsception_pallas(x, params, cfg, use_bf16=False))
    assert out_f32.shape == (B, num_classes), out_f32.shape
    if not jnp.allclose(out_f32, ref, atol=1e-2, rtol=1e-2):
        raise AssertionError(f"f32 mismatch:\npallas=\n{out_f32}\nref=\n{ref}")

    # bf16 MXU operands with f32 accumulation (perf-review recommendation);
    # tolerance widened accordingly for bf16 operand rounding.
    out_bf16 = jax.block_until_ready(
        tsception_pallas(x, params, cfg, use_bf16=True))
    if not jnp.allclose(out_bf16, ref, atol=3e-2, rtol=3e-2):
        raise AssertionError(f"bf16 mismatch:\npallas=\n{out_bf16}\nref=\n{ref}")

    print("KERNEL_OK")
</pallas_src>

<mosaic_0001>
module attributes {stable_mosaic.version = 11 : i64} {
  func.func @_tsception_kernel(%arg0: i32, %arg1: memref<4x8x64xf32, #tpu.memory_space<vmem>>, %arg2: memref<64x896xf32, #tpu.memory_space<vmem>>, %arg3: memref<896x128xf32, #tpu.memory_space<vmem>>, %arg4: memref<4x128x128xf32, #tpu.memory_space<vmem>>, %arg5: memref<2x128x128xf32, #tpu.memory_space<vmem>>, %arg6: memref<3x128x128xf32, #tpu.memory_space<vmem>>, %arg7: memref<128x128xf32, #tpu.memory_space<vmem>>, %arg8: memref<128x128xf32, #tpu.memory_space<vmem>>, %arg9: memref<8x896xf32, #tpu.memory_space<vmem>>, %arg10: memref<8x128xf32, #tpu.memory_space<vmem>>) attributes {dimension_semantics = [#tpu.dimension_semantics<parallel>], iteration_bounds = array<i64: 1>, scalar_prefetch = 0 : i64, scratch_operands = 0 : i64, tpu.core_type = #tpu.core_type<tc>, window_params = [{transform_indices = @transform_0, window_bounds = array<i64: 4, 8, 64>}, {pipeline_mode = #tpu.pipeline_mode<synchronous>, transform_indices = @transform_1, window_bounds = array<i64: 64, 896>}, {pipeline_mode = #tpu.pipeline_mode<synchronous>, transform_indices = @transform_2, window_bounds = array<i64: 896, 128>}, {pipeline_mode = #tpu.pipeline_mode<synchronous>, transform_indices = @transform_3, window_bounds = array<i64: 4, 128, 128>}, {pipeline_mode = #tpu.pipeline_mode<synchronous>, transform_indices = @transform_4, window_bounds = array<i64: 2, 128, 128>}, {pipeline_mode = #tpu.pipeline_mode<synchronous>, transform_indices = @transform_5, window_bounds = array<i64: 3, 128, 128>}, {pipeline_mode = #tpu.pipeline_mode<synchronous>, transform_indices = @transform_6, window_bounds = array<i64: 128, 128>}, {pipeline_mode = #tpu.pipeline_mode<synchronous>, transform_indices = @transform_7, window_bounds = array<i64: 128, 128>}, {pipeline_mode = #tpu.pipeline_mode<synchronous>, transform_indices = @transform_8, window_bounds = array<i64: 8, 896>}, {transform_indices = @transform_9, window_bounds = array<i64: 8, 128>}]} {
    %c0 = arith.constant 0 : index
    %c0_0 = arith.constant 0 : index
    %c0_1 = arith.constant 0 : index
    %0 = vector.load %arg1[%c0, %c0_0, %c0_1] : memref<4x8x64xf32, #tpu.memory_space<vmem>>, vector<4x8x64xf32>
    %1 = vector.shape_cast %0 : vector<4x8x64xf32> to vector<32x64xf32>
    %c0_2 = arith.constant 0 : index
    %c0_3 = arith.constant 0 : index
    %2 = vector.load %arg2[%c0_2, %c0_3] : memref<64x896xf32, #tpu.memory_space<vmem>>, vector<64x896xf32>
    %cst = arith.constant dense<0.000000e+00> : vector<32x896xf32>
    %3 = tpu.matmul %1, %2, %cst {dimension_numbers = #tpu.dot_dimension_numbers<[1], [0], [0], [1], [0, 0, 1, 1], [], []>} : vector<32x64xf32>, vector<64x896xf32>, vector<32x896xf32> -> vector<32x896xf32>
    %c0_4 = arith.constant 0 : index
    %c0_5 = arith.constant 0 : index
    %4 = vector.load %arg9[%c0_4, %c0_5] : memref<8x896xf32, #tpu.memory_space<vmem>>, vector<1x896xf32>
    %5 = vector.broadcast %4 : vector<1x896xf32> to vector<32x896xf32>
    %6 = arith.addf %3, %5 : vector<32x896xf32>
    %cst_6 = arith.constant 0.000000e+00 : f32
    %7 = vector.broadcast %cst_6 : f32 to vector<32x896xf32>
    %8 = arith.cmpf ogt, %6, %7 : vector<32x896xf32>
    %cst_7 = arith.constant 0.00999999977 : f32
    %9 = vector.broadcast %cst_7 : f32 to vector<32x896xf32>
    %10 = arith.mulf %9, %6 : vector<32x896xf32>
    %11 = arith.select %8, %6, %10 : vector<32x896xi1>, vector<32x896xf32>
    %c0_8 = arith.constant 0 : index
    %c0_9 = arith.constant 0 : index
    %12 = vector.load %arg3[%c0_8, %c0_9] : memref<896x128xf32, #tpu.memory_space<vmem>>, vector<896x128xf32>
    %cst_10 = arith.constant dense<0.000000e+00> : vector<32x128xf32>
    %13 = tpu.matmul %11, %12, %cst_10 {dimension_numbers = #tpu.dot_dimension_numbers<[1], [0], [0], [1], [0, 0, 1, 1], [], []>} : vector<32x896xf32>, vector<896x128xf32>, vector<32x128xf32> -> vector<32x128xf32>
    %cst_11 = arith.constant 0.000000e+00 : f32
    %14 = vector.broadcast %cst_11 : f32 to vector<8x128xf32>
    %15 = vector.extract_strided_slice %13 {offsets = [0, 0], sizes = [8, 128], strides = [1, 1]} : vector<32x128xf32> to vector<8x128xf32>
    %c0_12 = arith.constant 0 : index
    %c0_13 = arith.constant 0 : index
    %c0_14 = arith.constant 0 : index
    %16 = vector.load %arg4[%c0_12, %c0_13, %c0_14] : memref<4x128x128xf32, #tpu.memory_space<vmem>>, vector<1x128x128xf32>
    %17 = vector.shape_cast %16 : vector<1x128x128xf32> to vector<128x128xf32>
    %cst_15 = arith.constant dense<0.000000e+00> : vector<8x128xf32>
    %18 = tpu.matmul %15, %17, %cst_15 {dimension_numbers = #tpu.dot_dimension_numbers<[1], [0], [0], [1], [0, 0, 1, 1], [], []>} : vector<8x128xf32>, vector<128x128xf32>, vector<8x128xf32> -> vector<8x128xf32>
    %19 = arith.addf %14, %18 : vector<8x128xf32>
    %20 = vector.extract_strided_slice %13 {offsets = [8, 0], sizes = [8, 128], strides = [1, 1]} : vector<32x128xf32> to vector<8x128xf32>
    %c1 = arith.constant 1 : index
    %c0_16 = arith.constant 0 : index
    %c0_17 = arith.constant 0 : index
    %21 = vector.load %arg4[%c1, %c0_16, %c0_17] : memref<4x128x128xf32, #tpu.memory_space<vmem>>, vector<1x128x128xf32>
    %22 = vector.shape_cast %21 : vector<1x128x128xf32> to vector<128x128xf32>
    %cst_18 = arith.constant dense<0.000000e+00> : vector<8x128xf32>
    %23 = tpu.matmul %20, %22, %cst_18 {dimension_numbers = #tpu.dot_dimension_numbers<[1], [0], [0], [1], [0, 0, 1, 1], [], []>} : vector<8x128xf32>, vector<128x128xf32>, vector<8x128xf32> -> vector<8x128xf32>
    %24 = arith.addf %19, %23 : vector<8x128xf32>
    %25 = vector.extract_strided_slice %13 {offsets = [16, 0], sizes = [8, 128], strides = [1, 1]} : vector<32x128xf32> to vector<8x128xf32>
    %c2 = arith.constant 2 : index
    %c0_19 = arith.constant 0 : index
    %c0_20 = arith.constant 0 : index
    %26 = vector.load %arg4[%c2, %c0_19, %c0_20] : memref<4x128x128xf32, #tpu.memory_space<vmem>>, vector<1x128x128xf32>
    %27 = vector.shape_cast %26 : vector<1x128x128xf32> to vector<128x128xf32>
    %cst_21 = arith.constant dense<0.000000e+00> : vector<8x128xf32>
    %28 = tpu.matmul %25, %27, %cst_21 {dimension_numbers = #tpu.dot_dimension_numbers<[1], [0], [0], [1], [0, 0, 1, 1], [], []>} : vector<8x128xf32>, vector<128x128xf32>, vector<8x128xf32> -> vector<8x128xf32>
    %29 = arith.addf %24, %28 : vector<8x128xf32>
    %30 = vector.extract_strided_slice %13 {offsets = [24, 0], sizes = [8, 128], strides = [1, 1]} : vector<32x128xf32> to vector<8x128xf32>
    %c3 = arith.constant 3 : index
    %c0_22 = arith.constant 0 : index
    %c0_23 = arith.constant 0 : index
    %31 = vector.load %arg4[%c3, %c0_22, %c0_23] : memref<4x128x128xf32, #tpu.memory_space<vmem>>, vector<1x128x128xf32>
    %32 = vector.shape_cast %31 : vector<1x128x128xf32> to vector<128x128xf32>
    %cst_24 = arith.constant dense<0.000000e+00> : vector<8x128xf32>
    %33 = tpu.matmul %30, %32, %cst_24 {dimension_numbers = #tpu.dot_dimension_numbers<[1], [0], [0], [1], [0, 0, 1, 1], [], []>} : vector<8x128xf32>, vector<128x128xf32>, vector<8x128xf32> -> vector<8x128xf32>
    %34 = arith.addf %29, %33 : vector<8x128xf32>
    %c1_25 = arith.constant 1 : index
    %c0_26 = arith.constant 0 : index
    %35 = vector.load %arg9[%c1_25, %c0_26] : memref<8x896xf32, #tpu.memory_space<vmem>>, vector<1x128xf32>
    %36 = vector.broadcast %35 : vector<1x128xf32> to vector<8x128xf32>
    %37 = arith.addf %34, %36 : vector<8x128xf32>
    %cst_27 = arith.constant 0.000000e+00 : f32
    %38 = vector.broadcast %cst_27 : f32 to vector<8x128xf32>
    %39 = arith.cmpf ogt, %37, %38 : vector<8x128xf32>
    %cst_28 = arith.constant 0.00999999977 : f32
    %40 = vector.broadcast %cst_28 : f32 to vector<8x128xf32>
    %41 = arith.mulf %40, %37 : vector<8x128xf32>
    %42 = arith.select %39, %37, %41 : vector<8x128xi1>, vector<8x128xf32>
    %cst_29 = arith.constant 0.000000e+00 : f32
    %43 = vector.broadcast %cst_29 : f32 to vector<8x128xf32>
    %44 = vector.extract_strided_slice %13 {offsets = [0, 0], sizes = [8, 128], strides = [1, 1]} : vector<32x128xf32> to vector<8x128xf32>
    %c0_30 = arith.constant 0 : index
    %c0_31 = arith.constant 0 : index
    %c0_32 = arith.constant 0 : index
    %45 = vector.load %arg5[%c0_30, %c0_31, %c0_32] : memref<2x128x128xf32, #tpu.memory_space<vmem>>, vector<1x128x128xf32>
    %46 = vector.shape_cast %45 : vector<1x128x128xf32> to vector<128x128xf32>
    %cst_33 = arith.constant dense<0.000000e+00> : vector<8x128xf32>
    %47 = tpu.matmul %44, %46, %cst_33 {dimension_numbers = #tpu.dot_dimension_numbers<[1], [0], [0], [1], [0, 0, 1, 1], [], []>} : vector<8x128xf32>, vector<128x128xf32>, vector<8x128xf32> -> vector<8x128xf32>
    %48 = arith.addf %43, %47 : vector<8x128xf32>
    %49 = vector.extract_strided_slice %13 {offsets = [8, 0], sizes = [8, 128], strides = [1, 1]} : vector<32x128xf32> to vector<8x128xf32>
    %c1_34 = arith.constant 1 : index
    %c0_35 = arith.constant 0 : index
    %c0_36 = arith.constant 0 : index
    %50 = vector.load %arg5[%c1_34, %c0_35, %c0_36] : memref<2x128x128xf32, #tpu.memory_space<vmem>>, vector<1x128x128xf32>
    %51 = vector.shape_cast %50 : vector<1x128x128xf32> to vector<128x128xf32>
    %cst_37 = arith.constant dense<0.000000e+00> : vector<8x128xf32>
    %52 = tpu.matmul %49, %51, %cst_37 {dimension_numbers = #tpu.dot_dimension_numbers<[1], [0], [0], [1], [0, 0, 1, 1], [], []>} : vector<8x128xf32>, vector<128x128xf32>, vector<8x128xf32> -> vector<8x128xf32>
    %53 = arith.addf %48, %52 : vector<8x128xf32>
    %c2_38 = arith.constant 2 : index
    %c0_39 = arith.constant 0 : index
    %54 = vector.load %arg9[%c2_38, %c0_39] : memref<8x896xf32, #tpu.memory_space<vmem>>, vector<1x128xf32>
    %55 = vector.broadcast %54 : vector<1x128xf32> to vector<8x128xf32>
    %56 = arith.addf %53, %55 : vector<8x128xf32>
    %cst_40 = arith.constant 0.000000e+00 : f32
    %57 = vector.broadcast %cst_40 : f32 to vector<8x128xf32>
    %58 = arith.cmpf ogt, %56, %57 : vector<8x128xf32>
    %cst_41 = arith.constant 0.00999999977 : f32
    %59 = vector.broadcast %cst_41 : f32 to vector<8x128xf32>
    %60 = arith.mulf %59, %56 : vector<8x128xf32>
    %61 = arith.select %58, %56, %60 : vector<8x128xi1>, vector<8x128xf32>
    %cst_42 = arith.constant 0.000000e+00 : f32
    %62 = vector.broadcast %cst_42 : f32 to vector<8x128xf32>
    %63 = vector.extract_strided_slice %13 {offsets = [16, 0], sizes = [8, 128], strides = [1, 1]} : vector<32x128xf32> to vector<8x128xf32>
    %c0_43 = arith.constant 0 : index
    %c0_44 = arith.constant 0 : index
    %c0_45 = arith.constant 0 : index
    %64 = vector.load %arg5[%c0_43, %c0_44, %c0_45] : memref<2x128x128xf32, #tpu.memory_space<vmem>>, vector<1x128x128xf32>
    %65 = vector.shape_cast %64 : vector<1x128x128xf32> to vector<128x128xf32>
    %cst_46 = arith.constant dense<0.000000e+00> : vector<8x128xf32>
    %66 = tpu.matmul %63, %65, %cst_46 {dimension_numbers = #tpu.dot_dimension_numbers<[1], [0], [0], [1], [0, 0, 1, 1], [], []>} : vector<8x128xf32>, vector<128x128xf32>, vector<8x128xf32> -> vector<8x128xf32>
    %67 = arith.addf %62, %66 : vector<8x128xf32>
    %68 = vector.extract_strided_slice %13 {offsets = [24, 0], sizes = [8, 128], strides = [1, 1]} : vector<32x128xf32> to vector<8x128xf32>
    %c1_47 = arith.constant 1 : index
    %c0_48 = arith.constant 0 : index
    %c0_49 = arith.constant 0 : index
    %69 = vector.load %arg5[%c1_47, %c0_48, %c0_49] : memref<2x128x128xf32, #tpu.memory_space<vmem>>, vector<1x128x128xf32>
    %70 = vector.shape_cast %69 : vector<1x128x128xf32> to vector<128x128xf32>
    %cst_50 = arith.constant dense<0.000000e+00> : vector<8x128xf32>
    %71 = tpu.matmul %68, %70, %cst_50 {dimension_numbers = #tpu.dot_dimension_numbers<[1], [0], [0], [1], [0, 0, 1, 1], [], []>} : vector<8x128xf32>, vector<128x128xf32>, vector<8x128xf32> -> vector<8x128xf32>
    %72 = arith.addf %67, %71 : vector<8x128xf32>
    %c2_51 = arith.constant 2 : index
    %c0_52 = arith.constant 0 : index
    %73 = vector.load %arg9[%c2_51, %c0_52] : memref<8x896xf32, #tpu.memory_space<vmem>>, vector<1x128xf32>
    %74 = vector.broadcast %73 : vector<1x128xf32> to vector<8x128xf32>
    %75 = arith.addf %72, %74 : vector<8x128xf32>
    %cst_53 = arith.constant 0.000000e+00 : f32
    %76 = vector.broadcast %cst_53 : f32 to vector<8x128xf32>
    %77 = arith.cmpf ogt, %75, %76 : vector<8x128xf32>
    %cst_54 = arith.constant 0.00999999977 : f32
    %78 = vector.broadcast %cst_54 : f32 to vector<8x128xf32>
    %79 = arith.mulf %78, %75 : vector<8x128xf32>
    %80 = arith.select %77, %75, %79 : vector<8x128xi1>, vector<8x128xf32>
    %c0_55 = arith.constant 0 : index
    %c0_56 = arith.constant 0 : index
    %c0_57 = arith.constant 0 : index
    %81 = vector.load %arg6[%c0_55, %c0_56, %c0_57] : memref<3x128x128xf32, #tpu.memory_space<vmem>>, vector<1x128x128xf32>
    %82 = vector.shape_cast %81 : vector<1x128x128xf32> to vector<128x128xf32>
    %cst_58 = arith.constant dense<0.000000e+00> : vector<8x128xf32>
    %83 = tpu.matmul %42, %82, %cst_58 {dimension_numbers = #tpu.dot_dimension_numbers<[1], [0], [0], [1], [0, 0, 1, 1], [], []>} : vector<8x128xf32>, vector<128x128xf32>, vector<8x128xf32> -> vector<8x128xf32>
    %c1_59 = arith.constant 1 : index
    %c0_60 = arith.constant 0 : index
    %c0_61 = arith.constant 0 : index
    %84 = vector.load %arg6[%c1_59, %c0_60, %c0_61] : memref<3x128x128xf32, #tpu.memory_space<vmem>>, vector<1x128x128xf32>
    %85 = vector.shape_cast %84 : vector<1x128x128xf32> to vector<128x128xf32>
    %cst_62 = arith.constant dense<0.000000e+00> : vector<8x128xf32>
    %86 = tpu.matmul %61, %85, %cst_62 {dimension_numbers = #tpu.dot_dimension_numbers<[1], [0], [0], [1], [0, 0, 1, 1], [], []>} : vector<8x128xf32>, vector<128x128xf32>, vector<8x128xf32> -> vector<8x128xf32>
    %87 = arith.addf %83, %86 : vector<8x128xf32>
    %c2_63 = arith.constant 2 : index
    %c0_64 = arith.constant 0 : index
    %c0_65 = arith.constant 0 : index
    %88 = vector.load %arg6[%c2_63, %c0_64, %c0_65] : memref<3x128x128xf32, #tpu.memory_space<vmem>>, vector<1x128x128xf32>
    %89 = vector.shape_cast %88 : vector<1x128x128xf32> to vector<128x128xf32>
    %cst_66 = arith.constant dense<0.000000e+00> : vector<8x128xf32>
    %90 = tpu.matmul %80, %89, %cst_66 {dimension_numbers = #tpu.dot_dimension_numbers<[1], [0], [0], [1], [0, 0, 1, 1], [], []>} : vector<8x128xf32>, vector<128x128xf32>, vector<8x128xf32> -> vector<8x128xf32>
    %91 = arith.addf %87, %90 : vector<8x128xf32>
    %c3_67 = arith.constant 3 : index
    %c0_68 = arith.constant 0 : index
    %92 = vector.load %arg9[%c3_67, %c0_68] : memref<8x896xf32, #tpu.memory_space<vmem>>, vector<1x128xf32>
    %93 = vector.broadcast %92 : vector<1x128xf32> to vector<8x128xf32>
    %94 = arith.addf %91, %93 : vector<8x128xf32>
    %cst_69 = arith.constant 0.000000e+00 : f32
    %95 = vector.broadcast %cst_69 : f32 to vector<8x128xf32>
    %96 = arith.cmpf ogt, %94, %95 : vector<8x128xf32>
    %cst_70 = arith.constant 0.00999999977 : f32
    %97 = vector.broadcast %cst_70 : f32 to vector<8x128xf32>
    %98 = arith.mulf %97, %94 : vector<8x128xf32>
    %99 = arith.select %96, %94, %98 : vector<8x128xi1>, vector<8x128xf32>
    %c0_71 = arith.constant 0 : index
    %c0_72 = arith.constant 0 : index
    %100 = vector.load %arg7[%c0_71, %c0_72] : memref<128x128xf32, #tpu.memory_space<vmem>>, vector<128x128xf32>
    %cst_73 = arith.constant dense<0.000000e+00> : vector<8x128xf32>
    %101 = tpu.matmul %99, %100, %cst_73 {dimension_numbers = #tpu.dot_dimension_numbers<[1], [0], [0], [1], [0, 0, 1, 1], [], []>} : vector<8x128xf32>, vector<128x128xf32>, vector<8x128xf32> -> vector<8x128xf32>
    %c4 = arith.constant 4 : index
    %c0_74 = arith.constant 0 : index
    %102 = vector.load %arg9[%c4, %c0_74] : memref<8x896xf32, #tpu.memory_space<vmem>>, vector<1x128xf32>
    %103 = vector.broadcast %102 : vector<1x128xf32> to vector<8x128xf32>
    %104 = arith.addf %101, %103 : vector<8x128xf32>
    %cst_75 = arith.constant 0.000000e+00 : f32
    %105 = vector.broadcast %cst_75 : f32 to vector<8x128xf32>
    %106 = arith.maximumf %104, %105 : vector<8x128xf32>
    %c0_76 = arith.constant 0 : index
    %c0_77 = arith.constant 0 : index
    %107 = vector.load %arg8[%c0_76, %c0_77] : memref<128x128xf32, #tpu.memory_space<vmem>>, vector<128x128xf32>
    %cst_78 = arith.constant dense<0.000000e+00> : vector<8x128xf32>
    %108 = tpu.matmul %106, %107, %cst_78 {dimension_numbers = #tpu.dot_dimension_numbers<[1], [0], [0], [1], [0, 0, 1, 1], [], []>} : vector<8x128xf32>, vector<128x128xf32>, vector<8x128xf32> -> vector<8x128xf32>
    %c5 = arith.constant 5 : index
    %c0_79 = arith.constant 0 : index
    %109 = vector.load %arg9[%c5, %c0_79] : memref<8x896xf32, #tpu.memory_space<vmem>>, vector<1x128xf32>
    %110 = vector.broadcast %109 : vector<1x128xf32> to vector<8x128xf32>
    %111 = arith.addf %108, %110 : vector<8x128xf32>
    %c0_80 = arith.constant 0 : index
    %c0_81 = arith.constant 0 : index
    %112 = vector.load %arg10[%c0_80, %c0_81] : memref<8x128xf32, #tpu.memory_space<vmem>>, vector<8x128xf32>
    tpu.vector_store %arg10[%c0_80, %c0_81], %111 {strides = array<i32>} : memref<8x128xf32, #tpu.memory_space<vmem>>, vector<8x128xf32>,
    return
  }
  func.func @transform_0(%arg0: i32) -> (i32, i32, i32) {
    %c0_i32 = arith.constant 0 : i32
    %c0_i32_0 = arith.constant 0 : i32
    %c0_i32_1 = arith.constant 0 : i32
    return %c0_i32, %arg0, %c0_i32_0 : i32, i32, i32
  }
  func.func @transform_1(%arg0: i32) -> (i32, i32) {
    %c0_i32 = arith.constant 0 : i32
    %c0_i32_0 = arith.constant 0 : i32
    %c0_i32_1 = arith.constant 0 : i32
    return %c0_i32, %c0_i32_0 : i32, i32
  }
  func.func @transform_2(%arg0: i32) -> (i32, i32) {
    %c0_i32 = arith.constant 0 : i32
    %c0_i32_0 = arith.constant 0 : i32
    %c0_i32_1 = arith.constant 0 : i32
    return %c0_i32, %c0_i32_0 : i32, i32
  }
  func.func @transform_3(%arg0: i32) -> (i32, i32, i32) {
    %c0_i32 = arith.constant 0 : i32
    %c0_i32_0 = arith.constant 0 : i32
    %c0_i32_1 = arith.constant 0 : i32
    %c0_i32_2 = arith.constant 0 : i32
    return %c0_i32, %c0_i32_0, %c0_i32_1 : i32, i32, i32
  }
  func.func @transform_4(%arg0: i32) -> (i32, i32, i32) {
    %c0_i32 = arith.constant 0 : i32
    %c0_i32_0 = arith.constant 0 : i32
    %c0_i32_1 = arith.constant 0 : i32
    %c0_i32_2 = arith.constant 0 : i32
    return %c0_i32, %c0_i32_0, %c0_i32_1 : i32, i32, i32
  }
  func.func @transform_5(%arg0: i32) -> (i32, i32, i32) {
    %c0_i32 = arith.constant 0 : i32
    %c0_i32_0 = arith.constant 0 : i32
    %c0_i32_1 = arith.constant 0 : i32
    %c0_i32_2 = arith.constant 0 : i32
    return %c0_i32, %c0_i32_0, %c0_i32_1 : i32, i32, i32
  }
  func.func @transform_6(%arg0: i32) -> (i32, i32) {
    %c0_i32 = arith.constant 0 : i32
    %c0_i32_0 = arith.constant 0 : i32
    %c0_i32_1 = arith.constant 0 : i32
    return %c0_i32, %c0_i32_0 : i32, i32
  }
  func.func @transform_7(%arg0: i32) -> (i32, i32) {
    %c0_i32 = arith.constant 0 : i32
    %c0_i32_0 = arith.constant 0 : i32
    %c0_i32_1 = arith.constant 0 : i32
    return %c0_i32, %c0_i32_0 : i32, i32
  }
  func.func @transform_8(%arg0: i32) -> (i32, i32) {
    %c0_i32 = arith.constant 0 : i32
    %c0_i32_0 = arith.constant 0 : i32
    %c0_i32_1 = arith.constant 0 : i32
    return %c0_i32, %c0_i32_0 : i32, i32
  }
  func.func @transform_9(%arg0: i32) -> (i32, i32) {
    %c0_i32 = arith.constant 0 : i32
    %c0_i32_0 = arith.constant 0 : i32
    return %arg0, %c0_i32 : i32, i32
  }
}

module attributes {stable_mosaic.version = 11 : i64} {
  func.func @_tsception_kernel(%arg0: i32, %arg1: memref<4x8x64xf32, #tpu.memory_space<vmem>>, %arg2: memref<64x896xf32, #tpu.memory_space<vmem>>, %arg3: memref<896x128xf32, #tpu.memory_space<vmem>>, %arg4: memref<4x128x128xf32, #tpu.memory_space<vmem>>, %arg5: memref<2x128x128xf32, #tpu.memory_space<vmem>>, %arg6: memref<3x128x128xf32, #tpu.memory_space<vmem>>, %arg7: memref<128x128xf32, #tpu.memory_space<vmem>>, %arg8: memref<128x128xf32, #tpu.memory_space<vmem>>, %arg9: memref<8x896xf32, #tpu.memory_space<vmem>>, %arg10: memref<8x128xf32, #tpu.memory_space<vmem>>) attributes {dimension_semantics = [#tpu.dimension_semantics<parallel>], iteration_bounds = array<i64: 1>, scalar_prefetch = 0 : i64, scratch_operands = 0 : i64, tpu.core_type = #tpu.core_type<tc>, window_params = [{transform_indices = @transform_0, window_bounds = array<i64: 4, 8, 64>}, {pipeline_mode = #tpu.pipeline_mode<synchronous>, transform_indices = @transform_1, window_bounds = array<i64: 64, 896>}, {pipeline_mode = #tpu.pipeline_mode<synchronous>, transform_indices = @transform_2, window_bounds = array<i64: 896, 128>}, {pipeline_mode = #tpu.pipeline_mode<synchronous>, transform_indices = @transform_3, window_bounds = array<i64: 4, 128, 128>}, {pipeline_mode = #tpu.pipeline_mode<synchronous>, transform_indices = @transform_4, window_bounds = array<i64: 2, 128, 128>}, {pipeline_mode = #tpu.pipeline_mode<synchronous>, transform_indices = @transform_5, window_bounds = array<i64: 3, 128, 128>}, {pipeline_mode = #tpu.pipeline_mode<synchronous>, transform_indices = @transform_6, window_bounds = array<i64: 128, 128>}, {pipeline_mode = #tpu.pipeline_mode<synchronous>, transform_indices = @transform_7, window_bounds = array<i64: 128, 128>}, {pipeline_mode = #tpu.pipeline_mode<synchronous>, transform_indices = @transform_8, window_bounds = array<i64: 8, 896>}, {transform_indices = @transform_9, window_bounds = array<i64: 8, 128>}]} {
    %c0 = arith.constant 0 : index
    %c0_0 = arith.constant 0 : index
    %c0_1 = arith.constant 0 : index
    %0 = vector.load %arg1[%c0, %c0_0, %c0_1] : memref<4x8x64xf32, #tpu.memory_space<vmem>>, vector<4x8x64xf32>
    %1 = vector.shape_cast %0 : vector<4x8x64xf32> to vector<32x64xf32>
    %c0_2 = arith.constant 0 : index
    %c0_3 = arith.constant 0 : index
    %2 = vector.load %arg2[%c0_2, %c0_3] : memref<64x896xf32, #tpu.memory_space<vmem>>, vector<64x896xf32>
    %cst = arith.constant dense<0.000000e+00> : vector<32x896xf32>
    %3 = tpu.matmul %1, %2, %cst {dimension_numbers = #tpu.dot_dimension_numbers<[1], [0], [0], [1], [0, 0, 1, 1], [], []>} : vector<32x64xf32>, vector<64x896xf32>, vector<32x896xf32> -> vector<32x896xf32>
    %c0_4 = arith.constant 0 : index
    %c0_5 = arith.constant 0 : index
    %4 = vector.load %arg9[%c0_4, %c0_5] : memref<8x896xf32, #tpu.memory_space<vmem>>, vector<1x896xf32>
    %5 = vector.broadcast %4 : vector<1x896xf32> to vector<32x896xf32>
    %6 = arith.addf %3, %5 : vector<32x896xf32>
    %cst_6 = arith.constant 0.000000e+00 : f32
    %7 = vector.broadcast %cst_6 : f32 to vector<32x896xf32>
    %8 = arith.cmpf ogt, %6, %7 : vector<32x896xf32>
    %cst_7 = arith.constant 0.00999999977 : f32
    %9 = vector.broadcast %cst_7 : f32 to vector<32x896xf32>
    %10 = arith.mulf %9, %6 : vector<32x896xf32>
    %11 = arith.select %8, %6, %10 : vector<32x896xi1>, vector<32x896xf32>
    %c0_8 = arith.constant 0 : index
    %c0_9 = arith.constant 0 : index
    %12 = vector.load %arg3[%c0_8, %c0_9] : memref<896x128xf32, #tpu.memory_space<vmem>>, vector<896x128xf32>
    %cst_10 = arith.constant dense<0.000000e+00> : vector<32x128xf32>
    %13 = tpu.matmul %11, %12, %cst_10 {dimension_numbers = #tpu.dot_dimension_numbers<[1], [0], [0], [1], [0, 0, 1, 1], [], []>} : vector<32x896xf32>, vector<896x128xf32>, vector<32x128xf32> -> vector<32x128xf32>
    %cst_11 = arith.constant 0.000000e+00 : f32
    %14 = vector.broadcast %cst_11 : f32 to vector<8x128xf32>
    %15 = vector.extract_strided_slice %13 {offsets = [0, 0], sizes = [8, 128], strides = [1, 1]} : vector<32x128xf32> to vector<8x128xf32>
    %c0_12 = arith.constant 0 : index
    %c0_13 = arith.constant 0 : index
    %c0_14 = arith.constant 0 : index
    %16 = vector.load %arg4[%c0_12, %c0_13, %c0_14] : memref<4x128x128xf32, #tpu.memory_space<vmem>>, vector<1x128x128xf32>
    %17 = vector.shape_cast %16 : vector<1x128x128xf32> to vector<128x128xf32>
    %cst_15 = arith.constant dense<0.000000e+00> : vector<8x128xf32>
    %18 = tpu.matmul %15, %17, %cst_15 {dimension_numbers = #tpu.dot_dimension_numbers<[1], [0], [0], [1], [0, 0, 1, 1], [], []>} : vector<8x128xf32>, vector<128x128xf32>, vector<8x128xf32> -> vector<8x128xf32>
    %19 = arith.addf %14, %18 : vector<8x128xf32>
    %20 = vector.extract_strided_slice %13 {offsets = [8, 0], sizes = [8, 128], strides = [1, 1]} : vector<32x128xf32> to vector<8x128xf32>
    %c1 = arith.constant 1 : index
    %c0_16 = arith.constant 0 : index
    %c0_17 = arith.constant 0 : index
    %21 = vector.load %arg4[%c1, %c0_16, %c0_17] : memref<4x128x128xf32, #tpu.memory_space<vmem>>, vector<1x128x128xf32>
    %22 = vector.shape_cast %21 : vector<1x128x128xf32> to vector<128x128xf32>
    %cst_18 = arith.constant dense<0.000000e+00> : vector<8x128xf32>
    %23 = tpu.matmul %20, %22, %cst_18 {dimension_numbers = #tpu.dot_dimension_numbers<[1], [0], [0], [1], [0, 0, 1, 1], [], []>} : vector<8x128xf32>, vector<128x128xf32>, vector<8x128xf32> -> vector<8x128xf32>
    %24 = arith.addf %19, %23 : vector<8x128xf32>
    %25 = vector.extract_strided_slice %13 {offsets = [16, 0], sizes = [8, 128], strides = [1, 1]} : vector<32x128xf32> to vector<8x128xf32>
    %c2 = arith.constant 2 : index
    %c0_19 = arith.constant 0 : index
    %c0_20 = arith.constant 0 : index
    %26 = vector.load %arg4[%c2, %c0_19, %c0_20] : memref<4x128x128xf32, #tpu.memory_space<vmem>>, vector<1x128x128xf32>
    %27 = vector.shape_cast %26 : vector<1x128x128xf32> to vector<128x128xf32>
    %cst_21 = arith.constant dense<0.000000e+00> : vector<8x128xf32>
    %28 = tpu.matmul %25, %27, %cst_21 {dimension_numbers = #tpu.dot_dimension_numbers<[1], [0], [0], [1], [0, 0, 1, 1], [], []>} : vector<8x128xf32>, vector<128x128xf32>, vector<8x128xf32> -> vector<8x128xf32>
    %29 = arith.addf %24, %28 : vector<8x128xf32>
    %30 = vector.extract_strided_slice %13 {offsets = [24, 0], sizes = [8, 128], strides = [1, 1]} : vector<32x128xf32> to vector<8x128xf32>
    %c3 = arith.constant 3 : index
    %c0_22 = arith.constant 0 : index
    %c0_23 = arith.constant 0 : index
    %31 = vector.load %arg4[%c3, %c0_22, %c0_23] : memref<4x128x128xf32, #tpu.memory_space<vmem>>, vector<1x128x128xf32>
    %32 = vector.shape_cast %31 : vector<1x128x128xf32> to vector<128x128xf32>
    %cst_24 = arith.constant dense<0.000000e+00> : vector<8x128xf32>
    %33 = tpu.matmul %30, %32, %cst_24 {dimension_numbers = #tpu.dot_dimension_numbers<[1], [0], [0], [1], [0, 0, 1, 1], [], []>} : vector<8x128xf32>, vector<128x128xf32>, vector<8x128xf32> -> vector<8x128xf32>
    %34 = arith.addf %29, %33 : vector<8x128xf32>
    %c1_25 = arith.constant 1 : index
    %c0_26 = arith.constant 0 : index
    %35 = vector.load %arg9[%c1_25, %c0_26] : memref<8x896xf32, #tpu.memory_space<vmem>>, vector<1x128xf32>
    %36 = vector.broadcast %35 : vector<1x128xf32> to vector<8x128xf32>
    %37 = arith.addf %34, %36 : vector<8x128xf32>
    %cst_27 = arith.constant 0.000000e+00 : f32
    %38 = vector.broadcast %cst_27 : f32 to vector<8x128xf32>
    %39 = arith.cmpf ogt, %37, %38 : vector<8x128xf32>
    %cst_28 = arith.constant 0.00999999977 : f32
    %40 = vector.broadcast %cst_28 : f32 to vector<8x128xf32>
    %41 = arith.mulf %40, %37 : vector<8x128xf32>
    %42 = arith.select %39, %37, %41 : vector<8x128xi1>, vector<8x128xf32>
    %cst_29 = arith.constant 0.000000e+00 : f32
    %43 = vector.broadcast %cst_29 : f32 to vector<8x128xf32>
    %44 = vector.extract_strided_slice %13 {offsets = [0, 0], sizes = [8, 128], strides = [1, 1]} : vector<32x128xf32> to vector<8x128xf32>
    %c0_30 = arith.constant 0 : index
    %c0_31 = arith.constant 0 : index
    %c0_32 = arith.constant 0 : index
    %45 = vector.load %arg5[%c0_30, %c0_31, %c0_32] : memref<2x128x128xf32, #tpu.memory_space<vmem>>, vector<1x128x128xf32>
    %46 = vector.shape_cast %45 : vector<1x128x128xf32> to vector<128x128xf32>
    %cst_33 = arith.constant dense<0.000000e+00> : vector<8x128xf32>
    %47 = tpu.matmul %44, %46, %cst_33 {dimension_numbers = #tpu.dot_dimension_numbers<[1], [0], [0], [1], [0, 0, 1, 1], [], []>} : vector<8x128xf32>, vector<128x128xf32>, vector<8x128xf32> -> vector<8x128xf32>
    %48 = arith.addf %43, %47 : vector<8x128xf32>
    %49 = vector.extract_strided_slice %13 {offsets = [8, 0], sizes = [8, 128], strides = [1, 1]} : vector<32x128xf32> to vector<8x128xf32>
    %c1_34 = arith.constant 1 : index
    %c0_35 = arith.constant 0 : index
    %c0_36 = arith.constant 0 : index
    %50 = vector.load %arg5[%c1_34, %c0_35, %c0_36] : memref<2x128x128xf32, #tpu.memory_space<vmem>>, vector<1x128x128xf32>
    %51 = vector.shape_cast %50 : vector<1x128x128xf32> to vector<128x128xf32>
    %cst_37 = arith.constant dense<0.000000e+00> : vector<8x128xf32>
    %52 = tpu.matmul %49, %51, %cst_37 {dimension_numbers = #tpu.dot_dimension_numbers<[1], [0], [0], [1], [0, 0, 1, 1], [], []>} : vector<8x128xf32>, vector<128x128xf32>, vector<8x128xf32> -> vector<8x128xf32>
    %53 = arith.addf %48, %52 : vector<8x128xf32>
    %c2_38 = arith.constant 2 : index
    %c0_39 = arith.constant 0 : index
    %54 = vector.load %arg9[%c2_38, %c0_39] : memref<8x896xf32, #tpu.memory_space<vmem>>, vector<1x128xf32>
    %55 = vector.broadcast %54 : vector<1x128xf32> to vector<8x128xf32>
    %56 = arith.addf %53, %55 : vector<8x128xf32>
    %cst_40 = arith.constant 0.000000e+00 : f32
    %57 = vector.broadcast %cst_40 : f32 to vector<8x128xf32>
    %58 = arith.cmpf ogt, %56, %57 : vector<8x128xf32>
    %cst_41 = arith.constant 0.00999999977 : f32
    %59 = vector.broadcast %cst_41 : f32 to vector<8x128xf32>
    %60 = arith.mulf %59, %56 : vector<8x128xf32>
    %61 = arith.select %58, %56, %60 : vector<8x128xi1>, vector<8x128xf32>
    %cst_42 = arith.constant 0.000000e+00 : f32
    %62 = vector.broadcast %cst_42 : f32 to vector<8x128xf32>
    %63 = vector.extract_strided_slice %13 {offsets = [16, 0], sizes = [8, 128], strides = [1, 1]} : vector<32x128xf32> to vector<8x128xf32>
    %c0_43 = arith.constant 0 : index
    %c0_44 = arith.constant 0 : index
    %c0_45 = arith.constant 0 : index
    %64 = vector.load %arg5[%c0_43, %c0_44, %c0_45] : memref<2x128x128xf32, #tpu.memory_space<vmem>>, vector<1x128x128xf32>
    %65 = vector.shape_cast %64 : vector<1x128x128xf32> to vector<128x128xf32>
    %cst_46 = arith.constant dense<0.000000e+00> : vector<8x128xf32>
    %66 = tpu.matmul %63, %65, %cst_46 {dimension_numbers = #tpu.dot_dimension_numbers<[1], [0], [0], [1], [0, 0, 1, 1], [], []>} : vector<8x128xf32>, vector<128x128xf32>, vector<8x128xf32> -> vector<8x128xf32>
    %67 = arith.addf %62, %66 : vector<8x128xf32>
    %68 = vector.extract_strided_slice %13 {offsets = [24, 0], sizes = [8, 128], strides = [1, 1]} : vector<32x128xf32> to vector<8x128xf32>
    %c1_47 = arith.constant 1 : index
    %c0_48 = arith.constant 0 : index
    %c0_49 = arith.constant 0 : index
    %69 = vector.load %arg5[%c1_47, %c0_48, %c0_49] : memref<2x128x128xf32, #tpu.memory_space<vmem>>, vector<1x128x128xf32>
    %70 = vector.shape_cast %69 : vector<1x128x128xf32> to vector<128x128xf32>
    %cst_50 = arith.constant dense<0.000000e+00> : vector<8x128xf32>
    %71 = tpu.matmul %68, %70, %cst_50 {dimension_numbers = #tpu.dot_dimension_numbers<[1], [0], [0], [1], [0, 0, 1, 1], [], []>} : vector<8x128xf32>, vector<128x128xf32>, vector<8x128xf32> -> vector<8x128xf32>
    %72 = arith.addf %67, %71 : vector<8x128xf32>
    %c2_51 = arith.constant 2 : index
    %c0_52 = arith.constant 0 : index
    %73 = vector.load %arg9[%c2_51, %c0_52] : memref<8x896xf32, #tpu.memory_space<vmem>>, vector<1x128xf32>
    %74 = vector.broadcast %73 : vector<1x128xf32> to vector<8x128xf32>
    %75 = arith.addf %72, %74 : vector<8x128xf32>
    %cst_53 = arith.constant 0.000000e+00 : f32
    %76 = vector.broadcast %cst_53 : f32 to vector<8x128xf32>
    %77 = arith.cmpf ogt, %75, %76 : vector<8x128xf32>
    %cst_54 = arith.constant 0.00999999977 : f32
    %78 = vector.broadcast %cst_54 : f32 to vector<8x128xf32>
    %79 = arith.mulf %78, %75 : vector<8x128xf32>
    %80 = arith.select %77, %75, %79 : vector<8x128xi1>, vector<8x128xf32>
    %c0_55 = arith.constant 0 : index
    %c0_56 = arith.constant 0 : index
    %c0_57 = arith.constant 0 : index
    %81 = vector.load %arg6[%c0_55, %c0_56, %c0_57] : memref<3x128x128xf32, #tpu.memory_space<vmem>>, vector<1x128x128xf32>
    %82 = vector.shape_cast %81 : vector<1x128x128xf32> to vector<128x128xf32>
    %cst_58 = arith.constant dense<0.000000e+00> : vector<8x128xf32>
    %83 = tpu.matmul %42, %82, %cst_58 {dimension_numbers = #tpu.dot_dimension_numbers<[1], [0], [0], [1], [0, 0, 1, 1], [], []>} : vector<8x128xf32>, vector<128x128xf32>, vector<8x128xf32> -> vector<8x128xf32>
    %c1_59 = arith.constant 1 : index
    %c0_60 = arith.constant 0 : index
    %c0_61 = arith.constant 0 : index
    %84 = vector.load %arg6[%c1_59, %c0_60, %c0_61] : memref<3x128x128xf32, #tpu.memory_space<vmem>>, vector<1x128x128xf32>
    %85 = vector.shape_cast %84 : vector<1x128x128xf32> to vector<128x128xf32>
    %cst_62 = arith.constant dense<0.000000e+00> : vector<8x128xf32>
    %86 = tpu.matmul %61, %85, %cst_62 {dimension_numbers = #tpu.dot_dimension_numbers<[1], [0], [0], [1], [0, 0, 1, 1], [], []>} : vector<8x128xf32>, vector<128x128xf32>, vector<8x128xf32> -> vector<8x128xf32>
    %87 = arith.addf %83, %86 : vector<8x128xf32>
    %c2_63 = arith.constant 2 : index
    %c0_64 = arith.constant 0 : index
    %c0_65 = arith.constant 0 : index
    %88 = vector.load %arg6[%c2_63, %c0_64, %c0_65] : memref<3x128x128xf32, #tpu.memory_space<vmem>>, vector<1x128x128xf32>
    %89 = vector.shape_cast %88 : vector<1x128x128xf32> to vector<128x128xf32>
    %cst_66 = arith.constant dense<0.000000e+00> : vector<8x128xf32>
    %90 = tpu.matmul %80, %89, %cst_66 {dimension_numbers = #tpu.dot_dimension_numbers<[1], [0], [0], [1], [0, 0, 1, 1], [], []>} : vector<8x128xf32>, vector<128x128xf32>, vector<8x128xf32> -> vector<8x128xf32>
    %91 = arith.addf %87, %90 : vector<8x128xf32>
    %c3_67 = arith.constant 3 : index
    %c0_68 = arith.constant 0 : index
    %92 = vector.load %arg9[%c3_67, %c0_68] : memref<8x896xf32, #tpu.memory_space<vmem>>, vector<1x128xf32>
    %93 = vector.broadcast %92 : vector<1x128xf32> to vector<8x128xf32>
    %94 = arith.addf %91, %93 : vector<8x128xf32>
    %cst_69 = arith.constant 0.000000e+00 : f32
    %95 = vector.broadcast %cst_69 : f32 to vector<8x128xf32>
    %96 = arith.cmpf ogt, %94, %95 : vector<8x128xf32>
    %cst_70 = arith.constant 0.00999999977 : f32
    %97 = vector.broadcast %cst_70 : f32 to vector<8x128xf32>
    %98 = arith.mulf %97, %94 : vector<8x128xf32>
    %99 = arith.select %96, %94, %98 : vector<8x128xi1>, vector<8x128xf32>
    %c0_71 = arith.constant 0 : index
    %c0_72 = arith.constant 0 : index
    %100 = vector.load %arg7[%c0_71, %c0_72] : memref<128x128xf32, #tpu.memory_space<vmem>>, vector<128x128xf32>
    %cst_73 = arith.constant dense<0.000000e+00> : vector<8x128xf32>
    %101 = tpu.matmul %99, %100, %cst_73 {dimension_numbers = #tpu.dot_dimension_numbers<[1], [0], [0], [1], [0, 0, 1, 1], [], []>} : vector<8x128xf32>, vector<128x128xf32>, vector<8x128xf32> -> vector<8x128xf32>
    %c4 = arith.constant 4 : index
    %c0_74 = arith.constant 0 : index
    %102 = vector.load %arg9[%c4, %c0_74] : memref<8x896xf32, #tpu.memory_space<vmem>>, vector<1x128xf32>
    %103 = vector.broadcast %102 : vector<1x128xf32> to vector<8x128xf32>
    %104 = arith.addf %101, %103 : vector<8x128xf32>
    %cst_75 = arith.constant 0.000000e+00 : f32
    %105 = vector.broadcast %cst_75 : f32 to vector<8x128xf32>
    %106 = arith.maximumf %104, %105 : vector<8x128xf32>
    %c0_76 = arith.constant 0 : index
    %c0_77 = arith.constant 0 : index
    %107 = vector.load %arg8[%c0_76, %c0_77] : memref<128x128xf32, #tpu.memory_space<vmem>>, vector<128x128xf32>
    %cst_78 = arith.constant dense<0.000000e+00> : vector<8x128xf32>
    %108 = tpu.matmul %106, %107, %cst_78 {dimension_numbers = #tpu.dot_dimension_numbers<[1], [0], [0], [1], [0, 0, 1, 1], [], []>} : vector<8x128xf32>, vector<128x128xf32>, vector<8x128xf32> -> vector<8x128xf32>
    %c5 = arith.constant 5 : index
    %c0_79 = arith.constant 0 : index
    %109 = vector.load %arg9[%c5, %c0_79] : memref<8x896xf32, #tpu.memory_space<vmem>>, vector<1x128xf32>
    %110 = vector.broadcast %109 : vector<1x128xf32> to vector<8x128xf32>
    %111 = arith.addf %108, %110 : vector<8x128xf32>
    %c0_80 = arith.constant 0 : index
    %c0_81 = arith.constant 0 : index
    %112 = vector.load %arg10[%c0_80, %c0_81] : memref<8x128xf32, #tpu.memory_space<vmem>>, vector<8x128xf32>
    tpu.vector_store %arg10[%c0_80, %c0_81], %111 {strides = array<i32>} : memref<8x128xf32, #tpu.memory_space<vmem>>, vector<8x128xf32>,
    return
  }
  func.func @transform_0(%arg0: i32) -> (i32, i32, i32) {
    %c0_i32 = arith.constant 0 : i32
    %c0_i32_0 = arith.constant 0 : i32
    %c0_i32_1 = arith.constant 0 : i32
    return %c0_i32, %arg0, %c0_i32_0 : i32, i32, i32
  }
  func.func @transform_1(%arg0: i32) -> (i32, i32) {
    %c0_i32 = arith.constant 0 : i32
    %c0_i32_0 = arith.constant 0 : i32
    %c0_i32_1 = arith.constant 0 : i32
    return %c0_i32, %c0_i32_0 : i32, i32
  }
  func.func @transform_2(%arg0: i32) -> (i32, i32) {
    %c0_i32 = arith.constant 0 : i32
    %c0_i32_0 = arith.constant 0 : i32
    %c0_i32_1 = arith.constant 0 : i32
    return %c0_i32, %c0_i32_0 : i32, i32
  }
  func.func @transform_3(%arg0: i32) -> (i32, i32, i32) {
    %c0_i32 = arith.constant 0 : i32
    %c0_i32_0 = arith.constant 0 : i32
    %c0_i32_1 = arith.constant 0 : i32
    %c0_i32_2 = arith.constant 0 : i32
    return %c0_i32, %c0_i32_0, %c0_i32_1 : i32, i32, i32
  }
  func.func @transform_4(%arg0: i32) -> (i32, i32, i32) {
    %c0_i32 = arith.constant 0 : i32
    %c0_i32_0 = arith.constant 0 : i32
    %c0_i32_1 = arith.constant 0 : i32
    %c0_i32_2 = arith.constant 0 : i32
    return %c0_i32, %c0_i32_0, %c0_i32_1 : i32, i32, i32
  }
  func.func @transform_5(%arg0: i32) -> (i32, i32, i32) {
    %c0_i32 = arith.constant 0 : i32
    %c0_i32_0 = arith.constant 0 : i32
    %c0_i32_1 = arith.constant 0 : i32
    %c0_i32_2 = arith.constant 0 : i32
    return %c0_i32, %c0_i32_0, %c0_i32_1 : i32, i32, i32
  }
  func.func @transform_6(%arg0: i32) -> (i32, i32) {
    %c0_i32 = arith.constant 0 : i32
    %c0_i32_0 = arith.constant 0 : i32
    %c0_i32_1 = arith.constant 0 : i32
    return %c0_i32, %c0_i32_0 : i32, i32
  }
  func.func @transform_7(%arg0: i32) -> (i32, i32) {
    %c0_i32 = arith.constant 0 : i32
    %c0_i32_0 = arith.constant 0 : i32
    %c0_i32_1 = arith.constant 0 : i32
    return %c0_i32, %c0_i32_0 : i32, i32
  }
  func.func @transform_8(%arg0: i32) -> (i32, i32) {
    %c0_i32 = arith.constant 0 : i32
    %c0_i32_0 = arith.constant 0 : i32
    %c0_i32_1 = arith.constant 0 : i32
    return %c0_i32, %c0_i32_0 : i32, i32
  }
  func.func @transform_9(%arg0: i32) -> (i32, i32) {
    %c0_i32 = arith.constant 0 : i32
    %c0_i32_0 = arith.constant 0 : i32
    return %arg0, %c0_i32 : i32, i32
  }
}

</mosaic_0001>

<llo_original>
// kernel: tpu_custom_call.1
$region0: #{tpu_custom_call.1}
  #allocation0 [shape = 'u32[]', space=smem, size = 0x4, offset = 0x4, fixed_abs, tag = 'smem constant byte address 0x4 - core index']
  #allocation1 [shape = 'u32[144,128]{1,0:T(1,128)}', space=vmem, size = 0x12000, scoped, tag = 'internal scratch']
  %s0 = inlined_call_operand.hbm [shape: f32[4,8,64], index: 0, kind: input, shape index: {}]
  %s1 = inlined_call_operand.hbm [shape: f32[64,896], index: 1, kind: input, shape index: {}]
  %s2 = inlined_call_operand.hbm [shape: f32[896,128], index: 2, kind: input, shape index: {}]
  %s3 = inlined_call_operand.hbm [shape: f32[4,128,128], index: 3, kind: input, shape index: {}]
  %s4 = inlined_call_operand.hbm [shape: f32[2,128,128], index: 4, kind: input, shape index: {}]
  %s5 = inlined_call_operand.hbm [shape: f32[3,128,128], index: 5, kind: input, shape index: {}]
  %s6 = inlined_call_operand.hbm [shape: f32[128,128], index: 6, kind: input, shape index: {}]
  %s7 = inlined_call_operand.hbm [shape: f32[128,128], index: 7, kind: input, shape index: {}]
  %s8 = inlined_call_operand.hbm [shape: f32[8,896], index: 8, kind: input, shape index: {}]
  %s9 = inlined_call_operand.hbm [shape: f32[8,128], index: 9, kind: output, shape index: {}]
  %s10 = sld [smem:[#allocation0]]
  $region82: #{tpu_custom_call.1} parent=0
    _
  %s12 = ssub.s32 1, %s10
  %s13 = scalar_select 0, %s12, %s10
  $region1: #{tpu_custom_call.1} parent=0
    #allocation2 [shape = 'u8[16384]{0}', space=vmem, size = 0x4000, scoped, tag = 'input window, operand 0, single buffered']
    #allocation3 [shape = 's32[1]{0}', space=sflag, size = 0x4, scoped, tag = 'scoped memory for tpu_custom_call.1']
    #allocation4 [shape = 's32[1]{0}', space=sflag, size = 0x4, scoped, tag = 'scoped memory for tpu_custom_call.1']
    #allocation5 [shape = 'u8[229376]{0}', space=vmem, size = 0x38000, scoped, tag = 'input window, operand 1, single buffered']
    #allocation6 [shape = 's32[1]{0}', space=sflag, size = 0x4, scoped, tag = 'scoped memory for tpu_custom_call.1']
    #allocation7 [shape = 'u8[458752]{0}', space=vmem, size = 0x70000, scoped, tag = 'input window, operand 2, single buffered']
    #allocation8 [shape = 'u8[262144]{0}', space=vmem, size = 0x40000, scoped, tag = 'input window, operand 3, single buffered']
    #allocation9 [shape = 's32[1]{0}', space=sflag, size = 0x4, scoped, tag = 'scoped memory for tpu_custom_call.1']
    #allocation10 [shape = 'u8[131072]{0}', space=vmem, size = 0x20000, scoped, tag = 'input window, operand 4, single buffered']
    #allocation11 [shape = 'u8[196608]{0}', space=vmem, size = 0x30000, scoped, tag = 'input window, operand 5, single buffered']
    #allocation12 [shape = 's32[1]{0}', space=sflag, size = 0x4, scoped, tag = 'scoped memory for tpu_custom_call.1']
    #allocation13 [shape = 'u8[65536]{0}', space=vmem, size = 0x10000, scoped, tag = 'input window, operand 6, single buffered']
    #allocation14 [shape = 'u8[65536]{0}', space=vmem, size = 0x10000, scoped, tag = 'input window, operand 7, single buffered']
    #allocation15 [shape = 's32[1]{0}', space=sflag, size = 0x4, scoped, tag = 'scoped memory for tpu_custom_call.1']
    #allocation16 [shape = 'u8[28672]{0}', space=vmem, size = 0x7000, scoped, tag = 'input window, operand 8, single buffered']
    #allocation17 [shape = 'u8[4096]{0}', space=vmem, size = 0x1000, scoped, tag = 'output window, operand 0, single buffered']
    %14 = vsyncpa [#allocation3], 0
    %15 = vsyncpa [#allocation6], 0
    %16 = vsyncpa [#allocation9], 0
    %17 = vsyncpa [#allocation12], 0
    %18 = vsyncpa [#allocation15], 0
    %19 = vsyncpa [#allocation4], 0
    // Predicated region
    $region2: #{tpu_custom_call.1} parent=1 // pred_check
      _
    $region3: #{tpu_custom_call.1} parent=1 // pred_check_branch
      %21 = sbr.rel (0) target = $region5
    $region4: #{tpu_custom_call.1} parent=1 // pred_region
      %s23 = ssub.s32 512, 512
      %24 = vsyncadd [#allocation3], %s23
      %s25 = sshll.u32 [#allocation2], 4
      %s26 = int_to_ptr.vmem [resolvable:$true] %s25
      %31 = dma.hbm_to_vmem [thread:$0]  %s0, 512, %s26, [#allocation3], 128, 128, 8
    $region5: #{tpu_custom_call.1} parent=1 // pred_fallthru
      _
    // Predicated region
    $region6: #{tpu_custom_call.1} parent=1 // pred_check
      _
    $region7: #{tpu_custom_call.1} parent=1 // pred_check_branch
      %33 = sbr.rel (0) target = $region9
    $region8: #{tpu_custom_call.1} parent=1 // pred_region
      %s35 = ssub.s32 7168, 7168
      %36 = vsyncadd [#allocation6], %s35
      %s37 = sshll.u32 [#allocation5], 4
      %s38 = int_to_ptr.vmem [resolvable:$true] %s37
      %43 = dma.hbm_to_vmem [thread:$0]  %s1, 7168, %s38, [#allocation6], 896, 896, 56
    $region9: #{tpu_custom_call.1} parent=1 // pred_fallthru
      _
    // Predicated region
    $region10: #{tpu_custom_call.1} parent=1 // pred_check
      _
    $region11: #{tpu_custom_call.1} parent=1 // pred_check_branch
      %45 = sbr.rel (0) target = $region13
    $region12: #{tpu_custom_call.1} parent=1 // pred_region
      %s47 = ssub.s32 14336, 14336
      %48 = vsyncadd [#allocation6], %s47
      %s49 = sshll.u32 [#allocation7], 4
      %s50 = int_to_ptr.vmem [resolvable:$true] %s49
      %55 = dma.hbm_to_vmem [thread:$0]  %s2, 14336, %s50, [#allocation6], 128, 128, 8
    $region13: #{tpu_custom_call.1} parent=1 // pred_fallthru
      _
    // Predicated region
    $region14: #{tpu_custom_call.1} parent=1 // pred_check
      _
    $region15: #{tpu_custom_call.1} parent=1 // pred_check_branch
      %57 = sbr.rel (0) target = $region17
    $region16: #{tpu_custom_call.1} parent=1 // pred_region
      %s59 = ssub.s32 8192, 8192
      %60 = vsyncadd [#allocation9], %s59
      %s61 = sshll.u32 [#allocation8], 4
      %s62 = int_to_ptr.vmem [resolvable:$true] %s61
      %67 = dma.hbm_to_vmem [thread:$0]  %s3, 8192, %s62, [#allocation9], 128, 128, 8
    $region17: #{tpu_custom_call.1} parent=1 // pred_fallthru
      _
    // Predicated region
    $region18: #{tpu_custom_call.1} parent=1 // pred_check
      _
    $region19: #{tpu_custom_call.1} parent=1 // pred_check_branch
      %69 = sbr.rel (0) target = $region21
    $region20: #{tpu_custom_call.1} parent=1 // pred_region
      %s71 = ssub.s32 4096, 4096
      %72 = vsyncadd [#allocation9], %s71
      %s73 = sshll.u32 [#allocation10], 4
      %s74 = int_to_ptr.vmem [resolvable:$true] %s73
      %79 = dma.hbm_to_vmem [thread:$0]  %s4, 4096, %s74, [#allocation9], 128, 128, 8
    $region21: #{tpu_custom_call.1} parent=1 // pred_fallthru
      _
    // Predicated region
    $region22: #{tpu_custom_call.1} parent=1 // pred_check
      _
    $region23: #{tpu_custom_call.1} parent=1 // pred_check_branch
      %81 = sbr.rel (0) target = $region25
    $region24: #{tpu_custom_call.1} parent=1 // pred_region
      %s83 = ssub.s32 6144, 6144
      %84 = vsyncadd [#allocation12], %s83
      %s85 = sshll.u32 [#allocation11], 4
      %s86 = int_to_ptr.vmem [resolvable:$true] %s85
      %91 = dma.hbm_to_vmem [thread:$0]  %s5, 6144, %s86, [#allocation12], 128, 128, 8
    $region25: #{tpu_custom_call.1} parent=1 // pred_fallthru
      _
    // Predicated region
    $region26: #{tpu_custom_call.1} parent=1 // pred_check
      _
    $region27: #{tpu_custom_call.1} parent=1 // pred_check_branch
      %93 = sbr.rel (0) target = $region29
    $region28: #{tpu_custom_call.1} parent=1 // pred_region
      %s95 = ssub.s32 2048, 2048
      %96 = vsyncadd [#allocation12], %s95
      %s97 = sshll.u32 [#allocation13], 4
      %s98 = int_to_ptr.vmem [resolvable:$true] %s97
      %103 = dma.hbm_to_vmem [thread:$0]  %s6, 2048, %s98, [#allocation12], 128, 128, 8
    $region29: #{tpu_custom_call.1} parent=1 // pred_fallthru
      _
    // Predicated region
    $region30: #{tpu_custom_call.1} parent=1 // pred_check
      _
    $region31: #{tpu_custom_call.1} parent=1 // pred_check_branch
      %105 = sbr.rel (0) target = $region33
    $region32: #{tpu_custom_call.1} parent=1 // pred_region
      %s107 = ssub.s32 2048, 2048
      %108 = vsyncadd [#allocation15], %s107
      %s109 = sshll.u32 [#allocation14], 4
      %s110 = int_to_ptr.vmem [resolvable:$true] %s109
      %115 = dma.hbm_to_vmem [thread:$0]  %s7, 2048, %s110, [#allocation15], 128, 128, 8
    $region33: #{tpu_custom_call.1} parent=1 // pred_fallthru
      _
    // Predicated region
    $region34: #{tpu_custom_call.1} parent=1 // pred_check
      _
    $region35: #{tpu_custom_call.1} parent=1 // pred_check_branch
      %117 = sbr.rel (0) target = $region37
    $region36: #{tpu_custom_call.1} parent=1 // pred_region
      %s119 = ssub.s32 896, 896
      %120 = vsyncadd [#allocation15], %s119
      %s122 = sshll.u32 [#allocation16], 4
      %s123 = int_to_ptr.vmem [resolvable:$true] %s122
      %125 = dma.hbm_to_vmem [thread:$0]  %s8, 896, %s123, [#allocation15]
    $region37: #{tpu_custom_call.1} parent=1 // pred_fallthru
      _
    // Predicated region
    $region38: #{tpu_custom_call.1} parent=1 // pred_check
      _
    $region39: #{tpu_custom_call.1} parent=1 // pred_check_branch
      %127 = sbr.rel (0) target = $region41
    $region40: #{tpu_custom_call.1} parent=1 // pred_region
      %128 = dma.done [#allocation3], 512
    $region41: #{tpu_custom_call.1} parent=1 // pred_fallthru
      _
    // Predicated region
    $region42: #{tpu_custom_call.1} parent=1 // pred_check
      _
    $region43: #{tpu_custom_call.1} parent=1 // pred_check_branch
      %130 = sbr.rel (0) target = $region45
    $region44: #{tpu_custom_call.1} parent=1 // pred_region
      %131 = dma.done [#allocation6], 7168
    $region45: #{tpu_custom_call.1} parent=1 // pred_fallthru
      _
    // Predicated region
    $region46: #{tpu_custom_call.1} parent=1 // pred_check
      _
    $region47: #{tpu_custom_call.1} parent=1 // pred_check_branch
      %133 = sbr.rel (0) target = $region49
    $region48: #{tpu_custom_call.1} parent=1 // pred_region
      %134 = dma.done [#allocation6], 14336
    $region49: #{tpu_custom_call.1} parent=1 // pred_fallthru
      _
    // Predicated region
    $region50: #{tpu_custom_call.1} parent=1 // pred_check
      _
    $region51: #{tpu_custom_call.1} parent=1 // pred_check_branch
      %136 = sbr.rel (0) target = $region53
    $region52: #{tpu_custom_call.1} parent=1 // pred_region
      %137 = dma.done [#allocation9], 8192
    $region53: #{tpu_custom_call.1} parent=1 // pred_fallthru
      _
    // Predicated region
    $region54: #{tpu_custom_call.1} parent=1 // pred_check
      _
    $region55: #{tpu_custom_call.1} parent=1 // pred_check_branch
      %139 = sbr.rel (0) target = $region57
    $region56: #{tpu_custom_call.1} parent=1 // pred_region
      %140 = dma.done [#allocation9], 4096
    $region57: #{tpu_custom_call.1} parent=1 // pred_fallthru
      _
    // Predicated region
    $region58: #{tpu_custom_call.1} parent=1 // pred_check
      _
    $region59: #{tpu_custom_call.1} parent=1 // pred_check_branch
      %142 = sbr.rel (0) target = $region61
    $region60: #{tpu_custom_call.1} parent=1 // pred_region
      %143 = dma.done [#allocation12], 6144
    $region61: #{tpu_custom_call.1} parent=1 // pred_fallthru
      _
    // Predicated region
    $region62: #{tpu_custom_call.1} parent=1 // pred_check
      _
    $region63: #{tpu_custom_call.1} parent=1 // pred_check_branch
      %145 = sbr.rel (0) target = $region65
    $region64: #{tpu_custom_call.1} parent=1 // pred_region
      %146 = dma.done [#allocation12], 2048
    $region65: #{tpu_custom_call.1} parent=1 // pred_fallthru
      _
    // Predicated region
    $region66: #{tpu_custom_call.1} parent=1 // pred_check
      _
    $region67: #{tpu_custom_call.1} parent=1 // pred_check_branch
      %148 = sbr.rel (0) target = $region69
    $region68: #{tpu_custom_call.1} parent=1 // pred_region
      %149 = dma.done [#allocation15], 2048
    $region69: #{tpu_custom_call.1} parent=1 // pred_fallthru
      _
    // Predicated region
    $region70: #{tpu_custom_call.1} parent=1 // pred_check
      _
    $region71: #{tpu_custom_call.1} parent=1 // pred_check_branch
      %151 = sbr.rel (0) target = $region73
    $region72: #{tpu_custom_call.1} parent=1 // pred_region
      %152 = dma.done [#allocation15], 896
    $region73: #{tpu_custom_call.1} parent=1 // pred_fallthru
      _
    %v153 = vld [vmem:[#allocation2] sm:$0xff]
    %v154 = vld [vmem:[#allocation2 + $0x8] sm:$0xff]
    %v155 = vld [vmem:[#allocation2 + $0x10] sm:$0xff]
    %v156 = vld [vmem:[#allocation2 + $0x18] sm:$0xff]
    %v157 = vld [vmem:[#allocation5] sm:$0xff]
    %v158 = vld [vmem:[#allocation5 + $0x8] sm:$0xff]
    %v159 = vld [vmem:[#allocation5 + $0x10] sm:$0xff]
    %v160 = vld [vmem:[#allocation5 + $0x18] sm:$0xff]
    %v161 = vld [vmem:[#allocation5 + $0x20] sm:$0xff]
    %v162 = vld [vmem:[#allocation5 + $0x28] sm:$0xff]
    %v163 = vld [vmem:[#allocation5 + $0x30] sm:$0xff]
    %v164 = vld [vmem:[#allocation5 + $0x38] sm:$0xff]
    %v165 = vld [vmem:[#allocation5 + $0x40] sm:$0xff]
    %v166 = vld [vmem:[#allocation5 + $0x48] sm:$0xff]
    %v167 = vld [vmem:[#allocation5 + $0x50] sm:$0xff]
    %v168 = vld [vmem:[#allocation5 + $0x58] sm:$0xff]
    %v169 = vld [vmem:[#allocation5 + $0x60] sm:$0xff]
    %v170 = vld [vmem:[#allocation5 + $0x68] sm:$0xff]
    %v171 = vld [vmem:[#allocation5 + $0x70] sm:$0xff]
    %v172 = vld [vmem:[#allocation5 + $0x78] sm:$0xff]
    %v173 = vld [vmem:[#allocation5 + $0x80] sm:$0xff]
    %v174 = vld [vmem:[#allocation5 + $0x88] sm:$0xff]
    %v175 = vld [vmem:[#allocation5 + $0x90] sm:$0xff]
    %v176 = vld [vmem:[#allocation5 + $0x98] sm:$0xff]
    %v177 = vld [vmem:[#allocation5 + $0xa0] sm:$0xff]
    %v178 = vld [vmem:[#allocation5 + $0xa8] sm:$0xff]
    %v179 = vld [vmem:[#allocation5 + $0xb0] sm:$0xff]
    %v180 = vld [vmem:[#allocation5 + $0xb8] sm:$0xff]
    %v181 = vld [vmem:[#allocation5 + $0xc0] sm:$0xff]
    %v182 = vld [vmem:[#allocation5 + $0xc8] sm:$0xff]
    %v183 = vld [vmem:[#allocation5 + $0xd0] sm:$0xff]
    %v184 = vld [vmem:[#allocation5 + $0xd8] sm:$0xff]
    %v185 = vld [vmem:[#allocation5 + $0xe0] sm:$0xff]
    %v186 = vld [vmem:[#allocation5 + $0xe8] sm:$0xff]
    %v187 = vld [vmem:[#allocation5 + $0xf0] sm:$0xff]
    %v188 = vld [vmem:[#allocation5 + $0xf8] sm:$0xff]
    %v189 = vld [vmem:[#allocation5 + $0x100] sm:$0xff]
    %v190 = vld [vmem:[#allocation5 + $0x108] sm:$0xff]
    %v191 = vld [vmem:[#allocation5 + $0x110] sm:$0xff]
    %v192 = vld [vmem:[#allocation5 + $0x118] sm:$0xff]
    %v193 = vld [vmem:[#allocation5 + $0x120] sm:$0xff]
    %v194 = vld [vmem:[#allocation5 + $0x128] sm:$0xff]
    %v195 = vld [vmem:[#allocation5 + $0x130] sm:$0xff]
    %v196 = vld [vmem:[#allocation5 + $0x138] sm:$0xff]
    %v197 = vld [vmem:[#allocation5 + $0x140] sm:$0xff]
    %v198 = vld [vmem:[#allocation5 + $0x148] sm:$0xff]
    %v199 = vld [vmem:[#allocation5 + $0x150] sm:$0xff]
    %v200 = vld [vmem:[#allocation5 + $0x158] sm:$0xff]
    %v201 = vld [vmem:[#allocation5 + $0x160] sm:$0xff]
    %v202 = vld [vmem:[#allocation5 + $0x168] sm:$0xff]
    %v203 = vld [vmem:[#allocation5 + $0x170] sm:$0xff]
    %v204 = vld [vmem:[#allocation5 + $0x178] sm:$0xff]
    %v205 = vld [vmem:[#allocation5 + $0x180] sm:$0xff]
    %v206 = vld [vmem:[#allocation5 + $0x188] sm:$0xff]
    %v207 = vld [vmem:[#allocation5 + $0x190] sm:$0xff]
    %v208 = vld [vmem:[#allocation5 + $0x198] sm:$0xff]
    %v209 = vld [vmem:[#allocation5 + $0x1a0] sm:$0xff]
    %v210 = vld [vmem:[#allocation5 + $0x1a8] sm:$0xff]
    %v211 = vld [vmem:[#allocation5 + $0x1b0] sm:$0xff]
    %v212 = vld [vmem:[#allocation5 + $0x1b8] sm:$0xff]
    %v213 = vld [vmem:[#allocation16] ss:$8 sm:$0xf]
    %v214 = vld [vmem:[#allocation16] ss:$8 sm:$0xf0]
    %v215 = vor.u32 %v213, %v214
    %v217 = vlaneseq
    %v218 = vshrl.u32 %v217, 7
    %v219 = vsub.s32 0, %v218
    %v220 = vrot.slane %v215, %v219
    %v221 = vlaneseq
    %v222 = vshrl.u32 %v221, 7
    %v223 = vsub.s32 1, %v222
    %v224 = vrot.slane %v215, %v223
    %v225 = vlaneseq
    %v226 = vshrl.u32 %v225, 7
    %v227 = vsub.s32 2, %v226
    %v228 = vrot.slane %v215, %v227
    %v229 = vlaneseq
    %v230 = vshrl.u32 %v229, 7
    %v231 = vsub.s32 3, %v230
    %v232 = vrot.slane %v215, %v231
    %v233 = vlaneseq
    %v234 = vshrl.u32 %v233, 7
    %v235 = vsub.s32 4, %v234
    %v236 = vrot.slane %v215, %v235
    %v237 = vlaneseq
    %v238 = vshrl.u32 %v237, 7
    %v239 = vsub.s32 5, %v238
    %v240 = vrot.slane %v215, %v239
    %v241 = vlaneseq
    %v242 = vshrl.u32 %v241, 7
    %v243 = vsub.s32 6, %v242
    %v244 = vrot.slane %v215, %v243
    %vm252 = vcmask 523264
    %v254 = vsel %vm252, %v153, 0
    %v257 = vsel %vm252, %v154, 0
    %v260 = vsel %vm252, %v155, 0
    %v263 = vsel %vm252, %v156, 0
    %265 = vmatprep.subr.mxu0 %v158
    %266 = vmatpush1.msra.mxu0 %v157
    %267 = vmatprep.subr.mxu0 %v165
    %268 = vmatpush1.msra.mxu0 %v164
    %269 = vmatprep.subr.mxu0 %v172
    %270 = vmatpush1.msra.mxu0 %v171
    %271 = vmatprep.subr.mxu0 %v179
    %272 = vmatpush1.msra.mxu0 %v178
    %273 = vmatprep.subr.mxu0 %v186
    %274 = vmatpush1.msra.mxu0 %v185
    %275 = vmatprep.subr.mxu0 %v193
    %276 = vmatpush1.msra.mxu0 %v192
    %277 = vmatprep.subr.mxu0 %v200
    %278 = vmatpush1.msra.mxu0 %v199
    %279 = vmatprep.subr.mxu0 %v207
    %280 = vmatpush1.msra.mxu0 %v206
    %281 = vmatprep.subr.mxu0 0.0
    %282 = vmatpush1.msra.mxu0 0.0
    %283 = vmatprep.subr.mxu0 0.0
    %284 = vmatpush1.msra.mxu0 0.0
    %285 = vmatprep.subr.mxu0 0.0
    %286 = vmatpush1.msra.mxu0 0.0
    %287 = vmatprep.subr.mxu0 0.0
    %288 = vmatpush1.msra.mxu0 0.0
    %289 = vmatprep.subr.mxu0 0.0
    %290 = vmatpush1.msra.mxu0 0.0
    %291 = vmatprep.subr.mxu0 0.0
    %292 = vmatpush1.msra.mxu0 0.0
    %293 = vmatprep.subr.mxu0 0.0
    %294 = vmatpush1.msra.mxu0 0.0
    %295 = vmatprep.subr.mxu0 0.0
    %296 = vmatpush1.msra.mxu0 0.0
    %297 = vmatprep.subr.mxu0 0.0
    %298 = vmatpush1.msra.mxu0 0.0
    %299 = vmatprep.subr.mxu0 0.0
    %300 = vmatpush1.msra.mxu0 0.0
    %301 = vmatprep.subr.mxu0 0.0
    %302 = vmatpush1.msra.mxu0 0.0
    %303 = vmatprep.subr.mxu0 0.0
    %304 = vmatpush1.msra.mxu0 0.0
    %305 = vmatprep.subr.mxu0 0.0
    %306 = vmatpush1.msra.mxu0 0.0
    %307 = vmatprep.subr.mxu0 0.0
    %308 = vmatpush1.msra.mxu0 0.0
    %309 = vmatprep.subr.mxu0 0.0
    %310 = vmatpush1.msra.mxu0 0.0
    %311 = vmatprep.subr.mxu0 0.0
    %312 = vmatpush1.msra.mxu0 0.0
    %313 = vmatprep.subr.mxu0 0.0
    %314 = vmatpush1.msra.mxu0 0.0
    %315 = vmatprep.subr.mxu0 0.0
    %316 = vmatpush1.msra.mxu0 0.0
    %317 = vmatprep.subr.mxu0 0.0
    %318 = vmatpush1.msra.mxu0 0.0
    %319 = vmatprep.subr.mxu0 0.0
    %320 = vmatpush1.msra.mxu0 0.0
    %321 = vmatprep.subr.mxu0 0.0
    %322 = vmatpush1.msra.mxu0 0.0
    %323 = vmatprep.subr.mxu0 0.0
    %324 = vmatpush1.msra.mxu0 0.0
    %325 = vmatprep.subr.mxu0 0.0
    %326 = vmatpush1.msra.mxu0 0.0
    %327 = vmatprep.subr.mxu0 0.0
    %328 = vmatpush1.msra.mxu0 0.0
    %329 = vmatprep.mubr.f32.mxu0 0.0
    %330 = vmatmul.mubr.f32.gmra.mrb[0].mxu0 %v254
    %v331 = vpop.f32.mrb[0].mxu0
    %v332 = vadd.f32 %v220, %v331
    %v333 = vpop.f32.mrb[0].mxu0
    %v334 = vadd.f32 %v224, %v333
    %335 = vmatprep.mubr.f32.mxu0 0.0
    %336 = vmatmul.mubr.f32.gmra.mrb[0].mxu0 %v257
    %v337 = vpop.f32.mrb[0].mxu0
    %v338 = vadd.f32 %v220, %v337
    %v339 = vpop.f32.mrb[0].mxu0
    %v340 = vadd.f32 %v224, %v339
    %341 = vmatprep.mubr.f32.mxu0 0.0
    %342 = vmatmul.mubr.f32.gmra.mrb[0].mxu0 %v260
    %v343 = vpop.f32.mrb[0].mxu0
    %v344 = vadd.f32 %v220, %v343
    %v345 = vpop.f32.mrb[0].mxu0
    %v346 = vadd.f32 %v224, %v345
    %347 = vmatprep.mubr.f32.mxu0 0.0
    %348 = vmatmul.mubr.f32.gmra.mrb[0].mxu0 %v263
    %v349 = vpop.f32.mrb[0].mxu0
    %v350 = vadd.f32 %v220, %v349
    %v351 = vpop.f32.mrb[0].mxu0
    %v352 = vadd.f32 %v224, %v351
    %353 = vdwg.mxu0
    %354 = vmatprep.subr.mxu0 %v160
    %355 = vmatpush1.msra.mxu0 %v159
    %356 = vmatprep.subr.mxu0 %v167
    %357 = vmatpush1.msra.mxu0 %v166
    %358 = vmatprep.subr.mxu0 %v174
    %359 = vmatpush1.msra.mxu0 %v173
    %360 = vmatprep.subr.mxu0 %v181
    %361 = vmatpush1.msra.mxu0 %v180
    %362 = vmatprep.subr.mxu0 %v188
    %363 = vmatpush1.msra.mxu0 %v187
    %364 = vmatprep.subr.mxu0 %v195
    %365 = vmatpush1.msra.mxu0 %v194
    %366 = vmatprep.subr.mxu0 %v202
    %367 = vmatpush1.msra.mxu0 %v201
    %368 = vmatprep.subr.mxu0 %v209
    %369 = vmatpush1.msra.mxu0 %v208
    %370 = vmatprep.subr.mxu0 0.0
    %371 = vmatpush1.msra.mxu0 0.0
    %372 = vmatprep.subr.mxu0 0.0
    %373 = vmatpush1.msra.mxu0 0.0
    %374 = vmatprep.subr.mxu0 0.0
    %375 = vmatpush1.msra.mxu0 0.0
    %376 = vmatprep.subr.mxu0 0.0
    %377 = vmatpush1.msra.mxu0 0.0
    %378 = vmatprep.subr.mxu0 0.0
    %379 = vmatpush1.msra.mxu0 0.0
    %380 = vmatprep.subr.mxu0 0.0
    %381 = vmatpush1.msra.mxu0 0.0
    %382 = vmatprep.subr.mxu0 0.0
    %383 = vmatpush1.msra.mxu0 0.0
    %384 = vmatprep.subr.mxu0 0.0
    %385 = vmatpush1.msra.mxu0 0.0
    %386 = vmatprep.subr.mxu0 0.0
    %387 = vmatpush1.msra.mxu0 0.0
    %388 = vmatprep.subr.mxu0 0.0
    %389 = vmatpush1.msra.mxu0 0.0
    %390 = vmatprep.subr.mxu0 0.0
    %391 = vmatpush1.msra.mxu0 0.0
    %392 = vmatprep.subr.mxu0 0.0
    %393 = vmatpush1.msra.mxu0 0.0
    %394 = vmatprep.subr.mxu0 0.0
    %395 = vmatpush1.msra.mxu0 0.0
    %396 = vmatprep.subr.mxu0 0.0
    %397 = vmatpush1.msra.mxu0 0.0
    %398 = vmatprep.subr.mxu0 0.0
    %399 = vmatpush1.msra.mxu0 0.0
    %400 = vmatprep.subr.mxu0 0.0
    %401 = vmatpush1.msra.mxu0 0.0
    %402 = vmatprep.subr.mxu0 0.0
    %403 = vmatpush1.msra.mxu0 0.0
    %404 = vmatprep.subr.mxu0 0.0
    %405 = vmatpush1.msra.mxu0 0.0
    %406 = vmatprep.subr.mxu0 0.0
    %407 = vmatpush1.msra.mxu0 0.0
    %408 = vmatprep.subr.mxu0 0.0
    %409 = vmatpush1.msra.mxu0 0.0
    %410 = vmatprep.subr.mxu0 0.0
    %411 = vmatpush1.msra.mxu0 0.0
    %412 = vmatprep.subr.mxu0 0.0
    %413 = vmatpush1.msra.mxu0 0.0
    %414 = vmatprep.subr.mxu0 0.0
    %415 = vmatpush1.msra.mxu0 0.0
    %416 = vmatprep.subr.mxu0 0.0
    %417 = vmatpush1.msra.mxu0 0.0
    %418 = vmatprep.mubr.f32.mxu0 0.0
    %419 = vmatmul.mubr.f32.gmra.mrb[0].mxu0 %v254
    %v420 = vpop.f32.mrb[0].mxu0
    %v421 = vadd.f32 %v228, %v420
    %v422 = vpop.f32.mrb[0].mxu0
    %v423 = vadd.f32 %v232, %v422
    %424 = vmatprep.mubr.f32.mxu0 0.0
    %425 = vmatmul.mubr.f32.gmra.mrb[0].mxu0 %v257
    %v426 = vpop.f32.mrb[0].mxu0
    %v427 = vadd.f32 %v228, %v426
    %v428 = vpop.f32.mrb[0].mxu0
    %v429 = vadd.f32 %v232, %v428
    %430 = vmatprep.mubr.f32.mxu0 0.0
    %431 = vmatmul.mubr.f32.gmra.mrb[0].mxu0 %v260
    %v432 = vpop.f32.mrb[0].mxu0
    %v433 = vadd.f32 %v228, %v432
    %v434 = vpop.f32.mrb[0].mxu0
    %v435 = vadd.f32 %v232, %v434
    %436 = vmatprep.mubr.f32.mxu0 0.0
    %437 = vmatmul.mubr.f32.gmra.mrb[0].mxu0 %v263
    %v438 = vpop.f32.mrb[0].mxu0
    %v439 = vadd.f32 %v228, %v438
    %v440 = vpop.f32.mrb[0].mxu0
    %v441 = vadd.f32 %v232, %v440
    %442 = vdwg.mxu0
    %443 = vmatprep.subr.mxu0 %v162
    %444 = vmatpush1.msra.mxu0 %v161
    %445 = vmatprep.subr.mxu0 %v169
    %446 = vmatpush1.msra.mxu0 %v168
    %447 = vmatprep.subr.mxu0 %v176
    %448 = vmatpush1.msra.mxu0 %v175
    %449 = vmatprep.subr.mxu0 %v183
    %450 = vmatpush1.msra.mxu0 %v182
    %451 = vmatprep.subr.mxu0 %v190
    %452 = vmatpush1.msra.mxu0 %v189
    %453 = vmatprep.subr.mxu0 %v197
    %454 = vmatpush1.msra.mxu0 %v196
    %455 = vmatprep.subr.mxu0 %v204
    %456 = vmatpush1.msra.mxu0 %v203
    %457 = vmatprep.subr.mxu0 %v211
    %458 = vmatpush1.msra.mxu0 %v210
    %459 = vmatprep.subr.mxu0 0.0
    %460 = vmatpush1.msra.mxu0 0.0
    %461 = vmatprep.subr.mxu0 0.0
    %462 = vmatpush1.msra.mxu0 0.0
    %463 = vmatprep.subr.mxu0 0.0
    %464 = vmatpush1.msra.mxu0 0.0
    %465 = vmatprep.subr.mxu0 0.0
    %466 = vmatpush1.msra.mxu0 0.0
    %467 = vmatprep.subr.mxu0 0.0
    %468 = vmatpush1.msra.mxu0 0.0
    %469 = vmatprep.subr.mxu0 0.0
    %470 = vmatpush1.msra.mxu0 0.0
    %471 = vmatprep.subr.mxu0 0.0
    %472 = vmatpush1.msra.mxu0 0.0
    %473 = vmatprep.subr.mxu0 0.0
    %474 = vmatpush1.msra.mxu0 0.0
    %475 = vmatprep.subr.mxu0 0.0
    %476 = vmatpush1.msra.mxu0 0.0
    %477 = vmatprep.subr.mxu0 0.0
    %478 = vmatpush1.msra.mxu0 0.0
    %479 = vmatprep.subr.mxu0 0.0
    %480 = vmatpush1.msra.mxu0 0.0
    %481 = vmatprep.subr.mxu0 0.0
    %482 = vmatpush1.msra.mxu0 0.0
    %483 = vmatprep.subr.mxu0 0.0
    %484 = vmatpush1.msra.mxu0 0.0
    %485 = vmatprep.subr.mxu0 0.0
    %486 = vmatpush1.msra.mxu0 0.0
    %487 = vmatprep.subr.mxu0 0.0
    %488 = vmatpush1.msra.mxu0 0.0
    %489 = vmatprep.subr.mxu0 0.0
    %490 = vmatpush1.msra.mxu0 0.0
    %491 = vmatprep.subr.mxu0 0.0
    %492 = vmatpush1.msra.mxu0 0.0
    %493 = vmatprep.subr.mxu0 0.0
    %494 = vmatpush1.msra.mxu0 0.0
    %495 = vmatprep.subr.mxu0 0.0
    %496 = vmatpush1.msra.mxu0 0.0
    %497 = vmatprep.subr.mxu0 0.0
    %498 = vmatpush1.msra.mxu0 0.0
    %499 = vmatprep.subr.mxu0 0.0
    %500 = vmatpush1.msra.mxu0 0.0
    %501 = vmatprep.subr.mxu0 0.0
    %502 = vmatpush1.msra.mxu0 0.0
    %503 = vmatprep.subr.mxu0 0.0
    %504 = vmatpush1.msra.mxu0 0.0
    %505 = vmatprep.subr.mxu0 0.0
    %506 = vmatpush1.msra.mxu0 0.0
    %507 = vmatprep.mubr.f32.mxu0 0.0
    %508 = vmatmul.mubr.f32.gmra.mrb[0].mxu0 %v254
    %v509 = vpop.f32.mrb[0].mxu0
    %v510 = vadd.f32 %v236, %v509
    %v511 = vpop.f32.mrb[0].mxu0
    %v512 = vadd.f32 %v240, %v511
    %513 = vmatprep.mubr.f32.mxu0 0.0
    %514 = vmatmul.mubr.f32.gmra.mrb[0].mxu0 %v257
    %v515 = vpop.f32.mrb[0].mxu0
    %v516 = vadd.f32 %v236, %v515
    %v517 = vpop.f32.mrb[0].mxu0
    %v518 = vadd.f32 %v240, %v517
    %519 = vmatprep.mubr.f32.mxu0 0.0
    %520 = vmatmul.mubr.f32.gmra.mrb[0].mxu0 %v260
    %v521 = vpop.f32.mrb[0].mxu0
    %v522 = vadd.f32 %v236, %v521
    %v523 = vpop.f32.mrb[0].mxu0
    %v524 = vadd.f32 %v240, %v523
    %525 = vmatprep.mubr.f32.mxu0 0.0
    %526 = vmatmul.mubr.f32.gmra.mrb[0].mxu0 %v263
    %v527 = vpop.f32.mrb[0].mxu0
    %v528 = vadd.f32 %v236, %v527
    %v529 = vpop.f32.mrb[0].mxu0
    %v530 = vadd.f32 %v240, %v529
    %531 = vdwg.mxu0
    %532 = vmatprep.subr.mxu0 0.0
    %533 = vmatpush1.msra.mxu0 %v163
    %534 = vmatprep.subr.mxu0 0.0
    %535 = vmatpush1.msra.mxu0 %v170
    %536 = vmatprep.subr.mxu0 0.0
    %537 = vmatpush1.msra.mxu0 %v177
    %538 = vmatprep.subr.mxu0 0.0
    %539 = vmatpush1.msra.mxu0 %v184
    %540 = vmatprep.subr.mxu0 0.0
    %541 = vmatpush1.msra.mxu0 %v191
    %542 = vmatprep.subr.mxu0 0.0
    %543 = vmatpush1.msra.mxu0 %v198
    %544 = vmatprep.subr.mxu0 0.0
    %545 = vmatpush1.msra.mxu0 %v205
    %546 = vmatprep.subr.mxu0 0.0
    %547 = vmatpush1.msra.mxu0 %v212
    %548 = vmatprep.subr.mxu0 0.0
    %549 = vmatpush1.msra.mxu0 0.0
    %550 = vmatprep.subr.mxu0 0.0
    %551 = vmatpush1.msra.mxu0 0.0
    %552 = vmatprep.subr.mxu0 0.0
    %553 = vmatpush1.msra.mxu0 0.0
    %554 = vmatprep.subr.mxu0 0.0
    %555 = vmatpush1.msra.mxu0 0.0
    %556 = vmatprep.subr.mxu0 0.0
    %557 = vmatpush1.msra.mxu0 0.0
    %558 = vmatprep.subr.mxu0 0.0
    %559 = vmatpush1.msra.mxu0 0.0
    %560 = vmatprep.subr.mxu0 0.0
    %561 = vmatpush1.msra.mxu0 0.0
    %562 = vmatprep.subr.mxu0 0.0
    %563 = vmatpush1.msra.mxu0 0.0
    %564 = vmatprep.subr.mxu0 0.0
    %565 = vmatpush1.msra.mxu0 0.0
    %566 = vmatprep.subr.mxu0 0.0
    %567 = vmatpush1.msra.mxu0 0.0
    %568 = vmatprep.subr.mxu0 0.0
    %569 = vmatpush1.msra.mxu0 0.0
    %570 = vmatprep.subr.mxu0 0.0
    %571 = vmatpush1.msra.mxu0 0.0
    %572 = vmatprep.subr.mxu0 0.0
    %573 = vmatpush1.msra.mxu0 0.0
    %574 = vmatprep.subr.mxu0 0.0
    %575 = vmatpush1.msra.mxu0 0.0
    %576 = vmatprep.subr.mxu0 0.0
    %577 = vmatpush1.msra.mxu0 0.0
    %578 = vmatprep.subr.mxu0 0.0
    %579 = vmatpush1.msra.mxu0 0.0
    %580 = vmatprep.subr.mxu0 0.0
    %581 = vmatpush1.msra.mxu0 0.0
    %582 = vmatprep.subr.mxu0 0.0
    %583 = vmatpush1.msra.mxu0 0.0
    %584 = vmatprep.subr.mxu0 0.0
    %585 = vmatpush1.msra.mxu0 0.0
    %586 = vmatprep.subr.mxu0 0.0
    %587 = vmatpush1.msra.mxu0 0.0
    %588 = vmatprep.subr.mxu0 0.0
    %589 = vmatpush1.msra.mxu0 0.0
    %590 = vmatprep.subr.mxu0 0.0
    %591 = vmatpush1.msra.mxu0 0.0
    %592 = vmatprep.subr.mxu0 0.0
    %593 = vmatpush1.msra.mxu0 0.0
    %594 = vmatprep.subr.mxu0 0.0
    %595 = vmatpush1.msra.mxu0 0.0
    %596 = vmatprep.mubr.f32.mxu0 0.0
    %597 = vmatmul.mubr.f32.gmra.mrb[0].mxu0 %v254
    %v598 = vpop.f32.mrb[0].mxu0
    %v599 = vadd.f32 %v244, %v598
    %v600 = vpop.f32.mrb[0].mxu0
    %601 = vmatprep.mubr.f32.mxu0 0.0
    %602 = vmatmul.mubr.f32.gmra.mrb[0].mxu0 %v257
    %v603 = vpop.f32.mrb[0].mxu0
    %v604 = vadd.f32 %v244, %v603
    %v605 = vpop.f32.mrb[0].mxu0
    %606 = vmatprep.mubr.f32.mxu0 0.0
    %607 = vmatmul.mubr.f32.gmra.mrb[0].mxu0 %v260
    %v608 = vpop.f32.mrb[0].mxu0
    %v609 = vadd.f32 %v244, %v608
    %v610 = vpop.f32.mrb[0].mxu0
    %611 = vmatprep.mubr.f32.mxu0 0.0
    %612 = vmatmul.mubr.f32.gmra.mrb[0].mxu0 %v263
    %v613 = vpop.f32.mrb[0].mxu0
    %v614 = vadd.f32 %v244, %v613
    %v615 = vpop.f32.mrb[0].mxu0
    %616 = vdwg.mxu0
    %vm617 = vcmp.gt.f32.partialorder %v332, 0.0
    %vm618 = vcmp.gt.f32.partialorder %v334, 0.0
    %vm619 = vcmp.gt.f32.partialorder %v421, 0.0
    %vm620 = vcmp.gt.f32.partialorder %v423, 0.0
    %vm621 = vcmp.gt.f32.partialorder %v510, 0.0
    %vm622 = vcmp.gt.f32.partialorder %v512, 0.0
    %vm623 = vcmp.gt.f32.partialorder %v599, 0.0
    %vm624 = vcmp.gt.f32.partialorder %v338, 0.0
    %vm625 = vcmp.gt.f32.partialorder %v340, 0.0
    %vm626 = vcmp.gt.f32.partialorder %v427, 0.0
    %vm627 = vcmp.gt.f32.partialorder %v429, 0.0
    %vm628 = vcmp.gt.f32.partialorder %v516, 0.0
    %vm629 = vcmp.gt.f32.partialorder %v518, 0.0
    %vm630 = vcmp.gt.f32.partialorder %v604, 0.0
    %vm631 = vcmp.gt.f32.partialorder %v344, 0.0
    %vm632 = vcmp.gt.f32.partialorder %v346, 0.0
    %vm633 = vcmp.gt.f32.partialorder %v433, 0.0
    %vm634 = vcmp.gt.f32.partialorder %v435, 0.0
    %vm635 = vcmp.gt.f32.partialorder %v522, 0.0
    %vm636 = vcmp.gt.f32.partialorder %v524, 0.0
    %vm637 = vcmp.gt.f32.partialorder %v609, 0.0
    %vm638 = vcmp.gt.f32.partialorder %v350, 0.0
    %vm639 = vcmp.gt.f32.partialorder %v352, 0.0
    %vm640 = vcmp.gt.f32.partialorder %v439, 0.0
    %vm641 = vcmp.gt.f32.partialorder %v441, 0.0
    %vm642 = vcmp.gt.f32.partialorder %v528, 0.0
    %vm643 = vcmp.gt.f32.partialorder %v530, 0.0
    %vm644 = vcmp.gt.f32.partialorder %v614, 0.0
    %v645 = vmul.f32 %v332, 0.01
    %v646 = vmul.f32 %v334, 0.01
    %v647 = vmul.f32 %v421, 0.01
    %v648 = vmul.f32 %v423, 0.01
    %v649 = vmul.f32 %v510, 0.01
    %v650 = vmul.f32 %v512, 0.01
    %v651 = vmul.f32 %v599, 0.01
    %v652 = vmul.f32 %v338, 0.01
    %v653 = vmul.f32 %v340, 0.01
    %v654 = vmul.f32 %v427, 0.01
    %v655 = vmul.f32 %v429, 0.01
    %v656 = vmul.f32 %v516, 0.01
    %v657 = vmul.f32 %v518, 0.01
    %v658 = vmul.f32 %v604, 0.01
    %v659 = vmul.f32 %v344, 0.01
    %v660 = vmul.f32 %v346, 0.01
    %v661 = vmul.f32 %v433, 0.01
    %v662 = vmul.f32 %v435, 0.01
    %v663 = vmul.f32 %v522, 0.01
    %v664 = vmul.f32 %v524, 0.01
    %v665 = vmul.f32 %v609, 0.01
    %v666 = vmul.f32 %v350, 0.01
    %v667 = vmul.f32 %v352, 0.01
    %v668 = vmul.f32 %v439, 0.01
    %v669 = vmul.f32 %v441, 0.01
    %v670 = vmul.f32 %v528, 0.01
    %v671 = vmul.f32 %v530, 0.01
    %v672 = vmul.f32 %v614, 0.01
    %v673 = vsel %vm617, %v332, %v645
    %v674 = vsel %vm618, %v334, %v646
    %v675 = vsel %vm619, %v421, %v647
    %v676 = vsel %vm620, %v423, %v648
    %v677 = vsel %vm621, %v510, %v649
    %v678 = vsel %vm622, %v512, %v650
    %v679 = vsel %vm623, %v599, %v651
    %v680 = vsel %vm624, %v338, %v652
    %v681 = vsel %vm625, %v340, %v653
    %v682 = vsel %vm626, %v427, %v654
    %v683 = vsel %vm627, %v429, %v655
    %v684 = vsel %vm628, %v516, %v656
    %v685 = vsel %vm629, %v518, %v657
    %v686 = vsel %vm630, %v604, %v658
    %v687 = vsel %vm631, %v344, %v659
    %v688 = vsel %vm632, %v346, %v660
    %v689 = vsel %vm633, %v433, %v661
    %v690 = vsel %vm634, %v435, %v662
    %v691 = vsel %vm635, %v522, %v663
    %v692 = vsel %vm636, %v524, %v664
    %v693 = vsel %vm637, %v609, %v665
    %v694 = vsel %vm638, %v350, %v666
    %v695 = vsel %vm639, %v352, %v667
    %v696 = vsel %vm640, %v439, %v668
    %v697 = vsel %vm641, %v441, %v669
    %v698 = vsel %vm642, %v528, %v670
    %v699 = vsel %vm643, %v530, %v671
    %v700 = vsel %vm644, %v614, %v672
    %v701 = vld [vmem:[#allocation7] sm:$0xff]
    %v702 = vld [vmem:[#allocation7 + $0x8] sm:$0xff]
    %v703 = vld [vmem:[#allocation7 + $0x10] sm:$0xff]
    %v704 = vld [vmem:[#allocation7 + $0x18] sm:$0xff]
    %v705 = vld [vmem:[#allocation7 + $0x20] sm:$0xff]
    %v706 = vld [vmem:[#allocation7 + $0x28] sm:$0xff]
    %v707 = vld [vmem:[#allocation7 + $0x30] sm:$0xff]
    %v708 = vld [vmem:[#allocation7 + $0x38] sm:$0xff]
    %v709 = vld [vmem:[#allocation7 + $0x40] sm:$0xff]
    %v710 = vld [vmem:[#allocation7 + $0x48] sm:$0xff]
    %v711 = vld [vmem:[#allocation7 + $0x50] sm:$0xff]
    %v712 = vld [vmem:[#allocation7 + $0x58] sm:$0xff]
    %v713 = vld [vmem:[#allocation7 + $0x60] sm:$0xff]
    %v714 = vld [vmem:[#allocation7 + $0x68] sm:$0xff]
    %v715 = vld [vmem:[#allocation7 + $0x70] sm:$0xff]
    %v716 = vld [vmem:[#allocation7 + $0x78] sm:$0xff]
    %v717 = vld [vmem:[#allocation7 + $0x80] sm:$0xff]
    %v718 = vld [vmem:[#allocation7 + $0x88] sm:$0xff]
    %v719 = vld [vmem:[#allocation7 + $0x90] sm:$0xff]
    %v720 = vld [vmem:[#allocation7 + $0x98] sm:$0xff]
    %v721 = vld [vmem:[#allocation7 + $0xa0] sm:$0xff]
    %v722 = vld [vmem:[#allocation7 + $0xa8] sm:$0xff]
    %v723 = vld [vmem:[#allocation7 + $0xb0] sm:$0xff]
    %v724 = vld [vmem:[#allocation7 + $0xb8] sm:$0xff]
    %v725 = vld [vmem:[#allocation7 + $0xc0] sm:$0xff]
    %v726 = vld [vmem:[#allocation7 + $0xc8] sm:$0xff]
    %v727 = vld [vmem:[#allocation7 + $0xd0] sm:$0xff]
    %v728 = vld [vmem:[#allocation7 + $0xd8] sm:$0xff]
    %v729 = vld [vmem:[#allocation7 + $0xe0] sm:$0xff]
    %v730 = vld [vmem:[#allocation7 + $0xe8] sm:$0xff]
    %v731 = vld [vmem:[#allocation7 + $0xf0] sm:$0xff]
    %v732 = vld [vmem:[#allocation7 + $0xf8] sm:$0xff]
    %v733 = vld [vmem:[#allocation7 + $0x100] sm:$0xff]
    %v734 = vld [vmem:[#allocation7 + $0x108] sm:$0xff]
    %v735 = vld [vmem:[#allocation7 + $0x110] sm:$0xff]
    %v736 = vld [vmem:[#allocation7 + $0x118] sm:$0xff]
    %v737 = vld [vmem:[#allocation7 + $0x120] sm:$0xff]
    %v738 = vld [vmem:[#allocation7 + $0x128] sm:$0xff]
    %v739 = vld [vmem:[#allocation7 + $0x130] sm:$0xff]
    %v740 = vld [vmem:[#allocation7 + $0x138] sm:$0xff]
    %v741 = vld [vmem:[#allocation7 + $0x140] sm:$0xff]
    %v742 = vld [vmem:[#allocation7 + $0x148] sm:$0xff]
    %v743 = vld [vmem:[#allocation7 + $0x150] sm:$0xff]
    %v744 = vld [vmem:[#allocation7 + $0x158] sm:$0xff]
    %v745 = vld [vmem:[#allocation7 + $0x160] sm:$0xff]
    %v746 = vld [vmem:[#allocation7 + $0x168] sm:$0xff]
    %v747 = vld [vmem:[#allocation7 + $0x170] sm:$0xff]
    %v748 = vld [vmem:[#allocation7 + $0x178] sm:$0xff]
    %v749 = vld [vmem:[#allocation7 + $0x180] sm:$0xff]
    %v750 = vld [vmem:[#allocation7 + $0x188] sm:$0xff]
    %v751 = vld [vmem:[#allocation7 + $0x190] sm:$0xff]
    %v752 = vld [vmem:[#allocation7 + $0x198] sm:$0xff]
    %v753 = vld [vmem:[#allocation7 + $0x1a0] sm:$0xff]
    %v754 = vld [vmem:[#allocation7 + $0x1a8] sm:$0xff]
    %v755 = vld [vmem:[#allocation7 + $0x1b0] sm:$0xff]
    %v756 = vld [vmem:[#allocation7 + $0x1b8] sm:$0xff]
    %v757 = vld [vmem:[#allocation7 + $0x1c0] sm:$0xff]
    %v758 = vld [vmem:[#allocation7 + $0x1c8] sm:$0xff]
    %v759 = vld [vmem:[#allocation7 + $0x1d0] sm:$0xff]
    %v760 = vld [vmem:[#allocation7 + $0x1d8] sm:$0xff]
    %v761 = vld [vmem:[#allocation7 + $0x1e0] sm:$0xff]
    %v762 = vld [vmem:[#allocation7 + $0x1e8] sm:$0xff]
    %v763 = vld [vmem:[#allocation7 + $0x1f0] sm:$0xff]
    %v764 = vld [vmem:[#allocation7 + $0x1f8] sm:$0xff]
    %v765 = vld [vmem:[#allocation7 + $0x200] sm:$0xff]
    %v766 = vld [vmem:[#allocation7 + $0x208] sm:$0xff]
    %v767 = vld [vmem:[#allocation7 + $0x210] sm:$0xff]
    %v768 = vld [vmem:[#allocation7 + $0x218] sm:$0xff]
    %v769 = vld [vmem:[#allocation7 + $0x220] sm:$0xff]
    %v770 = vld [vmem:[#allocation7 + $0x228] sm:$0xff]
    %v771 = vld [vmem:[#allocation7 + $0x230] sm:$0xff]
    %v772 = vld [vmem:[#allocation7 + $0x238] sm:$0xff]
    %v773 = vld [vmem:[#allocation7 + $0x240] sm:$0xff]
    %v774 = vld [vmem:[#allocation7 + $0x248] sm:$0xff]
    %v775 = vld [vmem:[#allocation7 + $0x250] sm:$0xff]
    %v776 = vld [vmem:[#allocation7 + $0x258] sm:$0xff]
    %v777 = vld [vmem:[#allocation7 + $0x260] sm:$0xff]
    %v778 = vld [vmem:[#allocation7 + $0x268] sm:$0xff]
    %v779 = vld [vmem:[#allocation7 + $0x270] sm:$0xff]
    %v780 = vld [vmem:[#allocation7 + $0x278] sm:$0xff]
    %v781 = vld [vmem:[#allocation7 + $0x280] sm:$0xff]
    %v782 = vld [vmem:[#allocation7 + $0x288] sm:$0xff]
    %v783 = vld [vmem:[#allocation7 + $0x290] sm:$0xff]
    %v784 = vld [vmem:[#allocation7 + $0x298] sm:$0xff]
    %v785 = vld [vmem:[#allocation7 + $0x2a0] sm:$0xff]
    %v786 = vld [vmem:[#allocation7 + $0x2a8] sm:$0xff]
    %v787 = vld [vmem:[#allocation7 + $0x2b0] sm:$0xff]
    %v788 = vld [vmem:[#allocation7 + $0x2b8] sm:$0xff]
    %v789 = vld [vmem:[#allocation7 + $0x2c0] sm:$0xff]
    %v790 = vld [vmem:[#allocation7 + $0x2c8] sm:$0xff]
    %v791 = vld [vmem:[#allocation7 + $0x2d0] sm:$0xff]
    %v792 = vld [vmem:[#allocation7 + $0x2d8] sm:$0xff]
    %v793 = vld [vmem:[#allocation7 + $0x2e0] sm:$0xff]
    %v794 = vld [vmem:[#allocation7 + $0x2e8] sm:$0xff]
    %v795 = vld [vmem:[#allocation7 + $0x2f0] sm:$0xff]
    %v796 = vld [vmem:[#allocation7 + $0x2f8] sm:$0xff]
    %v797 = vld [vmem:[#allocation7 + $0x300] sm:$0xff]
    %v798 = vld [vmem:[#allocation7 + $0x308] sm:$0xff]
    %v799 = vld [vmem:[#allocation7 + $0x310] sm:$0xff]
    %v800 = vld [vmem:[#allocation7 + $0x318] sm:$0xff]
    %v801 = vld [vmem:[#allocation7 + $0x320] sm:$0xff]
    %v802 = vld [vmem:[#allocation7 + $0x328] sm:$0xff]
    %v803 = vld [vmem:[#allocation7 + $0x330] sm:$0xff]
    %v804 = vld [vmem:[#allocation7 + $0x338] sm:$0xff]
    %v805 = vld [vmem:[#allocation7 + $0x340] sm:$0xff]
    %v806 = vld [vmem:[#allocation7 + $0x348] sm:$0xff]
    %v807 = vld [vmem:[#allocation7 + $0x350] sm:$0xff]
    %v808 = vld [vmem:[#allocation7 + $0x358] sm:$0xff]
    %v809 = vld [vmem:[#allocation7 + $0x360] sm:$0xff]
    %v810 = vld [vmem:[#allocation7 + $0x368] sm:$0xff]
    %v811 = vld [vmem:[#allocation7 + $0x370] sm:$0xff]
    %v812 = vld [vmem:[#allocation7 + $0x378] sm:$0xff]
    %813 = vmatprep.subr.mxu0 0.0
    %814 = vmatpush1.msra.mxu0 %v701
    %815 = vmatprep.subr.mxu0 0.0
    %816 = vmatpush1.msra.mxu0 %v702
    %817 = vmatprep.subr.mxu0 0.0
    %818 = vmatpush1.msra.mxu0 %v703
    %819 = vmatprep.subr.mxu0 0.0
    %820 = vmatpush1.msra.mxu0 %v704
    %821 = vmatprep.subr.mxu0 0.0
    %822 = vmatpush1.msra.mxu0 %v705
    %823 = vmatprep.subr.mxu0 0.0
    %824 = vmatpush1.msra.mxu0 %v706
    %825 = vmatprep.subr.mxu0 0.0
    %826 = vmatpush1.msra.mxu0 %v707
    %827 = vmatprep.subr.mxu0 0.0
    %828 = vmatpush1.msra.mxu0 %v708
    %829 = vmatprep.subr.mxu0 0.0
    %830 = vmatpush1.msra.mxu0 %v709
    %831 = vmatprep.subr.mxu0 0.0
    %832 = vmatpush1.msra.mxu0 %v710
    %833 = vmatprep.subr.mxu0 0.0
    %834 = vmatpush1.msra.mxu0 %v711
    %835 = vmatprep.subr.mxu0 0.0
    %836 = vmatpush1.msra.mxu0 %v712
    %837 = vmatprep.subr.mxu0 0.0
    %838 = vmatpush1.msra.mxu0 %v713
    %839 = vmatprep.subr.mxu0 0.0
    %840 = vmatpush1.msra.mxu0 %v714
    %841 = vmatprep.subr.mxu0 0.0
    %842 = vmatpush1.msra.mxu0 %v715
    %843 = vmatprep.subr.mxu0 0.0
    %844 = vmatpush1.msra.mxu0 %v716
    %845 = vmatprep.subr.mxu0 0.0
    %846 = vmatpush1.msra.mxu0 %v717
    %847 = vmatprep.subr.mxu0 0.0
    %848 = vmatpush1.msra.mxu0 %v718
    %849 = vmatprep.subr.mxu0 0.0
    %850 = vmatpush1.msra.mxu0 %v719
    %851 = vmatprep.subr.mxu0 0.0
    %852 = vmatpush1.msra.mxu0 %v720
    %853 = vmatprep.subr.mxu0 0.0
    %854 = vmatpush1.msra.mxu0 %v721
    %855 = vmatprep.subr.mxu0 0.0
    %856 = vmatpush1.msra.mxu0 %v722
    %857 = vmatprep.subr.mxu0 0.0
    %858 = vmatpush1.msra.mxu0 %v723
    %859 = vmatprep.subr.mxu0 0.0
    %860 = vmatpush1.msra.mxu0 %v724
    %861 = vmatprep.subr.mxu0 0.0
    %862 = vmatpush1.msra.mxu0 %v725
    %863 = vmatprep.subr.mxu0 0.0
    %864 = vmatpush1.msra.mxu0 %v726
    %865 = vmatprep.subr.mxu0 0.0
    %866 = vmatpush1.msra.mxu0 %v727
    %867 = vmatprep.subr.mxu0 0.0
    %868 = vmatpush1.msra.mxu0 %v728
    %869 = vmatprep.subr.mxu0 0.0
    %870 = vmatpush1.msra.mxu0 %v729
    %871 = vmatprep.subr.mxu0 0.0
    %872 = vmatpush1.msra.mxu0 %v730
    %873 = vmatprep.subr.mxu0 0.0
    %874 = vmatpush1.msra.mxu0 %v731
    %875 = vmatprep.subr.mxu0 0.0
    %876 = vmatpush1.msra.mxu0 %v732
    %877 = vmatprep.mubr.f32.mxu0 %v674
    %878 = vmatmul.mubr.f32.gmra.mrb[0].mxu0 %v673
    %v879 = vpop.f32.mrb[0].mxu0
    %v880 = vadd.f32 0.0, %v879
    %v881 = vpop.f32.mrb[0].mxu0
    %882 = vmatprep.mubr.f32.mxu0 %v681
    %883 = vmatmul.mubr.f32.gmra.mrb[0].mxu0 %v680
    %v884 = vpop.f32.mrb[0].mxu0
    %v885 = vadd.f32 0.0, %v884
    %v886 = vpop.f32.mrb[0].mxu0
    %887 = vmatprep.mubr.f32.mxu0 %v688
    %888 = vmatmul.mubr.f32.gmra.mrb[0].mxu0 %v687
    %v889 = vpop.f32.mrb[0].mxu0
    %v890 = vadd.f32 0.0, %v889
    %v891 = vpop.f32.mrb[0].mxu0
    %892 = vmatprep.mubr.f32.mxu0 %v695
    %893 = vmatmul.mubr.f32.gmra.mrb[0].mxu0 %v694
    %v894 = vpop.f32.mrb[0].mxu0
    %v895 = vadd.f32 0.0, %v894
    %v896 = vpop.f32.mrb[0].mxu0
    %897 = vdwg.mxu0
    %898 = vmatprep.subr.mxu0 0.0
    %899 = vmatpush1.msra.mxu0 %v733
    %900 = vmatprep.subr.mxu0 0.0
    %901 = vmatpush1.msra.mxu0 %v734
    %902 = vmatprep.subr.mxu0 0.0
    %903 = vmatpush1.msra.mxu0 %v735
    %904 = vmatprep.subr.mxu0 0.0
    %905 = vmatpush1.msra.mxu0 %v736
    %906 = vmatprep.subr.mxu0 0.0
    %907 = vmatpush1.msra.mxu0 %v737
    %908 = vmatprep.subr.mxu0 0.0
    %909 = vmatpush1.msra.mxu0 %v738
    %910 = vmatprep.subr.mxu0 0.0
    %911 = vmatpush1.msra.mxu0 %v739
    %912 = vmatprep.subr.mxu0 0.0
    %913 = vmatpush1.msra.mxu0 %v740
    %914 = vmatprep.subr.mxu0 0.0
    %915 = vmatpush1.msra.mxu0 %v741
    %916 = vmatprep.subr.mxu0 0.0
    %917 = vmatpush1.msra.mxu0 %v742
    %918 = vmatprep.subr.mxu0 0.0
    %919 = vmatpush1.msra.mxu0 %v743
    %920 = vmatprep.subr.mxu0 0.0
    %921 = vmatpush1.msra.mxu0 %v744
    %922 = vmatprep.subr.mxu0 0.0
    %923 = vmatpush1.msra.mxu0 %v745
    %924 = vmatprep.subr.mxu0 0.0
    %925 = vmatpush1.msra.mxu0 %v746
    %926 = vmatprep.subr.mxu0 0.0
    %927 = vmatpush1.msra.mxu0 %v747
    %928 = vmatprep.subr.mxu0 0.0
    %929 = vmatpush1.msra.mxu0 %v748
    %930 = vmatprep.subr.mxu0 0.0
    %931 = vmatpush1.msra.mxu0 %v749
    %932 = vmatprep.subr.mxu0 0.0
    %933 = vmatpush1.msra.mxu0 %v750
    %934 = vmatprep.subr.mxu0 0.0
    %935 = vmatpush1.msra.mxu0 %v751
    %936 = vmatprep.subr.mxu0 0.0
    %937 = vmatpush1.msra.mxu0 %v752
    %938 = vmatprep.subr.mxu0 0.0
    %939 = vmatpush1.msra.mxu0 %v753
    %940 = vmatprep.subr.mxu0 0.0
    %941 = vmatpush1.msra.mxu0 %v754
    %942 = vmatprep.subr.mxu0 0.0
    %943 = vmatpush1.msra.mxu0 %v755
    %944 = vmatprep.subr.mxu0 0.0
    %945 = vmatpush1.msra.mxu0 %v756
    %946 = vmatprep.subr.mxu0 0.0
    %947 = vmatpush1.msra.mxu0 %v757
    %948 = vmatprep.subr.mxu0 0.0
    %949 = vmatpush1.msra.mxu0 %v758
    %950 = vmatprep.subr.mxu0 0.0
    %951 = vmatpush1.msra.mxu0 %v759
    %952 = vmatprep.subr.mxu0 0.0
    %953 = vmatpush1.msra.mxu0 %v760
    %954 = vmatprep.subr.mxu0 0.0
    %955 = vmatpush1.msra.mxu0 %v761
    %956 = vmatprep.subr.mxu0 0.0
    %957 = vmatpush1.msra.mxu0 %v762
    %958 = vmatprep.subr.mxu0 0.0
    %959 = vmatpush1.msra.mxu0 %v763
    %960 = vmatprep.subr.mxu0 0.0
    %961 = vmatpush1.msra.mxu0 %v764
    %962 = vmatprep.mubr.f32.mxu0 %v676
    %963 = vmatmul.mubr.f32.gmra.mrb[0].mxu0 %v675
    %v964 = vpop.f32.mrb[0].mxu0
    %v965 = vadd.f32 %v880, %v964
    %v966 = vpop.f32.mrb[0].mxu0
    %967 = vmatprep.mubr.f32.mxu0 %v683
    %968 = vmatmul.mubr.f32.gmra.mrb[0].mxu0 %v682
    %v969 = vpop.f32.mrb[0].mxu0
    %v970 = vadd.f32 %v885, %v969
    %v971 = vpop.f32.mrb[0].mxu0
    %972 = vmatprep.mubr.f32.mxu0 %v690
    %973 = vmatmul.mubr.f32.gmra.mrb[0].mxu0 %v689
    %v974 = vpop.f32.mrb[0].mxu0
    %v975 = vadd.f32 %v890, %v974
    %v976 = vpop.f32.mrb[0].mxu0
    %977 = vmatprep.mubr.f32.mxu0 %v697
    %978 = vmatmul.mubr.f32.gmra.mrb[0].mxu0 %v696
    %v979 = vpop.f32.mrb[0].mxu0
    %v980 = vadd.f32 %v895, %v979
    %v981 = vpop.f32.mrb[0].mxu0
    %982 = vdwg.mxu0
    %983 = vmatprep.subr.mxu0 0.0
    %984 = vmatpush1.msra.mxu0 %v765
    %985 = vmatprep.subr.mxu0 0.0
    %986 = vmatpush1.msra.mxu0 %v766
    %987 = vmatprep.subr.mxu0 0.0
    %988 = vmatpush1.msra.mxu0 %v767
    %989 = vmatprep.subr.mxu0 0.0
    %990 = vmatpush1.msra.mxu0 %v768
    %991 = vmatprep.subr.mxu0 0.0
    %992 = vmatpush1.msra.mxu0 %v769
    %993 = vmatprep.subr.mxu0 0.0
    %994 = vmatpush1.msra.mxu0 %v770
    %995 = vmatprep.subr.mxu0 0.0
    %996 = vmatpush1.msra.mxu0 %v771
    %997 = vmatprep.subr.mxu0 0.0
    %998 = vmatpush1.msra.mxu0 %v772
    %999 = vmatprep.subr.mxu0 0.0
    %1000 = vmatpush1.msra.mxu0 %v773
    %1001 = vmatprep.subr.mxu0 0.0
    %1002 = vmatpush1.msra.mxu0 %v774
    %1003 = vmatprep.subr.mxu0 0.0
    %1004 = vmatpush1.msra.mxu0 %v775
    %1005 = vmatprep.subr.mxu0 0.0
    %1006 = vmatpush1.msra.mxu0 %v776
    %1007 = vmatprep.subr.mxu0 0.0
    %1008 = vmatpush1.msra.mxu0 %v777
    %1009 = vmatprep.subr.mxu0 0.0
    %1010 = vmatpush1.msra.mxu0 %v778
    %1011 = vmatprep.subr.mxu0 0.0
    %1012 = vmatpush1.msra.mxu0 %v779
    %1013 = vmatprep.subr.mxu0 0.0
    %1014 = vmatpush1.msra.mxu0 %v780
    %1015 = vmatprep.subr.mxu0 0.0
    %1016 = vmatpush1.msra.mxu0 %v781
    %1017 = vmatprep.subr.mxu0 0.0
    %1018 = vmatpush1.msra.mxu0 %v782
    %1019 = vmatprep.subr.mxu0 0.0
    %1020 = vmatpush1.msra.mxu0 %v783
    %1021 = vmatprep.subr.mxu0 0.0
    %1022 = vmatpush1.msra.mxu0 %v784
    %1023 = vmatprep.subr.mxu0 0.0
    %1024 = vmatpush1.msra.mxu0 %v785
    %1025 = vmatprep.subr.mxu0 0.0
    %1026 = vmatpush1.msra.mxu0 %v786
    %1027 = vmatprep.subr.mxu0 0.0
    %1028 = vmatpush1.msra.mxu0 %v787
    %1029 = vmatprep.subr.mxu0 0.0
    %1030 = vmatpush1.msra.mxu0 %v788
    %1031 = vmatprep.subr.mxu0 0.0
    %1032 = vmatpush1.msra.mxu0 %v789
    %1033 = vmatprep.subr.mxu0 0.0
    %1034 = vmatpush1.msra.mxu0 %v790
    %1035 = vmatprep.subr.mxu0 0.0
    %1036 = vmatpush1.msra.mxu0 %v791
    %1037 = vmatprep.subr.mxu0 0.0
    %1038 = vmatpush1.msra.mxu0 %v792
    %1039 = vmatprep.subr.mxu0 0.0
    %1040 = vmatpush1.msra.mxu0 %v793
    %1041 = vmatprep.subr.mxu0 0.0
    %1042 = vmatpush1.msra.mxu0 %v794
    %1043 = vmatprep.subr.mxu0 0.0
    %1044 = vmatpush1.msra.mxu0 %v795
    %1045 = vmatprep.subr.mxu0 0.0
    %1046 = vmatpush1.msra.mxu0 %v796
    %1047 = vmatprep.mubr.f32.mxu0 %v678
    %1048 = vmatmul.mubr.f32.gmra.mrb[0].mxu0 %v677
    %v1049 = vpop.f32.mrb[0].mxu0
    %v1050 = vadd.f32 %v965, %v1049
    %v1051 = vpop.f32.mrb[0].mxu0
    %1052 = vmatprep.mubr.f32.mxu0 %v685
    %1053 = vmatmul.mubr.f32.gmra.mrb[0].mxu0 %v684
    %v1054 = vpop.f32.mrb[0].mxu0
    %v1055 = vadd.f32 %v970, %v1054
    %v1056 = vpop.f32.mrb[0].mxu0
    %1057 = vmatprep.mubr.f32.mxu0 %v692
    %1058 = vmatmul.mubr.f32.gmra.mrb[0].mxu0 %v691
    %v1059 = vpop.f32.mrb[0].mxu0
    %v1060 = vadd.f32 %v975, %v1059
    %v1061 = vpop.f32.mrb[0].mxu0
    %1062 = vmatprep.mubr.f32.mxu0 %v699
    %1063 = vmatmul.mubr.f32.gmra.mrb[0].mxu0 %v698
    %v1064 = vpop.f32.mrb[0].mxu0
    %v1065 = vadd.f32 %v980, %v1064
    %v1066 = vpop.f32.mrb[0].mxu0
    %1067 = vdwg.mxu0
    %1068 = vmatprep.subr.mxu0 0.0
    %1069 = vmatpush1.msra.mxu0 %v797
    %1070 = vmatprep.subr.mxu0 0.0
    %1071 = vmatpush1.msra.mxu0 %v798
    %1072 = vmatprep.subr.mxu0 0.0
    %1073 = vmatpush1.msra.mxu0 %v799
    %1074 = vmatprep.subr.mxu0 0.0
    %1075 = vmatpush1.msra.mxu0 %v800
    %1076 = vmatprep.subr.mxu0 0.0
    %1077 = vmatpush1.msra.mxu0 %v801
    %1078 = vmatprep.subr.mxu0 0.0
    %1079 = vmatpush1.msra.mxu0 %v802
    %1080 = vmatprep.subr.mxu0 0.0
    %1081 = vmatpush1.msra.mxu0 %v803
    %1082 = vmatprep.subr.mxu0 0.0
    %1083 = vmatpush1.msra.mxu0 %v804
    %1084 = vmatprep.subr.mxu0 0.0
    %1085 = vmatpush1.msra.mxu0 %v805
    %1086 = vmatprep.subr.mxu0 0.0
    %1087 = vmatpush1.msra.mxu0 %v806
    %1088 = vmatprep.subr.mxu0 0.0
    %1089 = vmatpush1.msra.mxu0 %v807
    %1090 = vmatprep.subr.mxu0 0.0
    %1091 = vmatpush1.msra.mxu0 %v808
    %1092 = vmatprep.subr.mxu0 0.0
    %1093 = vmatpush1.msra.mxu0 %v809
    %1094 = vmatprep.subr.mxu0 0.0
    %1095 = vmatpush1.msra.mxu0 %v810
    %1096 = vmatprep.subr.mxu0 0.0
    %1097 = vmatpush1.msra.mxu0 %v811
    %1098 = vmatprep.subr.mxu0 0.0
    %1099 = vmatpush1.msra.mxu0 %v812
    %1100 = vmatprep.subr.mxu0 0.0
    %1101 = vmatpush1.msra.mxu0 0.0
    %1102 = vmatprep.subr.mxu0 0.0
    %1103 = vmatpush1.msra.mxu0 0.0
    %1104 = vmatprep.subr.mxu0 0.0
    %1105 = vmatpush1.msra.mxu0 0.0
    %1106 = vmatprep.subr.mxu0 0.0
    %1107 = vmatpush1.msra.mxu0 0.0
    %1108 = vmatprep.subr.mxu0 0.0
    %1109 = vmatpush1.msra.mxu0 0.0
    %1110 = vmatprep.subr.mxu0 0.0
    %1111 = vmatpush1.msra.mxu0 0.0
    %1112 = vmatprep.subr.mxu0 0.0
    %1113 = vmatpush1.msra.mxu0 0.0
    %1114 = vmatprep.subr.mxu0 0.0
    %1115 = vmatpush1.msra.mxu0 0.0
    %1116 = vmatprep.subr.mxu0 0.0
    %1117 = vmatpush1.msra.mxu0 0.0
    %1118 = vmatprep.subr.mxu0 0.0
    %1119 = vmatpush1.msra.mxu0 0.0
    %1120 = vmatprep.subr.mxu0 0.0
    %1121 = vmatpush1.msra.mxu0 0.0
    %1122 = vmatprep.subr.mxu0 0.0
    %1123 = vmatpush1.msra.mxu0 0.0
    %1124 = vmatprep.subr.mxu0 0.0
    %1125 = vmatpush1.msra.mxu0 0.0
    %1126 = vmatprep.subr.mxu0 0.0
    %1127 = vmatpush1.msra.mxu0 0.0
    %1128 = vmatprep.subr.mxu0 0.0
    %1129 = vmatpush1.msra.mxu0 0.0
    %1130 = vmatprep.subr.mxu0 0.0
    %1131 = vmatpush1.msra.mxu0 0.0
    %1132 = vmatprep.mubr.f32.mxu0 0.0
    %1133 = vmatmul.mubr.f32.gmra.mrb[0].mxu0 %v679
    %v1134 = vpop.f32.mrb[0].mxu0
    %v1135 = vadd.f32 %v1050, %v1134
    %v1136 = vpop.f32.mrb[0].mxu0
    %1137 = vmatprep.mubr.f32.mxu0 0.0
    %1138 = vmatmul.mubr.f32.gmra.mrb[0].mxu0 %v686
    %v1139 = vpop.f32.mrb[0].mxu0
    %v1140 = vadd.f32 %v1055, %v1139
    %v1141 = vpop.f32.mrb[0].mxu0
    %1142 = vmatprep.mubr.f32.mxu0 0.0
    %1143 = vmatmul.mubr.f32.gmra.mrb[0].mxu0 %v693
    %v1144 = vpop.f32.mrb[0].mxu0
    %v1145 = vadd.f32 %v1060, %v1144
    %v1146 = vpop.f32.mrb[0].mxu0
    %1147 = vmatprep.mubr.f32.mxu0 0.0
    %1148 = vmatmul.mubr.f32.gmra.mrb[0].mxu0 %v700
    %v1149 = vpop.f32.mrb[0].mxu0
    %v1150 = vadd.f32 %v1065, %v1149
    %v1151 = vpop.f32.mrb[0].mxu0
    %1152 = vdwg.mxu0
    %v1153 = vld [vmem:[#allocation8] sm:$0xff]
    %v1154 = vld [vmem:[#allocation8 + $0x8] sm:$0xff]
    %v1155 = vld [vmem:[#allocation8 + $0x10] sm:$0xff]
    %v1156 = vld [vmem:[#allocation8 + $0x18] sm:$0xff]
    %v1157 = vld [vmem:[#allocation8 + $0x20] sm:$0xff]
    %v1158 = vld [vmem:[#allocation8 + $0x28] sm:$0xff]
    %v1159 = vld [vmem:[#allocation8 + $0x30] sm:$0xff]
    %v1160 = vld [vmem:[#allocation8 + $0x38] sm:$0xff]
    %v1161 = vld [vmem:[#allocation8 + $0x40] sm:$0xff]
    %v1162 = vld [vmem:[#allocation8 + $0x48] sm:$0xff]
    %v1163 = vld [vmem:[#allocation8 + $0x50] sm:$0xff]
    %v1164 = vld [vmem:[#allocation8 + $0x58] sm:$0xff]
    %v1165 = vld [vmem:[#allocation8 + $0x60] sm:$0xff]
    %v1166 = vld [vmem:[#allocation8 + $0x68] sm:$0xff]
    %v1167 = vld [vmem:[#allocation8 + $0x70] sm:$0xff]
    %v1168 = vld [vmem:[#allocation8 + $0x78] sm:$0xff]
    %s1169 = scalar_lea.vmem [#allocation8], 128
    %v1170 = vld [vmem:[%s1169] sm:$0xff]
    %v1171 = vld [vmem:[%s1169 + $0x8] sm:$0xff]
    %v1172 = vld [vmem:[%s1169 + $0x10] sm:$0xff]
    %v1173 = vld [vmem:[%s1169 + $0x18] sm:$0xff]
    %v1174 = vld [vmem:[%s1169 + $0x20] sm:$0xff]
    %v1175 = vld [vmem:[%s1169 + $0x28] sm:$0xff]
    %v1176 = vld [vmem:[%s1169 + $0x30] sm:$0xff]
    %v1177 = vld [vmem:[%s1169 + $0x38] sm:$0xff]
    %v1178 = vld [vmem:[%s1169 + $0x40] sm:$0xff]
    %v1179 = vld [vmem:[%s1169 + $0x48] sm:$0xff]
    %v1180 = vld [vmem:[%s1169 + $0x50] sm:$0xff]
    %v1181 = vld [vmem:[%s1169 + $0x58] sm:$0xff]
    %v1182 = vld [vmem:[%s1169 + $0x60] sm:$0xff]
    %v1183 = vld [vmem:[%s1169 + $0x68] sm:$0xff]
    %v1184 = vld [vmem:[%s1169 + $0x70] sm:$0xff]
    %v1185 = vld [vmem:[%s1169 + $0x78] sm:$0xff]
    %1186 = vmatprep.subr.mxu0 0.0
    %1187 = vmatpush1.msra.mxu0 %v1170
    %1188 = vmatprep.subr.mxu0 0.0
    %1189 = vmatpush1.msra.mxu0 %v1171
    %1190 = vmatprep.subr.mxu0 0.0
    %1191 = vmatpush1.msra.mxu0 %v1172
    %1192 = vmatprep.subr.mxu0 0.0
    %1193 = vmatpush1.msra.mxu0 %v1173
    %1194 = vmatprep.subr.mxu0 0.0
    %1195 = vmatpush1.msra.mxu0 %v1174
    %1196 = vmatprep.subr.mxu0 0.0
    %1197 = vmatpush1.msra.mxu0 %v1175
    %1198 = vmatprep.subr.mxu0 0.0
    %1199 = vmatpush1.msra.mxu0 %v1176
    %1200 = vmatprep.subr.mxu0 0.0
    %1201 = vmatpush1.msra.mxu0 %v1177
    %1202 = vmatprep.subr.mxu0 0.0
    %1203 = vmatpush1.msra.mxu0 %v1178
    %1204 = vmatprep.subr.mxu0 0.0
    %1205 = vmatpush1.msra.mxu0 %v1179
    %1206 = vmatprep.subr.mxu0 0.0
    %1207 = vmatpush1.msra.mxu0 %v1180
    %1208 = vmatprep.subr.mxu0 0.0
    %1209 = vmatpush1.msra.mxu0 %v1181
    %1210 = vmatprep.subr.mxu0 0.0
    %1211 = vmatpush1.msra.mxu0 %v1182
    %1212 = vmatprep.subr.mxu0 0.0
    %1213 = vmatpush1.msra.mxu0 %v1183
    %1214 = vmatprep.subr.mxu0 0.0
    %1215 = vmatpush1.msra.mxu0 %v1184
    %1216 = vmatprep.subr.mxu0 0.0
    %1217 = vmatpush1.msra.mxu0 %v1185
    %1218 = vmatprep.subr.mxu0 0.0
    %1219 = vmatpush1.msra.mxu0 0.0
    %1220 = vmatprep.subr.mxu0 0.0
    %1221 = vmatpush1.msra.mxu0 0.0
    %1222 = vmatprep.subr.mxu0 0.0
    %1223 = vmatpush1.msra.mxu0 0.0
    %1224 = vmatprep.subr.mxu0 0.0
    %1225 = vmatpush1.msra.mxu0 0.0
    %1226 = vmatprep.subr.mxu0 0.0
    %1227 = vmatpush1.msra.mxu0 0.0
    %1228 = vmatprep.subr.mxu0 0.0
    %1229 = vmatpush1.msra.mxu0 0.0
    %1230 = vmatprep.subr.mxu0 0.0
    %1231 = vmatpush1.msra.mxu0 0.0
    %1232 = vmatprep.subr.mxu0 0.0
    %1233 = vmatpush1.msra.mxu0 0.0
    %1234 = vmatprep.subr.mxu0 0.0
    %1235 = vmatpush1.msra.mxu0 0.0
    %1236 = vmatprep.subr.mxu0 0.0
    %1237 = vmatpush1.msra.mxu0 0.0
    %1238 = vmatprep.subr.mxu0 0.0
    %1239 = vmatpush1.msra.mxu0 0.0
    %1240 = vmatprep.subr.mxu0 0.0
    %1241 = vmatpush1.msra.mxu0 0.0
    %1242 = vmatprep.subr.mxu0 0.0
    %1243 = vmatpush1.msra.mxu0 0.0
    %1244 = vmatprep.subr.mxu0 0.0
    %1245 = vmatpush1.msra.mxu0 0.0
    %1246 = vmatprep.subr.mxu0 0.0
    %1247 = vmatpush1.msra.mxu0 0.0
    %1248 = vmatprep.subr.mxu0 0.0
    %1249 = vmatpush1.msra.mxu0 0.0
    %1250 = vmatprep.mubr.f32.mxu0 0.0
    %1251 = vmatmul.mubr.f32.gmra.mrb[0].mxu0 %v1140
    %v1252 = vpop.f32.mrb[0].mxu0
    %v1253 = vadd.f32 0.0, %v1252
    %v1254 = vpop.f32.mrb[0].mxu0
    %1255 = vdwg.mxu0
    %1256 = vmatprep.subr.mxu0 0.0
    %1257 = vmatpush1.msra.mxu0 %v1153
    %1258 = vmatprep.subr.mxu0 0.0
    %1259 = vmatpush1.msra.mxu0 %v1154
    %1260 = vmatprep.subr.mxu0 0.0
    %1261 = vmatpush1.msra.mxu0 %v1155
    %1262 = vmatprep.subr.mxu0 0.0
    %1263 = vmatpush1.msra.mxu0 %v1156
    %1264 = vmatprep.subr.mxu0 0.0
    %1265 = vmatpush1.msra.mxu0 %v1157
    %1266 = vmatprep.subr.mxu0 0.0
    %1267 = vmatpush1.msra.mxu0 %v1158
    %1268 = vmatprep.subr.mxu0 0.0
    %1269 = vmatpush1.msra.mxu0 %v1159
    %1270 = vmatprep.subr.mxu0 0.0
    %1271 = vmatpush1.msra.mxu0 %v1160
    %1272 = vmatprep.subr.mxu0 0.0
    %1273 = vmatpush1.msra.mxu0 %v1161
    %1274 = vmatprep.subr.mxu0 0.0
    %1275 = vmatpush1.msra.mxu0 %v1162
    %1276 = vmatprep.subr.mxu0 0.0
    %1277 = vmatpush1.msra.mxu0 %v1163
    %1278 = vmatprep.subr.mxu0 0.0
    %1279 = vmatpush1.msra.mxu0 %v1164
    %1280 = vmatprep.subr.mxu0 0.0
    %1281 = vmatpush1.msra.mxu0 %v1165
    %1282 = vmatprep.subr.mxu0 0.0
    %1283 = vmatpush1.msra.mxu0 %v1166
    %1284 = vmatprep.subr.mxu0 0.0
    %1285 = vmatpush1.msra.mxu0 %v1167
    %1286 = vmatprep.subr.mxu0 0.0
    %1287 = vmatpush1.msra.mxu0 %v1168
    %1288 = vmatprep.subr.mxu0 0.0
    %1289 = vmatpush1.msra.mxu0 0.0
    %1290 = vmatprep.subr.mxu0 0.0
    %1291 = vmatpush1.msra.mxu0 0.0
    %1292 = vmatprep.subr.mxu0 0.0
    %1293 = vmatpush1.msra.mxu0 0.0
    %1294 = vmatprep.subr.mxu0 0.0
    %1295 = vmatpush1.msra.mxu0 0.0
    %1296 = vmatprep.subr.mxu0 0.0
    %1297 = vmatpush1.msra.mxu0 0.0
    %1298 = vmatprep.subr.mxu0 0.0
    %1299 = vmatpush1.msra.mxu0 0.0
    %1300 = vmatprep.subr.mxu0 0.0
    %1301 = vmatpush1.msra.mxu0 0.0
    %1302 = vmatprep.subr.mxu0 0.0
    %1303 = vmatpush1.msra.mxu0 0.0
    %1304 = vmatprep.subr.mxu0 0.0
    %1305 = vmatpush1.msra.mxu0 0.0
    %1306 = vmatprep.subr.mxu0 0.0
    %1307 = vmatpush1.msra.mxu0 0.0
    %1308 = vmatprep.subr.mxu0 0.0
    %1309 = vmatpush1.msra.mxu0 0.0
    %1310 = vmatprep.subr.mxu0 0.0
    %1311 = vmatpush1.msra.mxu0 0.0
    %1312 = vmatprep.subr.mxu0 0.0
    %1313 = vmatpush1.msra.mxu0 0.0
    %1314 = vmatprep.subr.mxu0 0.0
    %1315 = vmatpush1.msra.mxu0 0.0
    %1316 = vmatprep.subr.mxu0 0.0
    %1317 = vmatpush1.msra.mxu0 0.0
    %1318 = vmatprep.subr.mxu0 0.0
    %1319 = vmatpush1.msra.mxu0 0.0
    %1320 = vmatprep.mubr.f32.mxu0 0.0
    %1321 = vmatmul.mubr.f32.gmra.mrb[0].mxu0 %v1135
    %v1322 = vpop.f32.mrb[0].mxu0
    %v1323 = vadd.f32 %v1253, %v1322
    %v1324 = vpop.f32.mrb[0].mxu0
    %1325 = vdwg.mxu0
    %s1326 = scalar_lea.vmem [#allocation8], 256
    %v1327 = vld [vmem:[%s1326] sm:$0xff]
    %v1328 = vld [vmem:[%s1326 + $0x8] sm:$0xff]
    %v1329 = vld [vmem:[%s1326 + $0x10] sm:$0xff]
    %v1330 = vld [vmem:[%s1326 + $0x18] sm:$0xff]
    %v1331 = vld [vmem:[%s1326 + $0x20] sm:$0xff]
    %v1332 = vld [vmem:[%s1326 + $0x28] sm:$0xff]
    %v1333 = vld [vmem:[%s1326 + $0x30] sm:$0xff]
    %v1334 = vld [vmem:[%s1326 + $0x38] sm:$0xff]
    %v1335 = vld [vmem:[%s1326 + $0x40] sm:$0xff]
    %v1336 = vld [vmem:[%s1326 + $0x48] sm:$0xff]
    %v1337 = vld [vmem:[%s1326 + $0x50] sm:$0xff]
    %v1338 = vld [vmem:[%s1326 + $0x58] sm:$0xff]
    %v1339 = vld [vmem:[%s1326 + $0x60] sm:$0xff]
    %v1340 = vld [vmem:[%s1326 + $0x68] sm:$0xff]
    %v1341 = vld [vmem:[%s1326 + $0x70] sm:$0xff]
    %v1342 = vld [vmem:[%s1326 + $0x78] sm:$0xff]
    %1343 = vmatprep.subr.mxu0 0.0
    %1344 = vmatpush1.msra.mxu0 %v1327
    %1345 = vmatprep.subr.mxu0 0.0
    %1346 = vmatpush1.msra.mxu0 %v1328
    %1347 = vmatprep.subr.mxu0 0.0
    %1348 = vmatpush1.msra.mxu0 %v1329
    %1349 = vmatprep.subr.mxu0 0.0
    %1350 = vmatpush1.msra.mxu0 %v1330
    %1351 = vmatprep.subr.mxu0 0.0
    %1352 = vmatpush1.msra.mxu0 %v1331
    %1353 = vmatprep.subr.mxu0 0.0
    %1354 = vmatpush1.msra.mxu0 %v1332
    %1355 = vmatprep.subr.mxu0 0.0
    %1356 = vmatpush1.msra.mxu0 %v1333
    %1357 = vmatprep.subr.mxu0 0.0
    %1358 = vmatpush1.msra.mxu0 %v1334
    %1359 = vmatprep.subr.mxu0 0.0
    %1360 = vmatpush1.msra.mxu0 %v1335
    %1361 = vmatprep.subr.mxu0 0.0
    %1362 = vmatpush1.msra.mxu0 %v1336
    %1363 = vmatprep.subr.mxu0 0.0
    %1364 = vmatpush1.msra.mxu0 %v1337
    %1365 = vmatprep.subr.mxu0 0.0
    %1366 = vmatpush1.msra.mxu0 %v1338
    %1367 = vmatprep.subr.mxu0 0.0
    %1368 = vmatpush1.msra.mxu0 %v1339
    %1369 = vmatprep.subr.mxu0 0.0
    %1370 = vmatpush1.msra.mxu0 %v1340
    %1371 = vmatprep.subr.mxu0 0.0
    %1372 = vmatpush1.msra.mxu0 %v1341
    %1373 = vmatprep.subr.mxu0 0.0
    %1374 = vmatpush1.msra.mxu0 %v1342
    %1375 = vmatprep.subr.mxu0 0.0
    %1376 = vmatpush1.msra.mxu0 0.0
    %1377 = vmatprep.subr.mxu0 0.0
    %1378 = vmatpush1.msra.mxu0 0.0
    %1379 = vmatprep.subr.mxu0 0.0
    %1380 = vmatpush1.msra.mxu0 0.0
    %1381 = vmatprep.subr.mxu0 0.0
    %1382 = vmatpush1.msra.mxu0 0.0
    %1383 = vmatprep.subr.mxu0 0.0
    %1384 = vmatpush1.msra.mxu0 0.0
    %1385 = vmatprep.subr.mxu0 0.0
    %1386 = vmatpush1.msra.mxu0 0.0
    %1387 = vmatprep.subr.mxu0 0.0
    %1388 = vmatpush1.msra.mxu0 0.0
    %1389 = vmatprep.subr.mxu0 0.0
    %1390 = vmatpush1.msra.mxu0 0.0
    %1391 = vmatprep.subr.mxu0 0.0
    %1392 = vmatpush1.msra.mxu0 0.0
    %1393 = vmatprep.subr.mxu0 0.0
    %1394 = vmatpush1.msra.mxu0 0.0
    %1395 = vmatprep.subr.mxu0 0.0
    %1396 = vmatpush1.msra.mxu0 0.0
    %1397 = vmatprep.subr.mxu0 0.0
    %1398 = vmatpush1.msra.mxu0 0.0
    %1399 = vmatprep.subr.mxu0 0.0
    %1400 = vmatpush1.msra.mxu0 0.0
    %1401 = vmatprep.subr.mxu0 0.0
    %1402 = vmatpush1.msra.mxu0 0.0
    %1403 = vmatprep.subr.mxu0 0.0
    %1404 = vmatpush1.msra.mxu0 0.0
    %1405 = vmatprep.subr.mxu0 0.0
    %1406 = vmatpush1.msra.mxu0 0.0
    %1407 = vmatprep.mubr.f32.mxu0 0.0
    %1408 = vmatmul.mubr.f32.gmra.mrb[0].mxu0 %v1145
    %v1409 = vpop.f32.mrb[0].mxu0
    %v1410 = vadd.f32 0.0, %v1409
    %v1411 = vpop.f32.mrb[0].mxu0
    %1412 = vdwg.mxu0
    %v1413 = vadd.f32 %v1323, %v1410
    %s1414 = scalar_lea.vmem [#allocation8], 384
    %v1415 = vld [vmem:[%s1414] sm:$0xff]
    %v1416 = vld [vmem:[%s1414 + $0x8] sm:$0xff]
    %v1417 = vld [vmem:[%s1414 + $0x10] sm:$0xff]
    %v1418 = vld [vmem:[%s1414 + $0x18] sm:$0xff]
    %v1419 = vld [vmem:[%s1414 + $0x20] sm:$0xff]
    %v1420 = vld [vmem:[%s1414 + $0x28] sm:$0xff]
    %v1421 = vld [vmem:[%s1414 + $0x30] sm:$0xff]
    %v1422 = vld [vmem:[%s1414 + $0x38] sm:$0xff]
    %v1423 = vld [vmem:[%s1414 + $0x40] sm:$0xff]
    %v1424 = vld [vmem:[%s1414 + $0x48] sm:$0xff]
    %v1425 = vld [vmem:[%s1414 + $0x50] sm:$0xff]
    %v1426 = vld [vmem:[%s1414 + $0x58] sm:$0xff]
    %v1427 = vld [vmem:[%s1414 + $0x60] sm:$0xff]
    %v1428 = vld [vmem:[%s1414 + $0x68] sm:$0xff]
    %v1429 = vld [vmem:[%s1414 + $0x70] sm:$0xff]
    %v1430 = vld [vmem:[%s1414 + $0x78] sm:$0xff]
    %1431 = vmatprep.subr.mxu0 0.0
    %1432 = vmatpush1.msra.mxu0 %v1415
    %1433 = vmatprep.subr.mxu0 0.0
    %1434 = vmatpush1.msra.mxu0 %v1416
    %1435 = vmatprep.subr.mxu0 0.0
    %1436 = vmatpush1.msra.mxu0 %v1417
    %1437 = vmatprep.subr.mxu0 0.0
    %1438 = vmatpush1.msra.mxu0 %v1418
    %1439 = vmatprep.subr.mxu0 0.0
    %1440 = vmatpush1.msra.mxu0 %v1419
    %1441 = vmatprep.subr.mxu0 0.0
    %1442 = vmatpush1.msra.mxu0 %v1420
    %1443 = vmatprep.subr.mxu0 0.0
    %1444 = vmatpush1.msra.mxu0 %v1421
    %1445 = vmatprep.subr.mxu0 0.0
    %1446 = vmatpush1.msra.mxu0 %v1422
    %1447 = vmatprep.subr.mxu0 0.0
    %1448 = vmatpush1.msra.mxu0 %v1423
    %1449 = vmatprep.subr.mxu0 0.0
    %1450 = vmatpush1.msra.mxu0 %v1424
    %1451 = vmatprep.subr.mxu0 0.0
    %1452 = vmatpush1.msra.mxu0 %v1425
    %1453 = vmatprep.subr.mxu0 0.0
    %1454 = vmatpush1.msra.mxu0 %v1426
    %1455 = vmatprep.subr.mxu0 0.0
    %1456 = vmatpush1.msra.mxu0 %v1427
    %1457 = vmatprep.subr.mxu0 0.0
    %1458 = vmatpush1.msra.mxu0 %v1428
    %1459 = vmatprep.subr.mxu0 0.0
    %1460 = vmatpush1.msra.mxu0 %v1429
    %1461 = vmatprep.subr.mxu0 0.0
    %1462 = vmatpush1.msra.mxu0 %v1430
    %1463 = vmatprep.subr.mxu0 0.0
    %1464 = vmatpush1.msra.mxu0 0.0
    %1465 = vmatprep.subr.mxu0 0.0
    %1466 = vmatpush1.msra.mxu0 0.0
    %1467 = vmatprep.subr.mxu0 0.0
    %1468 = vmatpush1.msra.mxu0 0.0
    %1469 = vmatprep.subr.mxu0 0.0
    %1470 = vmatpush1.msra.mxu0 0.0
    %1471 = vmatprep.subr.mxu0 0.0
    %1472 = vmatpush1.msra.mxu0 0.0
    %1473 = vmatprep.subr.mxu0 0.0
    %1474 = vmatpush1.msra.mxu0 0.0
    %1475 = vmatprep.subr.mxu0 0.0
    %1476 = vmatpush1.msra.mxu0 0.0
    %1477 = vmatprep.subr.mxu0 0.0
    %1478 = vmatpush1.msra.mxu0 0.0
    %1479 = vmatprep.subr.mxu0 0.0
    %1480 = vmatpush1.msra.mxu0 0.0
    %1481 = vmatprep.subr.mxu0 0.0
    %1482 = vmatpush1.msra.mxu0 0.0
    %1483 = vmatprep.subr.mxu0 0.0
    %1484 = vmatpush1.msra.mxu0 0.0
    %1485 = vmatprep.subr.mxu0 0.0
    %1486 = vmatpush1.msra.mxu0 0.0
    %1487 = vmatprep.subr.mxu0 0.0
    %1488 = vmatpush1.msra.mxu0 0.0
    %1489 = vmatprep.subr.mxu0 0.0
    %1490 = vmatpush1.msra.mxu0 0.0
    %1491 = vmatprep.subr.mxu0 0.0
    %1492 = vmatpush1.msra.mxu0 0.0
    %1493 = vmatprep.subr.mxu0 0.0
    %1494 = vmatpush1.msra.mxu0 0.0
    %1495 = vmatprep.mubr.f32.mxu0 0.0
    %1496 = vmatmul.mubr.f32.gmra.mrb[0].mxu0 %v1150
    %v1497 = vpop.f32.mrb[0].mxu0
    %v1498 = vadd.f32 0.0, %v1497
    %v1499 = vpop.f32.mrb[0].mxu0
    %1500 = vdwg.mxu0
    %v1501 = vadd.f32 %v1413, %v1498
    %v1502 = vld [vmem:[#allocation16 + $0x1] ss:$0 sm:$0xff]
    %v1503 = vadd.f32 %v1501, %v1502
    %vm1504 = vcmp.gt.f32.partialorder %v1503, 0.0
    %v1505 = vmul.f32 %v1503, 0.01
    %v1506 = vsel %vm1504, %v1503, %v1505
    %v1507 = vld [vmem:[#allocation10] sm:$0xff]
    %v1508 = vld [vmem:[#allocation10 + $0x8] sm:$0xff]
    %v1509 = vld [vmem:[#allocation10 + $0x10] sm:$0xff]
    %v1510 = vld [vmem:[#allocation10 + $0x18] sm:$0xff]
    %v1511 = vld [vmem:[#allocation10 + $0x20] sm:$0xff]
    %v1512 = vld [vmem:[#allocation10 + $0x28] sm:$0xff]
    %v1513 = vld [vmem:[#allocation10 + $0x30] sm:$0xff]
    %v1514 = vld [vmem:[#allocation10 + $0x38] sm:$0xff]
    %v1515 = vld [vmem:[#allocation10 + $0x40] sm:$0xff]
    %v1516 = vld [vmem:[#allocation10 + $0x48] sm:$0xff]
    %v1517 = vld [vmem:[#allocation10 + $0x50] sm:$0xff]
    %v1518 = vld [vmem:[#allocation10 + $0x58] sm:$0xff]
    %v1519 = vld [vmem:[#allocation10 + $0x60] sm:$0xff]
    %v1520 = vld [vmem:[#allocation10 + $0x68] sm:$0xff]
    %v1521 = vld [vmem:[#allocation10 + $0x70] sm:$0xff]
    %v1522 = vld [vmem:[#allocation10 + $0x78] sm:$0xff]
    %s1523 = scalar_lea.vmem [#allocation10], 128
    %v1524 = vld [vmem:[%s1523] sm:$0xff]
    %v1525 = vld [vmem:[%s1523 + $0x8] sm:$0xff]
    %v1526 = vld [vmem:[%s1523 + $0x10] sm:$0xff]
    %v1527 = vld [vmem:[%s1523 + $0x18] sm:$0xff]
    %v1528 = vld [vmem:[%s1523 + $0x20] sm:$0xff]
    %v1529 = vld [vmem:[%s1523 + $0x28] sm:$0xff]
    %v1530 = vld [vmem:[%s1523 + $0x30] sm:$0xff]
    %v1531 = vld [vmem:[%s1523 + $0x38] sm:$0xff]
    %v1532 = vld [vmem:[%s1523 + $0x40] sm:$0xff]
    %v1533 = vld [vmem:[%s1523 + $0x48] sm:$0xff]
    %v1534 = vld [vmem:[%s1523 + $0x50] sm:$0xff]
    %v1535 = vld [vmem:[%s1523 + $0x58] sm:$0xff]
    %v1536 = vld [vmem:[%s1523 + $0x60] sm:$0xff]
    %v1537 = vld [vmem:[%s1523 + $0x68] sm:$0xff]
    %v1538 = vld [vmem:[%s1523 + $0x70] sm:$0xff]
    %v1539 = vld [vmem:[%s1523 + $0x78] sm:$0xff]
    %1540 = vmatprep.subr.mxu0 0.0
    %1541 = vmatpush1.msra.mxu0 %v1524
    %1542 = vmatprep.subr.mxu0 0.0
    %1543 = vmatpush1.msra.mxu0 %v1525
    %1544 = vmatprep.subr.mxu0 0.0
    %1545 = vmatpush1.msra.mxu0 %v1526
    %1546 = vmatprep.subr.mxu0 0.0
    %1547 = vmatpush1.msra.mxu0 %v1527
    %1548 = vmatprep.subr.mxu0 0.0
    %1549 = vmatpush1.msra.mxu0 %v1528
    %1550 = vmatprep.subr.mxu0 0.0
    %1551 = vmatpush1.msra.mxu0 %v1529
    %1552 = vmatprep.subr.mxu0 0.0
    %1553 = vmatpush1.msra.mxu0 %v1530
    %1554 = vmatprep.subr.mxu0 0.0
    %1555 = vmatpush1.msra.mxu0 %v1531
    %1556 = vmatprep.subr.mxu0 0.0
    %1557 = vmatpush1.msra.mxu0 %v1532
    %1558 = vmatprep.subr.mxu0 0.0
    %1559 = vmatpush1.msra.mxu0 %v1533
    %1560 = vmatprep.subr.mxu0 0.0
    %1561 = vmatpush1.msra.mxu0 %v1534
    %1562 = vmatprep.subr.mxu0 0.0
    %1563 = vmatpush1.msra.mxu0 %v1535
    %1564 = vmatprep.subr.mxu0 0.0
    %1565 = vmatpush1.msra.mxu0 %v1536
    %1566 = vmatprep.subr.mxu0 0.0
    %1567 = vmatpush1.msra.mxu0 %v1537
    %1568 = vmatprep.subr.mxu0 0.0
    %1569 = vmatpush1.msra.mxu0 %v1538
    %1570 = vmatprep.subr.mxu0 0.0
    %1571 = vmatpush1.msra.mxu0 %v1539
    %1572 = vmatprep.subr.mxu0 0.0
    %1573 = vmatpush1.msra.mxu0 0.0
    %1574 = vmatprep.subr.mxu0 0.0
    %1575 = vmatpush1.msra.mxu0 0.0
    %1576 = vmatprep.subr.mxu0 0.0
    %1577 = vmatpush1.msra.mxu0 0.0
    %1578 = vmatprep.subr.mxu0 0.0
    %1579 = vmatpush1.msra.mxu0 0.0
    %1580 = vmatprep.subr.mxu0 0.0
    %1581 = vmatpush1.msra.mxu0 0.0
    %1582 = vmatprep.subr.mxu0 0.0
    %1583 = vmatpush1.msra.mxu0 0.0
    %1584 = vmatprep.subr.mxu0 0.0
    %1585 = vmatpush1.msra.mxu0 0.0
    %1586 = vmatprep.subr.mxu0 0.0
    %1587 = vmatpush1.msra.mxu0 0.0
    %1588 = vmatprep.subr.mxu0 0.0
    %1589 = vmatpush1.msra.mxu0 0.0
    %1590 = vmatprep.subr.mxu0 0.0
    %1591 = vmatpush1.msra.mxu0 0.0
    %1592 = vmatprep.subr.mxu0 0.0
    %1593 = vmatpush1.msra.mxu0 0.0
    %1594 = vmatprep.subr.mxu0 0.0
    %1595 = vmatpush1.msra.mxu0 0.0
    %1596 = vmatprep.subr.mxu0 0.0
    %1597 = vmatpush1.msra.mxu0 0.0
    %1598 = vmatprep.subr.mxu0 0.0
    %1599 = vmatpush1.msra.mxu0 0.0
    %1600 = vmatprep.subr.mxu0 0.0
    %1601 = vmatpush1.msra.mxu0 0.0
    %1602 = vmatprep.subr.mxu0 0.0
    %1603 = vmatpush1.msra.mxu0 0.0
    %1604 = vmatprep.mubr.f32.mxu0 0.0
    %1605 = vmatmul.mubr.f32.gmra.mrb[0].mxu0 %v1140
    %v1606 = vpop.f32.mrb[0].mxu0
    %v1607 = vadd.f32 0.0, %v1606
    %v1608 = vpop.f32.mrb[0].mxu0
    %1609 = vdwg.mxu0
    %1610 = vmatprep.subr.mxu0 0.0
    %1611 = vmatpush1.msra.mxu0 %v1507
    %1612 = vmatprep.subr.mxu0 0.0
    %1613 = vmatpush1.msra.mxu0 %v1508
    %1614 = vmatprep.subr.mxu0 0.0
    %1615 = vmatpush1.msra.mxu0 %v1509
    %1616 = vmatprep.subr.mxu0 0.0
    %1617 = vmatpush1.msra.mxu0 %v1510
    %1618 = vmatprep.subr.mxu0 0.0
    %1619 = vmatpush1.msra.mxu0 %v1511
    %1620 = vmatprep.subr.mxu0 0.0
    %1621 = vmatpush1.msra.mxu0 %v1512
    %1622 = vmatprep.subr.mxu0 0.0
    %1623 = vmatpush1.msra.mxu0 %v1513
    %1624 = vmatprep.subr.mxu0 0.0
    %1625 = vmatpush1.msra.mxu0 %v1514
    %1626 = vmatprep.subr.mxu0 0.0
    %1627 = vmatpush1.msra.mxu0 %v1515
    %1628 = vmatprep.subr.mxu0 0.0
    %1629 = vmatpush1.msra.mxu0 %v1516
    %1630 = vmatprep.subr.mxu0 0.0
    %1631 = vmatpush1.msra.mxu0 %v1517
    %1632 = vmatprep.subr.mxu0 0.0
    %1633 = vmatpush1.msra.mxu0 %v1518
    %1634 = vmatprep.subr.mxu0 0.0
    %1635 = vmatpush1.msra.mxu0 %v1519
    %1636 = vmatprep.subr.mxu0 0.0
    %1637 = vmatpush1.msra.mxu0 %v1520
    %1638 = vmatprep.subr.mxu0 0.0
    %1639 = vmatpush1.msra.mxu0 %v1521
    %1640 = vmatprep.subr.mxu0 0.0
    %1641 = vmatpush1.msra.mxu0 %v1522
    %1642 = vmatprep.subr.mxu0 0.0
    %1643 = vmatpush1.msra.mxu0 0.0
    %1644 = vmatprep.subr.mxu0 0.0
    %1645 = vmatpush1.msra.mxu0 0.0
    %1646 = vmatprep.subr.mxu0 0.0
    %1647 = vmatpush1.msra.mxu0 0.0
    %1648 = vmatprep.subr.mxu0 0.0
    %1649 = vmatpush1.msra.mxu0 0.0
    %1650 = vmatprep.subr.mxu0 0.0
    %1651 = vmatpush1.msra.mxu0 0.0
    %1652 = vmatprep.subr.mxu0 0.0
    %1653 = vmatpush1.msra.mxu0 0.0
    %1654 = vmatprep.subr.mxu0 0.0
    %1655 = vmatpush1.msra.mxu0 0.0
    %1656 = vmatprep.subr.mxu0 0.0
    %1657 = vmatpush1.msra.mxu0 0.0
    %1658 = vmatprep.subr.mxu0 0.0
    %1659 = vmatpush1.msra.mxu0 0.0
    %1660 = vmatprep.subr.mxu0 0.0
    %1661 = vmatpush1.msra.mxu0 0.0
    %1662 = vmatprep.subr.mxu0 0.0
    %1663 = vmatpush1.msra.mxu0 0.0
    %1664 = vmatprep.subr.mxu0 0.0
    %1665 = vmatpush1.msra.mxu0 0.0
    %1666 = vmatprep.subr.mxu0 0.0
    %1667 = vmatpush1.msra.mxu0 0.0
    %1668 = vmatprep.subr.mxu0 0.0
    %1669 = vmatpush1.msra.mxu0 0.0
    %1670 = vmatprep.subr.mxu0 0.0
    %1671 = vmatpush1.msra.mxu0 0.0
    %1672 = vmatprep.subr.mxu0 0.0
    %1673 = vmatpush1.msra.mxu0 0.0
    %1674 = vmatprep.mubr.f32.mxu0 0.0
    %1675 = vmatmul.mubr.f32.gmra.mrb[0].mxu0 %v1135
    %v1676 = vpop.f32.mrb[0].mxu0
    %v1677 = vadd.f32 %v1607, %v1676
    %v1678 = vpop.f32.mrb[0].mxu0
    %1679 = vdwg.mxu0
    %v1680 = vld [vmem:[#allocation16 + $0x2] ss:$0 sm:$0xff]
    %v1681 = vadd.f32 %v1677, %v1680
    %vm1682 = vcmp.gt.f32.partialorder %v1681, 0.0
    %v1683 = vmul.f32 %v1681, 0.01
    %v1684 = vsel %vm1682, %v1681, %v1683
    %1685 = vmatprep.subr.mxu0 0.0
    %1686 = vmatpush1.msra.mxu0 %v1524
    %1687 = vmatprep.subr.mxu0 0.0
    %1688 = vmatpush1.msra.mxu0 %v1525
    %1689 = vmatprep.subr.mxu0 0.0
    %1690 = vmatpush1.msra.mxu0 %v1526
    %1691 = vmatprep.subr.mxu0 0.0
    %1692 = vmatpush1.msra.mxu0 %v1527
    %1693 = vmatprep.subr.mxu0 0.0
    %1694 = vmatpush1.msra.mxu0 %v1528
    %1695 = vmatprep.subr.mxu0 0.0
    %1696 = vmatpush1.msra.mxu0 %v1529
    %1697 = vmatprep.subr.mxu0 0.0
    %1698 = vmatpush1.msra.mxu0 %v1530
    %1699 = vmatprep.subr.mxu0 0.0
    %1700 = vmatpush1.msra.mxu0 %v1531
    %1701 = vmatprep.subr.mxu0 0.0
    %1702 = vmatpush1.msra.mxu0 %v1532
    %1703 = vmatprep.subr.mxu0 0.0
    %1704 = vmatpush1.msra.mxu0 %v1533
    %1705 = vmatprep.subr.mxu0 0.0
    %1706 = vmatpush1.msra.mxu0 %v1534
    %1707 = vmatprep.subr.mxu0 0.0
    %1708 = vmatpush1.msra.mxu0 %v1535
    %1709 = vmatprep.subr.mxu0 0.0
    %1710 = vmatpush1.msra.mxu0 %v1536
    %1711 = vmatprep.subr.mxu0 0.0
    %1712 = vmatpush1.msra.mxu0 %v1537
    %1713 = vmatprep.subr.mxu0 0.0
    %1714 = vmatpush1.msra.mxu0 %v1538
    %1715 = vmatprep.subr.mxu0 0.0
    %1716 = vmatpush1.msra.mxu0 %v1539
    %1717 = vmatprep.subr.mxu0 0.0
    %1718 = vmatpush1.msra.mxu0 0.0
    %1719 = vmatprep.subr.mxu0 0.0
    %1720 = vmatpush1.msra.mxu0 0.0
    %1721 = vmatprep.subr.mxu0 0.0
    %1722 = vmatpush1.msra.mxu0 0.0
    %1723 = vmatprep.subr.mxu0 0.0
    %1724 = vmatpush1.msra.mxu0 0.0
    %1725 = vmatprep.subr.mxu0 0.0
    %1726 = vmatpush1.msra.mxu0 0.0
    %1727 = vmatprep.subr.mxu0 0.0
    %1728 = vmatpush1.msra.mxu0 0.0
    %1729 = vmatprep.subr.mxu0 0.0
    %1730 = vmatpush1.msra.mxu0 0.0
    %1731 = vmatprep.subr.mxu0 0.0
    %1732 = vmatpush1.msra.mxu0 0.0
    %1733 = vmatprep.subr.mxu0 0.0
    %1734 = vmatpush1.msra.mxu0 0.0
    %1735 = vmatprep.subr.mxu0 0.0
    %1736 = vmatpush1.msra.mxu0 0.0
    %1737 = vmatprep.subr.mxu0 0.0
    %1738 = vmatpush1.msra.mxu0 0.0
    %1739 = vmatprep.subr.mxu0 0.0
    %1740 = vmatpush1.msra.mxu0 0.0
    %1741 = vmatprep.subr.mxu0 0.0
    %1742 = vmatpush1.msra.mxu0 0.0
    %1743 = vmatprep.subr.mxu0 0.0
    %1744 = vmatpush1.msra.mxu0 0.0
    %1745 = vmatprep.subr.mxu0 0.0
    %1746 = vmatpush1.msra.mxu0 0.0
    %1747 = vmatprep.subr.mxu0 0.0
    %1748 = vmatpush1.msra.mxu0 0.0
    %1749 = vmatprep.mubr.f32.mxu0 0.0
    %1750 = vmatmul.mubr.f32.gmra.mrb[0].mxu0 %v1150
    %v1751 = vpop.f32.mrb[0].mxu0
    %v1752 = vadd.f32 0.0, %v1751
    %v1753 = vpop.f32.mrb[0].mxu0
    %1754 = vdwg.mxu0
    %1755 = vmatprep.subr.mxu0 0.0
    %1756 = vmatpush1.msra.mxu0 %v1507
    %1757 = vmatprep.subr.mxu0 0.0
    %1758 = vmatpush1.msra.mxu0 %v1508
    %1759 = vmatprep.subr.mxu0 0.0
    %1760 = vmatpush1.msra.mxu0 %v1509
    %1761 = vmatprep.subr.mxu0 0.0
    %1762 = vmatpush1.msra.mxu0 %v1510
    %1763 = vmatprep.subr.mxu0 0.0
    %1764 = vmatpush1.msra.mxu0 %v1511
    %1765 = vmatprep.subr.mxu0 0.0
    %1766 = vmatpush1.msra.mxu0 %v1512
    %1767 = vmatprep.subr.mxu0 0.0
    %1768 = vmatpush1.msra.mxu0 %v1513
    %1769 = vmatprep.subr.mxu0 0.0
    %1770 = vmatpush1.msra.mxu0 %v1514
    %1771 = vmatprep.subr.mxu0 0.0
    %1772 = vmatpush1.msra.mxu0 %v1515
    %1773 = vmatprep.subr.mxu0 0.0
    %1774 = vmatpush1.msra.mxu0 %v1516
    %1775 = vmatprep.subr.mxu0 0.0
    %1776 = vmatpush1.msra.mxu0 %v1517
    %1777 = vmatprep.subr.mxu0 0.0
    %1778 = vmatpush1.msra.mxu0 %v1518
    %1779 = vmatprep.subr.mxu0 0.0
    %1780 = vmatpush1.msra.mxu0 %v1519
    %1781 = vmatprep.subr.mxu0 0.0
    %1782 = vmatpush1.msra.mxu0 %v1520
    %1783 = vmatprep.subr.mxu0 0.0
    %1784 = vmatpush1.msra.mxu0 %v1521
    %1785 = vmatprep.subr.mxu0 0.0
    %1786 = vmatpush1.msra.mxu0 %v1522
    %1787 = vmatprep.subr.mxu0 0.0
    %1788 = vmatpush1.msra.mxu0 0.0
    %1789 = vmatprep.subr.mxu0 0.0
    %1790 = vmatpush1.msra.mxu0 0.0
    %1791 = vmatprep.subr.mxu0 0.0
    %1792 = vmatpush1.msra.mxu0 0.0
    %1793 = vmatprep.subr.mxu0 0.0
    %1794 = vmatpush1.msra.mxu0 0.0
    %1795 = vmatprep.subr.mxu0 0.0
    %1796 = vmatpush1.msra.mxu0 0.0
    %1797 = vmatprep.subr.mxu0 0.0
    %1798 = vmatpush1.msra.mxu0 0.0
    %1799 = vmatprep.subr.mxu0 0.0
    %1800 = vmatpush1.msra.mxu0 0.0
    %1801 = vmatprep.subr.mxu0 0.0
    %1802 = vmatpush1.msra.mxu0 0.0
    %1803 = vmatprep.subr.mxu0 0.0
    %1804 = vmatpush1.msra.mxu0 0.0
    %1805 = vmatprep.subr.mxu0 0.0
    %1806 = vmatpush1.msra.mxu0 0.0
    %1807 = vmatprep.subr.mxu0 0.0
    %1808 = vmatpush1.msra.mxu0 0.0
    %1809 = vmatprep.subr.mxu0 0.0
    %1810 = vmatpush1.msra.mxu0 0.0
    %1811 = vmatprep.subr.mxu0 0.0
    %1812 = vmatpush1.msra.mxu0 0.0
    %1813 = vmatprep.subr.mxu0 0.0
    %1814 = vmatpush1.msra.mxu0 0.0
    %1815 = vmatprep.subr.mxu0 0.0
    %1816 = vmatpush1.msra.mxu0 0.0
    %1817 = vmatprep.subr.mxu0 0.0
    %1818 = vmatpush1.msra.mxu0 0.0
    %1819 = vmatprep.mubr.f32.mxu0 0.0
    %1820 = vmatmul.mubr.f32.gmra.mrb[0].mxu0 %v1145
    %v1821 = vpop.f32.mrb[0].mxu0
    %v1822 = vadd.f32 %v1752, %v1821
    %v1823 = vpop.f32.mrb[0].mxu0
    %1824 = vdwg.mxu0
    %v1825 = vadd.f32 %v1822, %v1680
    %vm1826 = vcmp.gt.f32.partialorder %v1825, 0.0
    %v1827 = vmul.f32 %v1825, 0.01
    %v1828 = vsel %vm1826, %v1825, %v1827
    %v1829 = vld [vmem:[#allocation11] sm:$0xff]
    %v1830 = vld [vmem:[#allocation11 + $0x8] sm:$0xff]
    %v1831 = vld [vmem:[#allocation11 + $0x10] sm:$0xff]
    %v1832 = vld [vmem:[#allocation11 + $0x18] sm:$0xff]
    %v1833 = vld [vmem:[#allocation11 + $0x20] sm:$0xff]
    %v1834 = vld [vmem:[#allocation11 + $0x28] sm:$0xff]
    %v1835 = vld [vmem:[#allocation11 + $0x30] sm:$0xff]
    %v1836 = vld [vmem:[#allocation11 + $0x38] sm:$0xff]
    %v1837 = vld [vmem:[#allocation11 + $0x40] sm:$0xff]
    %v1838 = vld [vmem:[#allocation11 + $0x48] sm:$0xff]
    %v1839 = vld [vmem:[#allocation11 + $0x50] sm:$0xff]
    %v1840 = vld [vmem:[#allocation11 + $0x58] sm:$0xff]
    %v1841 = vld [vmem:[#allocation11 + $0x60] sm:$0xff]
    %v1842 = vld [vmem:[#allocation11 + $0x68] sm:$0xff]
    %v1843 = vld [vmem:[#allocation11 + $0x70] sm:$0xff]
    %v1844 = vld [vmem:[#allocation11 + $0x78] sm:$0xff]
    %s1845 = scalar_lea.vmem [#allocation11], 128
    %v1846 = vld [vmem:[%s1845] sm:$0xff]
    %v1847 = vld [vmem:[%s1845 + $0x8] sm:$0xff]
    %v1848 = vld [vmem:[%s1845 + $0x10] sm:$0xff]
    %v1849 = vld [vmem:[%s1845 + $0x18] sm:$0xff]
    %v1850 = vld [vmem:[%s1845 + $0x20] sm:$0xff]
    %v1851 = vld [vmem:[%s1845 + $0x28] sm:$0xff]
    %v1852 = vld [vmem:[%s1845 + $0x30] sm:$0xff]
    %v1853 = vld [vmem:[%s1845 + $0x38] sm:$0xff]
    %v1854 = vld [vmem:[%s1845 + $0x40] sm:$0xff]
    %v1855 = vld [vmem:[%s1845 + $0x48] sm:$0xff]
    %v1856 = vld [vmem:[%s1845 + $0x50] sm:$0xff]
    %v1857 = vld [vmem:[%s1845 + $0x58] sm:$0xff]
    %v1858 = vld [vmem:[%s1845 + $0x60] sm:$0xff]
    %v1859 = vld [vmem:[%s1845 + $0x68] sm:$0xff]
    %v1860 = vld [vmem:[%s1845 + $0x70] sm:$0xff]
    %v1861 = vld [vmem:[%s1845 + $0x78] sm:$0xff]
    %1862 = vmatprep.subr.mxu0 0.0
    %1863 = vmatpush1.msra.mxu0 %v1846
    %1864 = vmatprep.subr.mxu0 0.0
    %1865 = vmatpush1.msra.mxu0 %v1847
    %1866 = vmatprep.subr.mxu0 0.0
    %1867 = vmatpush1.msra.mxu0 %v1848
    %1868 = vmatprep.subr.mxu0 0.0
    %1869 = vmatpush1.msra.mxu0 %v1849
    %1870 = vmatprep.subr.mxu0 0.0
    %1871 = vmatpush1.msra.mxu0 %v1850
    %1872 = vmatprep.subr.mxu0 0.0
    %1873 = vmatpush1.msra.mxu0 %v1851
    %1874 = vmatprep.subr.mxu0 0.0
    %1875 = vmatpush1.msra.mxu0 %v1852
    %1876 = vmatprep.subr.mxu0 0.0
    %1877 = vmatpush1.msra.mxu0 %v1853
    %1878 = vmatprep.subr.mxu0 0.0
    %1879 = vmatpush1.msra.mxu0 %v1854
    %1880 = vmatprep.subr.mxu0 0.0
    %1881 = vmatpush1.msra.mxu0 %v1855
    %1882 = vmatprep.subr.mxu0 0.0
    %1883 = vmatpush1.msra.mxu0 %v1856
    %1884 = vmatprep.subr.mxu0 0.0
    %1885 = vmatpush1.msra.mxu0 %v1857
    %1886 = vmatprep.subr.mxu0 0.0
    %1887 = vmatpush1.msra.mxu0 %v1858
    %1888 = vmatprep.subr.mxu0 0.0
    %1889 = vmatpush1.msra.mxu0 %v1859
    %1890 = vmatprep.subr.mxu0 0.0
    %1891 = vmatpush1.msra.mxu0 %v1860
    %1892 = vmatprep.subr.mxu0 0.0
    %1893 = vmatpush1.msra.mxu0 %v1861
    %1894 = vmatprep.subr.mxu0 0.0
    %1895 = vmatpush1.msra.mxu0 0.0
    %1896 = vmatprep.subr.mxu0 0.0
    %1897 = vmatpush1.msra.mxu0 0.0
    %1898 = vmatprep.subr.mxu0 0.0
    %1899 = vmatpush1.msra.mxu0 0.0
    %1900 = vmatprep.subr.mxu0 0.0
    %1901 = vmatpush1.msra.mxu0 0.0
    %1902 = vmatprep.subr.mxu0 0.0
    %1903 = vmatpush1.msra.mxu0 0.0
    %1904 = vmatprep.subr.mxu0 0.0
    %1905 = vmatpush1.msra.mxu0 0.0
    %1906 = vmatprep.subr.mxu0 0.0
    %1907 = vmatpush1.msra.mxu0 0.0
    %1908 = vmatprep.subr.mxu0 0.0
    %1909 = vmatpush1.msra.mxu0 0.0
    %1910 = vmatprep.subr.mxu0 0.0
    %1911 = vmatpush1.msra.mxu0 0.0
    %1912 = vmatprep.subr.mxu0 0.0
    %1913 = vmatpush1.msra.mxu0 0.0
    %1914 = vmatprep.subr.mxu0 0.0
    %1915 = vmatpush1.msra.mxu0 0.0
    %1916 = vmatprep.subr.mxu0 0.0
    %1917 = vmatpush1.msra.mxu0 0.0
    %1918 = vmatprep.subr.mxu0 0.0
    %1919 = vmatpush1.msra.mxu0 0.0
    %1920 = vmatprep.subr.mxu0 0.0
    %1921 = vmatpush1.msra.mxu0 0.0
    %1922 = vmatprep.subr.mxu0 0.0
    %1923 = vmatpush1.msra.mxu0 0.0
    %1924 = vmatprep.subr.mxu0 0.0
    %1925 = vmatpush1.msra.mxu0 0.0
    %1926 = vmatprep.mubr.f32.mxu0 0.0
    %1927 = vmatmul.mubr.f32.gmra.mrb[0].mxu0 %v1684
    %v1928 = vpop.f32.mrb[0].mxu0
    %v1929 = vadd.f32 0.0, %v1928
    %v1930 = vpop.f32.mrb[0].mxu0
    %1931 = vdwg.mxu0
    %1932 = vmatprep.subr.mxu0 0.0
    %1933 = vmatpush1.msra.mxu0 %v1829
    %1934 = vmatprep.subr.mxu0 0.0
    %1935 = vmatpush1.msra.mxu0 %v1830
    %1936 = vmatprep.subr.mxu0 0.0
    %1937 = vmatpush1.msra.mxu0 %v1831
    %1938 = vmatprep.subr.mxu0 0.0
    %1939 = vmatpush1.msra.mxu0 %v1832
    %1940 = vmatprep.subr.mxu0 0.0
    %1941 = vmatpush1.msra.mxu0 %v1833
    %1942 = vmatprep.subr.mxu0 0.0
    %1943 = vmatpush1.msra.mxu0 %v1834
    %1944 = vmatprep.subr.mxu0 0.0
    %1945 = vmatpush1.msra.mxu0 %v1835
    %1946 = vmatprep.subr.mxu0 0.0
    %1947 = vmatpush1.msra.mxu0 %v1836
    %1948 = vmatprep.subr.mxu0 0.0
    %1949 = vmatpush1.msra.mxu0 %v1837
    %1950 = vmatprep.subr.mxu0 0.0
    %1951 = vmatpush1.msra.mxu0 %v1838
    %1952 = vmatprep.subr.mxu0 0.0
    %1953 = vmatpush1.msra.mxu0 %v1839
    %1954 = vmatprep.subr.mxu0 0.0
    %1955 = vmatpush1.msra.mxu0 %v1840
    %1956 = vmatprep.subr.mxu0 0.0
    %1957 = vmatpush1.msra.mxu0 %v1841
    %1958 = vmatprep.subr.mxu0 0.0
    %1959 = vmatpush1.msra.mxu0 %v1842
    %1960 = vmatprep.subr.mxu0 0.0
    %1961 = vmatpush1.msra.mxu0 %v1843
    %1962 = vmatprep.subr.mxu0 0.0
    %1963 = vmatpush1.msra.mxu0 %v1844
    %1964 = vmatprep.subr.mxu0 0.0
    %1965 = vmatpush1.msra.mxu0 0.0
    %1966 = vmatprep.subr.mxu0 0.0
    %1967 = vmatpush1.msra.mxu0 0.0
    %1968 = vmatprep.subr.mxu0 0.0
    %1969 = vmatpush1.msra.mxu0 0.0
    %1970 = vmatprep.subr.mxu0 0.0
    %1971 = vmatpush1.msra.mxu0 0.0
    %1972 = vmatprep.subr.mxu0 0.0
    %1973 = vmatpush1.msra.mxu0 0.0
    %1974 = vmatprep.subr.mxu0 0.0
    %1975 = vmatpush1.msra.mxu0 0.0
    %1976 = vmatprep.subr.mxu0 0.0
    %1977 = vmatpush1.msra.mxu0 0.0
    %1978 = vmatprep.subr.mxu0 0.0
    %1979 = vmatpush1.msra.mxu0 0.0
    %1980 = vmatprep.subr.mxu0 0.0
    %1981 = vmatpush1.msra.mxu0 0.0
    %1982 = vmatprep.subr.mxu0 0.0
    %1983 = vmatpush1.msra.mxu0 0.0
    %1984 = vmatprep.subr.mxu0 0.0
    %1985 = vmatpush1.msra.mxu0 0.0
    %1986 = vmatprep.subr.mxu0 0.0
    %1987 = vmatpush1.msra.mxu0 0.0
    %1988 = vmatprep.subr.mxu0 0.0
    %1989 = vmatpush1.msra.mxu0 0.0
    %1990 = vmatprep.subr.mxu0 0.0
    %1991 = vmatpush1.msra.mxu0 0.0
    %1992 = vmatprep.subr.mxu0 0.0
    %1993 = vmatpush1.msra.mxu0 0.0
    %1994 = vmatprep.subr.mxu0 0.0
    %1995 = vmatpush1.msra.mxu0 0.0
    %1996 = vmatprep.mubr.f32.mxu0 0.0
    %1997 = vmatmul.mubr.f32.gmra.mrb[0].mxu0 %v1506
    %v1998 = vpop.f32.mrb[0].mxu0
    %v1999 = vadd.f32 %v1929, %v1998
    %v2000 = vpop.f32.mrb[0].mxu0
    %2001 = vdwg.mxu0
    %s2002 = scalar_lea.vmem [#allocation11], 256
    %v2003 = vld [vmem:[%s2002] sm:$0xff]
    %v2004 = vld [vmem:[%s2002 + $0x8] sm:$0xff]
    %v2005 = vld [vmem:[%s2002 + $0x10] sm:$0xff]
    %v2006 = vld [vmem:[%s2002 + $0x18] sm:$0xff]
    %v2007 = vld [vmem:[%s2002 + $0x20] sm:$0xff]
    %v2008 = vld [vmem:[%s2002 + $0x28] sm:$0xff]
    %v2009 = vld [vmem:[%s2002 + $0x30] sm:$0xff]
    %v2010 = vld [vmem:[%s2002 + $0x38] sm:$0xff]
    %v2011 = vld [vmem:[%s2002 + $0x40] sm:$0xff]
    %v2012 = vld [vmem:[%s2002 + $0x48] sm:$0xff]
    %v2013 = vld [vmem:[%s2002 + $0x50] sm:$0xff]
    %v2014 = vld [vmem:[%s2002 + $0x58] sm:$0xff]
    %v2015 = vld [vmem:[%s2002 + $0x60] sm:$0xff]
    %v2016 = vld [vmem:[%s2002 + $0x68] sm:$0xff]
    %v2017 = vld [vmem:[%s2002 + $0x70] sm:$0xff]
    %v2018 = vld [vmem:[%s2002 + $0x78] sm:$0xff]
    %2019 = vmatprep.subr.mxu0 0.0
    %2020 = vmatpush1.msra.mxu0 %v2003
    %2021 = vmatprep.subr.mxu0 0.0
    %2022 = vmatpush1.msra.mxu0 %v2004
    %2023 = vmatprep.subr.mxu0 0.0
    %2024 = vmatpush1.msra.mxu0 %v2005
    %2025 = vmatprep.subr.mxu0 0.0
    %2026 = vmatpush1.msra.mxu0 %v2006
    %2027 = vmatprep.subr.mxu0 0.0
    %2028 = vmatpush1.msra.mxu0 %v2007
    %2029 = vmatprep.subr.mxu0 0.0
    %2030 = vmatpush1.msra.mxu0 %v2008
    %2031 = vmatprep.subr.mxu0 0.0
    %2032 = vmatpush1.msra.mxu0 %v2009
    %2033 = vmatprep.subr.mxu0 0.0
    %2034 = vmatpush1.msra.mxu0 %v2010
    %2035 = vmatprep.subr.mxu0 0.0
    %2036 = vmatpush1.msra.mxu0 %v2011
    %2037 = vmatprep.subr.mxu0 0.0
    %2038 = vmatpush1.msra.mxu0 %v2012
    %2039 = vmatprep.subr.mxu0 0.0
    %2040 = vmatpush1.msra.mxu0 %v2013
    %2041 = vmatprep.subr.mxu0 0.0
    %2042 = vmatpush1.msra.mxu0 %v2014
    %2043 = vmatprep.subr.mxu0 0.0
    %2044 = vmatpush1.msra.mxu0 %v2015
    %2045 = vmatprep.subr.mxu0 0.0
    %2046 = vmatpush1.msra.mxu0 %v2016
    %2047 = vmatprep.subr.mxu0 0.0
    %2048 = vmatpush1.msra.mxu0 %v2017
    %2049 = vmatprep.subr.mxu0 0.0
    %2050 = vmatpush1.msra.mxu0 %v2018
    %2051 = vmatprep.subr.mxu0 0.0
    %2052 = vmatpush1.msra.mxu0 0.0
    %2053 = vmatprep.subr.mxu0 0.0
    %2054 = vmatpush1.msra.mxu0 0.0
    %2055 = vmatprep.subr.mxu0 0.0
    %2056 = vmatpush1.msra.mxu0 0.0
    %2057 = vmatprep.subr.mxu0 0.0
    %2058 = vmatpush1.msra.mxu0 0.0
    %2059 = vmatprep.subr.mxu0 0.0
    %2060 = vmatpush1.msra.mxu0 0.0
    %2061 = vmatprep.subr.mxu0 0.0
    %2062 = vmatpush1.msra.mxu0 0.0
    %2063 = vmatprep.subr.mxu0 0.0
    %2064 = vmatpush1.msra.mxu0 0.0
    %2065 = vmatprep.subr.mxu0 0.0
    %2066 = vmatpush1.msra.mxu0 0.0
    %2067 = vmatprep.subr.mxu0 0.0
    %2068 = vmatpush1.msra.mxu0 0.0
    %2069 = vmatprep.subr.mxu0 0.0
    %2070 = vmatpush1.msra.mxu0 0.0
    %2071 = vmatprep.subr.mxu0 0.0
    %2072 = vmatpush1.msra.mxu0 0.0
    %2073 = vmatprep.subr.mxu0 0.0
    %2074 = vmatpush1.msra.mxu0 0.0
    %2075 = vmatprep.subr.mxu0 0.0
    %2076 = vmatpush1.msra.mxu0 0.0
    %2077 = vmatprep.subr.mxu0 0.0
    %2078 = vmatpush1.msra.mxu0 0.0
    %2079 = vmatprep.subr.mxu0 0.0
    %2080 = vmatpush1.msra.mxu0 0.0
    %2081 = vmatprep.subr.mxu0 0.0
    %2082 = vmatpush1.msra.mxu0 0.0
    %2083 = vmatprep.mubr.f32.mxu0 0.0
    %2084 = vmatmul.mubr.f32.gmra.mrb[0].mxu0 %v1828
    %v2085 = vpop.f32.mrb[0].mxu0
    %v2086 = vadd.f32 0.0, %v2085
    %v2087 = vpop.f32.mrb[0].mxu0
    %2088 = vdwg.mxu0
    %v2089 = vadd.f32 %v1999, %v2086
    %v2090 = vld [vmem:[#allocation16 + $0x3] ss:$0 sm:$0xff]
    %v2091 = vadd.f32 %v2089, %v2090
    %vm2092 = vcmp.gt.f32.partialorder %v2091, 0.0
    %v2093 = vmul.f32 %v2091, 0.01
    %v2094 = vsel %vm2092, %v2091, %v2093
    %v2095 = vld [vmem:[#allocation13] sm:$0xff]
    %v2096 = vld [vmem:[#allocation13 + $0x8] sm:$0xff]
    %v2097 = vld [vmem:[#allocation13 + $0x10] sm:$0xff]
    %v2098 = vld [vmem:[#allocation13 + $0x18] sm:$0xff]
    %v2099 = vld [vmem:[#allocation13 + $0x20] sm:$0xff]
    %v2100 = vld [vmem:[#allocation13 + $0x28] sm:$0xff]
    %v2101 = vld [vmem:[#allocation13 + $0x30] sm:$0xff]
    %v2102 = vld [vmem:[#allocation13 + $0x38] sm:$0xff]
    %v2103 = vld [vmem:[#allocation13 + $0x40] sm:$0xff]
    %v2104 = vld [vmem:[#allocation13 + $0x48] sm:$0xff]
    %v2105 = vld [vmem:[#allocation13 + $0x50] sm:$0xff]
    %v2106 = vld [vmem:[#allocation13 + $0x58] sm:$0xff]
    %v2107 = vld [vmem:[#allocation13 + $0x60] sm:$0xff]
    %v2108 = vld [vmem:[#allocation13 + $0x68] sm:$0xff]
    %v2109 = vld [vmem:[#allocation13 + $0x70] sm:$0xff]
    %v2110 = vld [vmem:[#allocation13 + $0x78] sm:$0xff]
    %v2111 = vld [vmem:[#allocation16 + $0x4] ss:$0 sm:$0xff]
    %2112 = vmatprep.subr.mxu0 0.0
    %2113 = vmatpush1.msra.mxu0 %v2095
    %2114 = vmatprep.subr.mxu0 0.0
    %2115 = vmatpush1.msra.mxu0 %v2096
    %2116 = vmatprep.subr.mxu0 0.0
    %2117 = vmatpush1.msra.mxu0 %v2097
    %2118 = vmatprep.subr.mxu0 0.0
    %2119 = vmatpush1.msra.mxu0 %v2098
    %2120 = vmatprep.subr.mxu0 0.0
    %2121 = vmatpush1.msra.mxu0 %v2099
    %2122 = vmatprep.subr.mxu0 0.0
    %2123 = vmatpush1.msra.mxu0 %v2100
    %2124 = vmatprep.subr.mxu0 0.0
    %2125 = vmatpush1.msra.mxu0 %v2101
    %2126 = vmatprep.subr.mxu0 0.0
    %2127 = vmatpush1.msra.mxu0 %v2102
    %2128 = vmatprep.subr.mxu0 0.0
    %2129 = vmatpush1.msra.mxu0 %v2103
    %2130 = vmatprep.subr.mxu0 0.0
    %2131 = vmatpush1.msra.mxu0 %v2104
    %2132 = vmatprep.subr.mxu0 0.0
    %2133 = vmatpush1.msra.mxu0 %v2105
    %2134 = vmatprep.subr.mxu0 0.0
    %2135 = vmatpush1.msra.mxu0 %v2106
    %2136 = vmatprep.subr.mxu0 0.0
    %2137 = vmatpush1.msra.mxu0 %v2107
    %2138 = vmatprep.subr.mxu0 0.0
    %2139 = vmatpush1.msra.mxu0 %v2108
    %2140 = vmatprep.subr.mxu0 0.0
    %2141 = vmatpush1.msra.mxu0 %v2109
    %2142 = vmatprep.subr.mxu0 0.0
    %2143 = vmatpush1.msra.mxu0 %v2110
    %2144 = vmatprep.subr.mxu0 0.0
    %2145 = vmatpush1.msra.mxu0 0.0
    %2146 = vmatprep.subr.mxu0 0.0
    %2147 = vmatpush1.msra.mxu0 0.0
    %2148 = vmatprep.subr.mxu0 0.0
    %2149 = vmatpush1.msra.mxu0 0.0
    %2150 = vmatprep.subr.mxu0 0.0
    %2151 = vmatpush1.msra.mxu0 0.0
    %2152 = vmatprep.subr.mxu0 0.0
    %2153 = vmatpush1.msra.mxu0 0.0
    %2154 = vmatprep.subr.mxu0 0.0
    %2155 = vmatpush1.msra.mxu0 0.0
    %2156 = vmatprep.subr.mxu0 0.0
    %2157 = vmatpush1.msra.mxu0 0.0
    %2158 = vmatprep.subr.mxu0 0.0
    %2159 = vmatpush1.msra.mxu0 0.0
    %2160 = vmatprep.subr.mxu0 0.0
    %2161 = vmatpush1.msra.mxu0 0.0
    %2162 = vmatprep.subr.mxu0 0.0
    %2163 = vmatpush1.msra.mxu0 0.0
    %2164 = vmatprep.subr.mxu0 0.0
    %2165 = vmatpush1.msra.mxu0 0.0
    %2166 = vmatprep.subr.mxu0 0.0
    %2167 = vmatpush1.msra.mxu0 0.0
    %2168 = vmatprep.subr.mxu0 0.0
    %2169 = vmatpush1.msra.mxu0 0.0
    %2170 = vmatprep.subr.mxu0 0.0
    %2171 = vmatpush1.msra.mxu0 0.0
    %2172 = vmatprep.subr.mxu0 0.0
    %2173 = vmatpush1.msra.mxu0 0.0
    %2174 = vmatprep.subr.mxu0 0.0
    %2175 = vmatpush1.msra.mxu0 0.0
    %2176 = vmatprep.mubr.f32.mxu0 0.0
    %2177 = vmatmul.mubr.f32.gmra.mrb[0].mxu0 %v2094
    %v2178 = vpop.f32.mrb[0].mxu0
    %v2179 = vadd.f32 %v2111, %v2178
    %v2180 = vpop.f32.mrb[0].mxu0
    %2181 = vdwg.mxu0
    %v2182 = vmax.f32 %v2179, 0.0
    %v2183 = vld [vmem:[#allocation14] sm:$0xff]
    %v2184 = vld [vmem:[#allocation14 + $0x8] sm:$0xff]
    %v2185 = vld [vmem:[#allocation14 + $0x10] sm:$0xff]
    %v2186 = vld [vmem:[#allocation14 + $0x18] sm:$0xff]
    %v2187 = vld [vmem:[#allocation14 + $0x20] sm:$0xff]
    %v2188 = vld [vmem:[#allocation14 + $0x28] sm:$0xff]
    %v2189 = vld [vmem:[#allocation14 + $0x30] sm:$0xff]
    %v2190 = vld [vmem:[#allocation14 + $0x38] sm:$0xff]
    %v2191 = vld [vmem:[#allocation14 + $0x40] sm:$0xff]
    %v2192 = vld [vmem:[#allocation14 + $0x48] sm:$0xff]
    %v2193 = vld [vmem:[#allocation14 + $0x50] sm:$0xff]
    %v2194 = vld [vmem:[#allocation14 + $0x58] sm:$0xff]
    %v2195 = vld [vmem:[#allocation14 + $0x60] sm:$0xff]
    %v2196 = vld [vmem:[#allocation14 + $0x68] sm:$0xff]
    %v2197 = vld [vmem:[#allocation14 + $0x70] sm:$0xff]
    %v2198 = vld [vmem:[#allocation14 + $0x78] sm:$0xff]
    %v2199 = vld [vmem:[#allocation16 + $0x5] ss:$0 sm:$0xff]
    %2200 = vmatprep.subr.mxu0 0.0
    %2201 = vmatpush1.msra.mxu0 %v2183
    %2202 = vmatprep.subr.mxu0 0.0
    %2203 = vmatpush1.msra.mxu0 %v2184
    %2204 = vmatprep.subr.mxu0 0.0
    %2205 = vmatpush1.msra.mxu0 %v2185
    %2206 = vmatprep.subr.mxu0 0.0
    %2207 = vmatpush1.msra.mxu0 %v2186
    %2208 = vmatprep.subr.mxu0 0.0
    %2209 = vmatpush1.msra.mxu0 %v2187
    %2210 = vmatprep.subr.mxu0 0.0
    %2211 = vmatpush1.msra.mxu0 %v2188
    %2212 = vmatprep.subr.mxu0 0.0
    %2213 = vmatpush1.msra.mxu0 %v2189
    %2214 = vmatprep.subr.mxu0 0.0
    %2215 = vmatpush1.msra.mxu0 %v2190
    %2216 = vmatprep.subr.mxu0 0.0
    %2217 = vmatpush1.msra.mxu0 %v2191
    %2218 = vmatprep.subr.mxu0 0.0
    %2219 = vmatpush1.msra.mxu0 %v2192
    %2220 = vmatprep.subr.mxu0 0.0
    %2221 = vmatpush1.msra.mxu0 %v2193
    %2222 = vmatprep.subr.mxu0 0.0
    %2223 = vmatpush1.msra.mxu0 %v2194
    %2224 = vmatprep.subr.mxu0 0.0
    %2225 = vmatpush1.msra.mxu0 %v2195
    %2226 = vmatprep.subr.mxu0 0.0
    %2227 = vmatpush1.msra.mxu0 %v2196
    %2228 = vmatprep.subr.mxu0 0.0
    %2229 = vmatpush1.msra.mxu0 %v2197
    %2230 = vmatprep.subr.mxu0 0.0
    %2231 = vmatpush1.msra.mxu0 %v2198
    %2232 = vmatprep.subr.mxu0 0.0
    %2233 = vmatpush1.msra.mxu0 0.0
    %2234 = vmatprep.subr.mxu0 0.0
    %2235 = vmatpush1.msra.mxu0 0.0
    %2236 = vmatprep.subr.mxu0 0.0
    %2237 = vmatpush1.msra.mxu0 0.0
    %2238 = vmatprep.subr.mxu0 0.0
    %2239 = vmatpush1.msra.mxu0 0.0
    %2240 = vmatprep.subr.mxu0 0.0
    %2241 = vmatpush1.msra.mxu0 0.0
    %2242 = vmatprep.subr.mxu0 0.0
    %2243 = vmatpush1.msra.mxu0 0.0
    %2244 = vmatprep.subr.mxu0 0.0
    %2245 = vmatpush1.msra.mxu0 0.0
    %2246 = vmatprep.subr.mxu0 0.0
    %2247 = vmatpush1.msra.mxu0 0.0
    %2248 = vmatprep.subr.mxu0 0.0
    %2249 = vmatpush1.msra.mxu0 0.0
    %2250 = vmatprep.subr.mxu0 0.0
    %2251 = vmatpush1.msra.mxu0 0.0
    %2252 = vmatprep.subr.mxu0 0.0
    %2253 = vmatpush1.msra.mxu0 0.0
    %2254 = vmatprep.subr.mxu0 0.0
    %2255 = vmatpush1.msra.mxu0 0.0
    %2256 = vmatprep.subr.mxu0 0.0
    %2257 = vmatpush1.msra.mxu0 0.0
    %2258 = vmatprep.subr.mxu0 0.0
    %2259 = vmatpush1.msra.mxu0 0.0
    %2260 = vmatprep.subr.mxu0 0.0
    %2261 = vmatpush1.msra.mxu0 0.0
    %2262 = vmatprep.subr.mxu0 0.0
    %2263 = vmatpush1.msra.mxu0 0.0
    %2264 = vmatprep.mubr.f32.mxu0 0.0
    %2265 = vmatmul.mubr.f32.gmra.mrb[0].mxu0 %v2182
    %v2266 = vpop.f32.mrb[0].mxu0
    %v2267 = vadd.f32 %v2199, %v2266
    %v2268 = vpop.f32.mrb[0].mxu0
    %2269 = vdwg.mxu0
    %2270 = vst [vmem:[#allocation17] sm:$0xff] %v2267
    // Predicated region
    $region74: #{tpu_custom_call.1} parent=1 // pred_check
      _
    $region75: #{tpu_custom_call.1} parent=1 // pred_check_branch
      %2272 = sbr.rel (0) target = $region77
    $region76: #{tpu_custom_call.1} parent=1 // pred_region
      %s2274 = ssub.s32 128, 128
      %2275 = vsyncadd [#allocation4], %s2274
      %s2277 = sshll.u32 [#allocation17], 4
      %s2278 = int_to_ptr.vmem [resolvable:$true] %s2277
      %2280 = dma.vmem_to_hbm [thread:$0]  %s2278, 128, %s9, [#allocation4]
    $region77: #{tpu_custom_call.1} parent=1 // pred_fallthru
      _
    // Predicated region
    $region78: #{tpu_custom_call.1} parent=1 // pred_check
      _
    $region79: #{tpu_custom_call.1} parent=1 // pred_check_branch
      %2282 = sbr.rel (0) target = $region81
    $region80: #{tpu_custom_call.1} parent=1 // pred_region
      %2283 = dma.done [#allocation4], 128
    $region81: #{tpu_custom_call.1} parent=1 // pred_fallthru
      _
    %2284 = vsyncpa [#allocation3], 1
    %2285 = vsyncpa [#allocation6], 1
    %2286 = vsyncpa [#allocation9], 1
    %2287 = vsyncpa [#allocation12], 1
    %2288 = vsyncpa [#allocation15], 1
    %2289 = vsyncpa [#allocation4], 1

// kernel: tpu_custom_call.1
$region0: #{tpu_custom_call.1}
  #allocation0 [shape = 'u32[]', space=smem, size = 0x4, offset = 0x4, fixed_abs, tag = 'smem constant byte address 0x4 - core index']
  #allocation1 [shape = 'u32[144,128]{1,0:T(1,128)}', space=vmem, size = 0x12000, scoped, tag = 'internal scratch']
  %s0 = inlined_call_operand.hbm [shape: f32[4,8,64], index: 0, kind: input, shape index: {}]
  %s1 = inlined_call_operand.hbm [shape: f32[64,896], index: 1, kind: input, shape index: {}]
  %s2 = inlined_call_operand.hbm [shape: f32[896,128], index: 2, kind: input, shape index: {}]
  %s3 = inlined_call_operand.hbm [shape: f32[4,128,128], index: 3, kind: input, shape index: {}]
  %s4 = inlined_call_operand.hbm [shape: f32[2,128,128], index: 4, kind: input, shape index: {}]
  %s5 = inlined_call_operand.hbm [shape: f32[3,128,128], index: 5, kind: input, shape index: {}]
  %s6 = inlined_call_operand.hbm [shape: f32[128,128], index: 6, kind: input, shape index: {}]
  %s7 = inlined_call_operand.hbm [shape: f32[128,128], index: 7, kind: input, shape index: {}]
  %s8 = inlined_call_operand.hbm [shape: f32[8,896], index: 8, kind: input, shape index: {}]
  %s9 = inlined_call_operand.hbm [shape: f32[8,128], index: 9, kind: output, shape index: {}]
  %s10 = sld [smem:[#allocation0]]
  $region82: #{tpu_custom_call.1} parent=0
    _
  %s12 = ssub.s32 1, %s10
  %s13 = scalar_select 0, %s12, %s10
  $region1: #{tpu_custom_call.1} parent=0
    #allocation2 [shape = 'u8[16384]{0}', space=vmem, size = 0x4000, scoped, tag = 'input window, operand 0, single buffered']
    #allocation3 [shape = 's32[1]{0}', space=sflag, size = 0x4, scoped, tag = 'scoped memory for tpu_custom_call.1']
    #allocation4 [shape = 's32[1]{0}', space=sflag, size = 0x4, scoped, tag = 'scoped memory for tpu_custom_call.1']
    #allocation5 [shape = 'u8[229376]{0}', space=vmem, size = 0x38000, scoped, tag = 'input window, operand 1, single buffered']
    #allocation6 [shape = 's32[1]{0}', space=sflag, size = 0x4, scoped, tag = 'scoped memory for tpu_custom_call.1']
    #allocation7 [shape = 'u8[458752]{0}', space=vmem, size = 0x70000, scoped, tag = 'input window, operand 2, single buffered']
    #allocation8 [shape = 'u8[262144]{0}', space=vmem, size = 0x40000, scoped, tag = 'input window, operand 3, single buffered']
    #allocation9 [shape = 's32[1]{0}', space=sflag, size = 0x4, scoped, tag = 'scoped memory for tpu_custom_call.1']
    #allocation10 [shape = 'u8[131072]{0}', space=vmem, size = 0x20000, scoped, tag = 'input window, operand 4, single buffered']
    #allocation11 [shape = 'u8[196608]{0}', space=vmem, size = 0x30000, scoped, tag = 'input window, operand 5, single buffered']
    #allocation12 [shape = 's32[1]{0}', space=sflag, size = 0x4, scoped, tag = 'scoped memory for tpu_custom_call.1']
    #allocation13 [shape = 'u8[65536]{0}', space=vmem, size = 0x10000, scoped, tag = 'input window, operand 6, single buffered']
    #allocation14 [shape = 'u8[65536]{0}', space=vmem, size = 0x10000, scoped, tag = 'input window, operand 7, single buffered']
    #allocation15 [shape = 's32[1]{0}', space=sflag, size = 0x4, scoped, tag = 'scoped memory for tpu_custom_call.1']
    #allocation16 [shape = 'u8[28672]{0}', space=vmem, size = 0x7000, scoped, tag = 'input window, operand 8, single buffered']
    #allocation17 [shape = 'u8[4096]{0}', space=vmem, size = 0x1000, scoped, tag = 'output window, operand 0, single buffered']
    %14 = vsyncpa [#allocation3], 0
    %15 = vsyncpa [#allocation6], 0
    %16 = vsyncpa [#allocation9], 0
    %17 = vsyncpa [#allocation12], 0
    %18 = vsyncpa [#allocation15], 0
    %19 = vsyncpa [#allocation4], 0
    // Predicated region
    $region2: #{tpu_custom_call.1} parent=1 // pred_check
      _
    $region3: #{tpu_custom_call.1} parent=1 // pred_check_branch
      %21 = sbr.rel (0) target = $region5
    $region4: #{tpu_custom_call.1} parent=1 // pred_region
      %s23 = ssub.s32 512, 512
      %24 = vsyncadd [#allocation3], %s23
      %s25 = sshll.u32 [#allocation2], 4
      %s26 = int_to_ptr.vmem [resolvable:$true] %s25
      %31 = dma.hbm_to_vmem [thread:$0]  %s0, 512, %s26, [#allocation3], 128, 128, 8
    $region5: #{tpu_custom_call.1} parent=1 // pred_fallthru
      _
    // Predicated region
    $region6: #{tpu_custom_call.1} parent=1 // pred_check
      _
    $region7: #{tpu_custom_call.1} parent=1 // pred_check_branch
      %33 = sbr.rel (0) target = $region9
    $region8: #{tpu_custom_call.1} parent=1 // pred_region
      %s35 = ssub.s32 7168, 7168
      %36 = vsyncadd [#allocation6], %s35
      %s37 = sshll.u32 [#allocation5], 4
      %s38 = int_to_ptr.vmem [resolvable:$true] %s37
      %43 = dma.hbm_to_vmem [thread:$0]  %s1, 7168, %s38, [#allocation6], 896, 896, 56
    $region9: #{tpu_custom_call.1} parent=1 // pred_fallthru
      _
    // Predicated region
    $region10: #{tpu_custom_call.1} parent=1 // pred_check
      _
    $region11: #{tpu_custom_call.1} parent=1 // pred_check_branch
      %45 = sbr.rel (0) target = $region13
    $region12: #{tpu_custom_call.1} parent=1 // pred_region
      %s47 = ssub.s32 14336, 14336
      %48 = vsyncadd [#allocation6], %s47
      %s49 = sshll.u32 [#allocation7], 4
      %s50 = int_to_ptr.vmem [resolvable:$true] %s49
      %55 = dma.hbm_to_vmem [thread:$0]  %s2, 14336, %s50, [#allocation6], 128, 128, 8
    $region13: #{tpu_custom_call.1} parent=1 // pred_fallthru
      _
    // Predicated region
    $region14: #{tpu_custom_call.1} parent=1 // pred_check
      _
    $region15: #{tpu_custom_call.1} parent=1 // pred_check_branch
      %57 = sbr.rel (0) target = $region17
    $region16: #{tpu_custom_call.1} parent=1 // pred_region
      %s59 = ssub.s32 8192, 8192
      %60 = vsyncadd [#allocation9], %s59
      %s61 = sshll.u32 [#allocation8], 4
      %s62 = int_to_ptr.vmem [resolvable:$true] %s61
      %67 = dma.hbm_to_vmem [thread:$0]  %s3, 8192, %s62, [#allocation9], 128, 128, 8
    $region17: #{tpu_custom_call.1} parent=1 // pred_fallthru
      _
    // Predicated region
    $region18: #{tpu_custom_call.1} parent=1 // pred_check
      _
    $region19: #{tpu_custom_call.1} parent=1 // pred_check_branch
      %69 = sbr.rel (0) target = $region21
    $region20: #{tpu_custom_call.1} parent=1 // pred_region
      %s71 = ssub.s32 4096, 4096
      %72 = vsyncadd [#allocation9], %s71
      %s73 = sshll.u32 [#allocation10], 4
      %s74 = int_to_ptr.vmem [resolvable:$true] %s73
      %79 = dma.hbm_to_vmem [thread:$0]  %s4, 4096, %s74, [#allocation9], 128, 128, 8
    $region21: #{tpu_custom_call.1} parent=1 // pred_fallthru
      _
    // Predicated region
    $region22: #{tpu_custom_call.1} parent=1 // pred_check
      _
    $region23: #{tpu_custom_call.1} parent=1 // pred_check_branch
      %81 = sbr.rel (0) target = $region25
    $region24: #{tpu_custom_call.1} parent=1 // pred_region
      %s83 = ssub.s32 6144, 6144
      %84 = vsyncadd [#allocation12], %s83
      %s85 = sshll.u32 [#allocation11], 4
      %s86 = int_to_ptr.vmem [resolvable:$true] %s85
      %91 = dma.hbm_to_vmem [thread:$0]  %s5, 6144, %s86, [#allocation12], 128, 128, 8
    $region25: #{tpu_custom_call.1} parent=1 // pred_fallthru
      _
    // Predicated region
    $region26: #{tpu_custom_call.1} parent=1 // pred_check
      _
    $region27: #{tpu_custom_call.1} parent=1 // pred_check_branch
      %93 = sbr.rel (0) target = $region29
    $region28: #{tpu_custom_call.1} parent=1 // pred_region
      %s95 = ssub.s32 2048, 2048
      %96 = vsyncadd [#allocation12], %s95
      %s97 = sshll.u32 [#allocation13], 4
      %s98 = int_to_ptr.vmem [resolvable:$true] %s97
      %103 = dma.hbm_to_vmem [thread:$0]  %s6, 2048, %s98, [#allocation12], 128, 128, 8
    $region29: #{tpu_custom_call.1} parent=1 // pred_fallthru
      _
    // Predicated region
    $region30: #{tpu_custom_call.1} parent=1 // pred_check
      _
    $region31: #{tpu_custom_call.1} parent=1 // pred_check_branch
      %105 = sbr.rel (0) target = $region33
    $region32: #{tpu_custom_call.1} parent=1 // pred_region
      %s107 = ssub.s32 2048, 2048
      %108 = vsyncadd [#allocation15], %s107
      %s109 = sshll.u32 [#allocation14], 4
      %s110 = int_to_ptr.vmem [resolvable:$true] %s109
      %115 = dma.hbm_to_vmem [thread:$0]  %s7, 2048, %s110, [#allocation15], 128, 128, 8
    $region33: #{tpu_custom_call.1} parent=1 // pred_fallthru
      _
    // Predicated region
    $region34: #{tpu_custom_call.1} parent=1 // pred_check
      _
    $region35: #{tpu_custom_call.1} parent=1 // pred_check_branch
      %117 = sbr.rel (0) target = $region37
    $region36: #{tpu_custom_call.1} parent=1 // pred_region
      %s119 = ssub.s32 896, 896
      %120 = vsyncadd [#allocation15], %s119
      %s122 = sshll.u32 [#allocation16], 4
      %s123 = int_to_ptr.vmem [resolvable:$true] %s122
      %125 = dma.hbm_to_vmem [thread:$0]  %s8, 896, %s123, [#allocation15]
    $region37: #{tpu_custom_call.1} parent=1 // pred_fallthru
      _
    // Predicated region
    $region38: #{tpu_custom_call.1} parent=1 // pred_check
      _
    $region39: #{tpu_custom_call.1} parent=1 // pred_check_branch
      %127 = sbr.rel (0) target = $region41
    $region40: #{tpu_custom_call.1} parent=1 // pred_region
      %128 = dma.done [#allocation3], 512
    $region41: #{tpu_custom_call.1} parent=1 // pred_fallthru
      _
    // Predicated region
    $region42: #{tpu_custom_call.1} parent=1 // pred_check
      _
    $region43: #{tpu_custom_call.1} parent=1 // pred_check_branch
      %130 = sbr.rel (0) target = $region45
    $region44: #{tpu_custom_call.1} parent=1 // pred_region
      %131 = dma.done [#allocation6], 7168
    $region45: #{tpu_custom_call.1} parent=1 // pred_fallthru
      _
    // Predicated region
    $region46: #{tpu_custom_call.1} parent=1 // pred_check
      _
    $region47: #{tpu_custom_call.1} parent=1 // pred_check_branch
      %133 = sbr.rel (0) target = $region49
    $region48: #{tpu_custom_call.1} parent=1 // pred_region
      %134 = dma.done [#allocation6], 14336
    $region49: #{tpu_custom_call.1} parent=1 // pred_fallthru
      _
    // Predicated region
    $region50: #{tpu_custom_call.1} parent=1 // pred_check
      _
    $region51: #{tpu_custom_call.1} parent=1 // pred_check_branch
      %136 = sbr.rel (0) target = $region53
    $region52: #{tpu_custom_call.1} parent=1 // pred_region
      %137 = dma.done [#allocation9], 8192
    $region53: #{tpu_custom_call.1} parent=1 // pred_fallthru
      _
    // Predicated region
    $region54: #{tpu_custom_call.1} parent=1 // pred_check
      _
    $region55: #{tpu_custom_call.1} parent=1 // pred_check_branch
      %139 = sbr.rel (0) target = $region57
    $region56: #{tpu_custom_call.1} parent=1 // pred_region
      %140 = dma.done [#allocation9], 4096
    $region57: #{tpu_custom_call.1} parent=1 // pred_fallthru
      _
    // Predicated region
    $region58: #{tpu_custom_call.1} parent=1 // pred_check
      _
    $region59: #{tpu_custom_call.1} parent=1 // pred_check_branch
      %142 = sbr.rel (0) target = $region61
    $region60: #{tpu_custom_call.1} parent=1 // pred_region
      %143 = dma.done [#allocation12], 6144
    $region61: #{tpu_custom_call.1} parent=1 // pred_fallthru
      _
    // Predicated region
    $region62: #{tpu_custom_call.1} parent=1 // pred_check
      _
    $region63: #{tpu_custom_call.1} parent=1 // pred_check_branch
      %145 = sbr.rel (0) target = $region65
    $region64: #{tpu_custom_call.1} parent=1 // pred_region
      %146 = dma.done [#allocation12], 2048
    $region65: #{tpu_custom_call.1} parent=1 // pred_fallthru
      _
    // Predicated region
    $region66: #{tpu_custom_call.1} parent=1 // pred_check
      _
    $region67: #{tpu_custom_call.1} parent=1 // pred_check_branch
      %148 = sbr.rel (0) target = $region69
    $region68: #{tpu_custom_call.1} parent=1 // pred_region
      %149 = dma.done [#allocation15], 2048
    $region69: #{tpu_custom_call.1} parent=1 // pred_fallthru
      _
    // Predicated region
    $region70: #{tpu_custom_call.1} parent=1 // pred_check
      _
    $region71: #{tpu_custom_call.1} parent=1 // pred_check_branch
      %151 = sbr.rel (0) target = $region73
    $region72: #{tpu_custom_call.1} parent=1 // pred_region
      %152 = dma.done [#allocation15], 896
    $region73: #{tpu_custom_call.1} parent=1 // pred_fallthru
      _
    %v153 = vld [vmem:[#allocation2] sm:$0xff]
    %v154 = vld [vmem:[#allocation2 + $0x8] sm:$0xff]
    %v155 = vld [vmem:[#allocation2 + $0x10] sm:$0xff]
    %v156 = vld [vmem:[#allocation2 + $0x18] sm:$0xff]
    %v157 = vld [vmem:[#allocation5] sm:$0xff]
    %v158 = vld [vmem:[#allocation5 + $0x8] sm:$0xff]
    %v159 = vld [vmem:[#allocation5 + $0x10] sm:$0xff]
    %v160 = vld [vmem:[#allocation5 + $0x18] sm:$0xff]
    %v161 = vld [vmem:[#allocation5 + $0x20] sm:$0xff]
    %v162 = vld [vmem:[#allocation5 + $0x28] sm:$0xff]
    %v163 = vld [vmem:[#allocation5 + $0x30] sm:$0xff]
    %v164 = vld [vmem:[#allocation5 + $0x38] sm:$0xff]
    %v165 = vld [vmem:[#allocation5 + $0x40] sm:$0xff]
    %v166 = vld [vmem:[#allocation5 + $0x48] sm:$0xff]
    %v167 = vld [vmem:[#allocation5 + $0x50] sm:$0xff]
    %v168 = vld [vmem:[#allocation5 + $0x58] sm:$0xff]
    %v169 = vld [vmem:[#allocation5 + $0x60] sm:$0xff]
    %v170 = vld [vmem:[#allocation5 + $0x68] sm:$0xff]
    %v171 = vld [vmem:[#allocation5 + $0x70] sm:$0xff]
    %v172 = vld [vmem:[#allocation5 + $0x78] sm:$0xff]
    %v173 = vld [vmem:[#allocation5 + $0x80] sm:$0xff]
    %v174 = vld [vmem:[#allocation5 + $0x88] sm:$0xff]
    %v175 = vld [vmem:[#allocation5 + $0x90] sm:$0xff]
    %v176 = vld [vmem:[#allocation5 + $0x98] sm:$0xff]
    %v177 = vld [vmem:[#allocation5 + $0xa0] sm:$0xff]
    %v178 = vld [vmem:[#allocation5 + $0xa8] sm:$0xff]
    %v179 = vld [vmem:[#allocation5 + $0xb0] sm:$0xff]
    %v180 = vld [vmem:[#allocation5 + $0xb8] sm:$0xff]
    %v181 = vld [vmem:[#allocation5 + $0xc0] sm:$0xff]
    %v182 = vld [vmem:[#allocation5 + $0xc8] sm:$0xff]
    %v183 = vld [vmem:[#allocation5 + $0xd0] sm:$0xff]
    %v184 = vld [vmem:[#allocation5 + $0xd8] sm:$0xff]
    %v185 = vld [vmem:[#allocation5 + $0xe0] sm:$0xff]
    %v186 = vld [vmem:[#allocation5 + $0xe8] sm:$0xff]
    %v187 = vld [vmem:[#allocation5 + $0xf0] sm:$0xff]
    %v188 = vld [vmem:[#allocation5 + $0xf8] sm:$0xff]
    %v189 = vld [vmem:[#allocation5 + $0x100] sm:$0xff]
    %v190 = vld [vmem:[#allocation5 + $0x108] sm:$0xff]
    %v191 = vld [vmem:[#allocation5 + $0x110] sm:$0xff]
    %v192 = vld [vmem:[#allocation5 + $0x118] sm:$0xff]
    %v193 = vld [vmem:[#allocation5 + $0x120] sm:$0xff]
    %v194 = vld [vmem:[#allocation5 + $0x128] sm:$0xff]
    %v195 = vld [vmem:[#allocation5 + $0x130] sm:$0xff]
    %v196 = vld [vmem:[#allocation5 + $0x138] sm:$0xff]
    %v197 = vld [vmem:[#allocation5 + $0x140] sm:$0xff]
    %v198 = vld [vmem:[#allocation5 + $0x148] sm:$0xff]
    %v199 = vld [vmem:[#allocation5 + $0x150] sm:$0xff]
    %v200 = vld [vmem:[#allocation5 + $0x158] sm:$0xff]
    %v201 = vld [vmem:[#allocation5 + $0x160] sm:$0xff]
    %v202 = vld [vmem:[#allocation5 + $0x168] sm:$0xff]
    %v203 = vld [vmem:[#allocation5 + $0x170] sm:$0xff]
    %v204 = vld [vmem:[#allocation5 + $0x178] sm:$0xff]
    %v205 = vld [vmem:[#allocation5 + $0x180] sm:$0xff]
    %v206 = vld [vmem:[#allocation5 + $0x188] sm:$0xff]
    %v207 = vld [vmem:[#allocation5 + $0x190] sm:$0xff]
    %v208 = vld [vmem:[#allocation5 + $0x198] sm:$0xff]
    %v209 = vld [vmem:[#allocation5 + $0x1a0] sm:$0xff]
    %v210 = vld [vmem:[#allocation5 + $0x1a8] sm:$0xff]
    %v211 = vld [vmem:[#allocation5 + $0x1b0] sm:$0xff]
    %v212 = vld [vmem:[#allocation5 + $0x1b8] sm:$0xff]
    %v213 = vld [vmem:[#allocation16] ss:$8 sm:$0xf]
    %v214 = vld [vmem:[#allocation16] ss:$8 sm:$0xf0]
    %v215 = vor.u32 %v213, %v214
    %v217 = vlaneseq
    %v218 = vshrl.u32 %v217, 7
    %v219 = vsub.s32 0, %v218
    %v220 = vrot.slane %v215, %v219
    %v221 = vlaneseq
    %v222 = vshrl.u32 %v221, 7
    %v223 = vsub.s32 1, %v222
    %v224 = vrot.slane %v215, %v223
    %v225 = vlaneseq
    %v226 = vshrl.u32 %v225, 7
    %v227 = vsub.s32 2, %v226
    %v228 = vrot.slane %v215, %v227
    %v229 = vlaneseq
    %v230 = vshrl.u32 %v229, 7
    %v231 = vsub.s32 3, %v230
    %v232 = vrot.slane %v215, %v231
    %v233 = vlaneseq
    %v234 = vshrl.u32 %v233, 7
    %v235 = vsub.s32 4, %v234
    %v236 = vrot.slane %v215, %v235
    %v237 = vlaneseq
    %v238 = vshrl.u32 %v237, 7
    %v239 = vsub.s32 5, %v238
    %v240 = vrot.slane %v215, %v239
    %v241 = vlaneseq
    %v242 = vshrl.u32 %v241, 7
    %v243 = vsub.s32 6, %v242
    %v244 = vrot.slane %v215, %v243
    %vm252 = vcmask 523264
    %v254 = vsel %vm252, %v153, 0
    %v257 = vsel %vm252, %v154, 0
    %v260 = vsel %vm252, %v155, 0
    %v263 = vsel %vm252, %v156, 0
    %265 = vmatprep.subr.mxu0 %v158
    %266 = vmatpush1.msra.mxu0 %v157
    %267 = vmatprep.subr.mxu0 %v165
    %268 = vmatpush1.msra.mxu0 %v164
    %269 = vmatprep.subr.mxu0 %v172
    %270 = vmatpush1.msra.mxu0 %v171
    %271 = vmatprep.subr.mxu0 %v179
    %272 = vmatpush1.msra.mxu0 %v178
    %273 = vmatprep.subr.mxu0 %v186
    %274 = vmatpush1.msra.mxu0 %v185
    %275 = vmatprep.subr.mxu0 %v193
    %276 = vmatpush1.msra.mxu0 %v192
    %277 = vmatprep.subr.mxu0 %v200
    %278 = vmatpush1.msra.mxu0 %v199
    %279 = vmatprep.subr.mxu0 %v207
    %280 = vmatpush1.msra.mxu0 %v206
    %281 = vmatprep.subr.mxu0 0.0
    %282 = vmatpush1.msra.mxu0 0.0
    %283 = vmatprep.subr.mxu0 0.0
    %284 = vmatpush1.msra.mxu0 0.0
    %285 = vmatprep.subr.mxu0 0.0
    %286 = vmatpush1.msra.mxu0 0.0
    %287 = vmatprep.subr.mxu0 0.0
    %288 = vmatpush1.msra.mxu0 0.0
    %289 = vmatprep.subr.mxu0 0.0
    %290 = vmatpush1.msra.mxu0 0.0
    %291 = vmatprep.subr.mxu0 0.0
    %292 = vmatpush1.msra.mxu0 0.0
    %293 = vmatprep.subr.mxu0 0.0
    %294 = vmatpush1.msra.mxu0 0.0
    %295 = vmatprep.subr.mxu0 0.0
    %296 = vmatpush1.msra.mxu0 0.0
    %297 = vmatprep.subr.mxu0 0.0
    %298 = vmatpush1.msra.mxu0 0.0
    %299 = vmatprep.subr.mxu0 0.0
    %300 = vmatpush1.msra.mxu0 0.0
    %301 = vmatprep.subr.mxu0 0.0
    %302 = vmatpush1.msra.mxu0 0.0
    %303 = vmatprep.subr.mxu0 0.0
    %304 = vmatpush1.msra.mxu0 0.0
    %305 = vmatprep.subr.mxu0 0.0
    %306 = vmatpush1.msra.mxu0 0.0
    %307 = vmatprep.subr.mxu0 0.0
    %308 = vmatpush1.msra.mxu0 0.0
    %309 = vmatprep.subr.mxu0 0.0
    %310 = vmatpush1.msra.mxu0 0.0
    %311 = vmatprep.subr.mxu0 0.0
    %312 = vmatpush1.msra.mxu0 0.0
    %313 = vmatprep.subr.mxu0 0.0
    %314 = vmatpush1.msra.mxu0 0.0
    %315 = vmatprep.subr.mxu0 0.0
    %316 = vmatpush1.msra.mxu0 0.0
    %317 = vmatprep.subr.mxu0 0.0
    %318 = vmatpush1.msra.mxu0 0.0
    %319 = vmatprep.subr.mxu0 0.0
    %320 = vmatpush1.msra.mxu0 0.0
    %321 = vmatprep.subr.mxu0 0.0
    %322 = vmatpush1.msra.mxu0 0.0
    %323 = vmatprep.subr.mxu0 0.0
    %324 = vmatpush1.msra.mxu0 0.0
    %325 = vmatprep.subr.mxu0 0.0
    %326 = vmatpush1.msra.mxu0 0.0
    %327 = vmatprep.subr.mxu0 0.0
    %328 = vmatpush1.msra.mxu0 0.0
    %329 = vmatprep.mubr.f32.mxu0 0.0
    %330 = vmatmul.mubr.f32.gmra.mrb[0].mxu0 %v254
    %v331 = vpop.f32.mrb[0].mxu0
    %v332 = vadd.f32 %v220, %v331
    %v333 = vpop.f32.mrb[0].mxu0
    %v334 = vadd.f32 %v224, %v333
    %335 = vmatprep.mubr.f32.mxu0 0.0
    %336 = vmatmul.mubr.f32.gmra.mrb[0].mxu0 %v257
    %v337 = vpop.f32.mrb[0].mxu0
    %v338 = vadd.f32 %v220, %v337
    %v339 = vpop.f32.mrb[0].mxu0
    %v340 = vadd.f32 %v224, %v339
    %341 = vmatprep.mubr.f32.mxu0 0.0
    %342 = vmatmul.mubr.f32.gmra.mrb[0].mxu0 %v260
    %v343 = vpop.f32.mrb[0].mxu0
    %v344 = vadd.f32 %v220, %v343
    %v345 = vpop.f32.mrb[0].mxu0
    %v346 = vadd.f32 %v224, %v345
    %347 = vmatprep.mubr.f32.mxu0 0.0
    %348 = vmatmul.mubr.f32.gmra.mrb[0].mxu0 %v263
    %v349 = vpop.f32.mrb[0].mxu0
    %v350 = vadd.f32 %v220, %v349
    %v351 = vpop.f32.mrb[0].mxu0
    %v352 = vadd.f32 %v224, %v351
    %353 = vdwg.mxu0
    %354 = vmatprep.subr.mxu0 %v160
    %355 = vmatpush1.msra.mxu0 %v159
    %356 = vmatprep.subr.mxu0 %v167
    %357 = vmatpush1.msra.mxu0 %v166
    %358 = vmatprep.subr.mxu0 %v174
    %359 = vmatpush1.msra.mxu0 %v173
    %360 = vmatprep.subr.mxu0 %v181
    %361 = vmatpush1.msra.mxu0 %v180
    %362 = vmatprep.subr.mxu0 %v188
    %363 = vmatpush1.msra.mxu0 %v187
    %364 = vmatprep.subr.mxu0 %v195
    %365 = vmatpush1.msra.mxu0 %v194
    %366 = vmatprep.subr.mxu0 %v202
    %367 = vmatpush1.msra.mxu0 %v201
    %368 = vmatprep.subr.mxu0 %v209
    %369 = vmatpush1.msra.mxu0 %v208
    %370 = vmatprep.subr.mxu0 0.0
    %371 = vmatpush1.msra.mxu0 0.0
    %372 = vmatprep.subr.mxu0 0.0
    %373 = vmatpush1.msra.mxu0 0.0
    %374 = vmatprep.subr.mxu0 0.0
    %375 = vmatpush1.msra.mxu0 0.0
    %376 = vmatprep.subr.mxu0 0.0
    %377 = vmatpush1.msra.mxu0 0.0
    %378 = vmatprep.subr.mxu0 0.0
    %379 = vmatpush1.msra.mxu0 0.0
    %380 = vmatprep.subr.mxu0 0.0
    %381 = vmatpush1.msra.mxu0 0.0
    %382 = vmatprep.subr.mxu0 0.0
    %383 = vmatpush1.msra.mxu0 0.0
    %384 = vmatprep.subr.mxu0 0.0
    %385 = vmatpush1.msra.mxu0 0.0
    %386 = vmatprep.subr.mxu0 0.0
    %387 = vmatpush1.msra.mxu0 0.0
    %388 = vmatprep.subr.mxu0 0.0
    %389 = vmatpush1.msra.mxu0 0.0
    %390 = vmatprep.subr.mxu0 0.0
    %391 = vmatpush1.msra.mxu0 0.0
    %392 = vmatprep.subr.mxu0 0.0
    %393 = vmatpush1.msra.mxu0 0.0
    %394 = vmatprep.subr.mxu0 0.0
    %395 = vmatpush1.msra.mxu0 0.0
    %396 = vmatprep.subr.mxu0 0.0
    %397 = vmatpush1.msra.mxu0 0.0
    %398 = vmatprep.subr.mxu0 0.0
    %399 = vmatpush1.msra.mxu0 0.0
    %400 = vmatprep.subr.mxu0 0.0
    %401 = vmatpush1.msra.mxu0 0.0
    %402 = vmatprep.subr.mxu0 0.0
    %403 = vmatpush1.msra.mxu0 0.0
    %404 = vmatprep.subr.mxu0 0.0
    %405 = vmatpush1.msra.mxu0 0.0
    %406 = vmatprep.subr.mxu0 0.0
    %407 = vmatpush1.msra.mxu0 0.0
    %408 = vmatprep.subr.mxu0 0.0
    %409 = vmatpush1.msra.mxu0 0.0
    %410 = vmatprep.subr.mxu0 0.0
    %411 = vmatpush1.msra.mxu0 0.0
    %412 = vmatprep.subr.mxu0 0.0
    %413 = vmatpush1.msra.mxu0 0.0
    %414 = vmatprep.subr.mxu0 0.0
    %415 = vmatpush1.msra.mxu0 0.0
    %416 = vmatprep.subr.mxu0 0.0
    %417 = vmatpush1.msra.mxu0 0.0
    %418 = vmatprep.mubr.f32.mxu0 0.0
    %419 = vmatmul.mubr.f32.gmra.mrb[0].mxu0 %v254
    %v420 = vpop.f32.mrb[0].mxu0
    %v421 = vadd.f32 %v228, %v420
    %v422 = vpop.f32.mrb[0].mxu0
    %v423 = vadd.f32 %v232, %v422
    %424 = vmatprep.mubr.f32.mxu0 0.0
    %425 = vmatmul.mubr.f32.gmra.mrb[0].mxu0 %v257
    %v426 = vpop.f32.mrb[0].mxu0
    %v427 = vadd.f32 %v228, %v426
    %v428 = vpop.f32.mrb[0].mxu0
    %v429 = vadd.f32 %v232, %v428
    %430 = vmatprep.mubr.f32.mxu0 0.0
    %431 = vmatmul.mubr.f32.gmra.mrb[0].mxu0 %v260
    %v432 = vpop.f32.mrb[0].mxu0
    %v433 = vadd.f32 %v228, %v432
    %v434 = vpop.f32.mrb[0].mxu0
    %v435 = vadd.f32 %v232, %v434
    %436 = vmatprep.mubr.f32.mxu0 0.0
    %437 = vmatmul.mubr.f32.gmra.mrb[0].mxu0 %v263
    %v438 = vpop.f32.mrb[0].mxu0
    %v439 = vadd.f32 %v228, %v438
    %v440 = vpop.f32.mrb[0].mxu0
    %v441 = vadd.f32 %v232, %v440
    %442 = vdwg.mxu0
    %443 = vmatprep.subr.mxu0 %v162
    %444 = vmatpush1.msra.mxu0 %v161
    %445 = vmatprep.subr.mxu0 %v169
    %446 = vmatpush1.msra.mxu0 %v168
    %447 = vmatprep.subr.mxu0 %v176
    %448 = vmatpush1.msra.mxu0 %v175
    %449 = vmatprep.subr.mxu0 %v183
    %450 = vmatpush1.msra.mxu0 %v182
    %451 = vmatprep.subr.mxu0 %v190
    %452 = vmatpush1.msra.mxu0 %v189
    %453 = vmatprep.subr.mxu0 %v197
    %454 = vmatpush1.msra.mxu0 %v196
    %455 = vmatprep.subr.mxu0 %v204
    %456 = vmatpush1.msra.mxu0 %v203
    %457 = vmatprep.subr.mxu0 %v211
    %458 = vmatpush1.msra.mxu0 %v210
    %459 = vmatprep.subr.mxu0 0.0
    %460 = vmatpush1.msra.mxu0 0.0
    %461 = vmatprep.subr.mxu0 0.0
    %462 = vmatpush1.msra.mxu0 0.0
    %463 = vmatprep.subr.mxu0 0.0
    %464 = vmatpush1.msra.mxu0 0.0
    %465 = vmatprep.subr.mxu0 0.0
    %466 = vmatpush1.msra.mxu0 0.0
    %467 = vmatprep.subr.mxu0 0.0
    %468 = vmatpush1.msra.mxu0 0.0
    %469 = vmatprep.subr.mxu0 0.0
    %470 = vmatpush1.msra.mxu0 0.0
    %471 = vmatprep.subr.mxu0 0.0
    %472 = vmatpush1.msra.mxu0 0.0
    %473 = vmatprep.subr.mxu0 0.0
    %474 = vmatpush1.msra.mxu0 0.0
    %475 = vmatprep.subr.mxu0 0.0
    %476 = vmatpush1.msra.mxu0 0.0
    %477 = vmatprep.subr.mxu0 0.0
    %478 = vmatpush1.msra.mxu0 0.0
    %479 = vmatprep.subr.mxu0 0.0
    %480 = vmatpush1.msra.mxu0 0.0
    %481 = vmatprep.subr.mxu0 0.0
    %482 = vmatpush1.msra.mxu0 0.0
    %483 = vmatprep.subr.mxu0 0.0
    %484 = vmatpush1.msra.mxu0 0.0
    %485 = vmatprep.subr.mxu0 0.0
    %486 = vmatpush1.msra.mxu0 0.0
    %487 = vmatprep.subr.mxu0 0.0
    %488 = vmatpush1.msra.mxu0 0.0
    %489 = vmatprep.subr.mxu0 0.0
    %490 = vmatpush1.msra.mxu0 0.0
    %491 = vmatprep.subr.mxu0 0.0
    %492 = vmatpush1.msra.mxu0 0.0
    %493 = vmatprep.subr.mxu0 0.0
    %494 = vmatpush1.msra.mxu0 0.0
    %495 = vmatprep.subr.mxu0 0.0
    %496 = vmatpush1.msra.mxu0 0.0
    %497 = vmatprep.subr.mxu0 0.0
    %498 = vmatpush1.msra.mxu0 0.0
    %499 = vmatprep.subr.mxu0 0.0
    %500 = vmatpush1.msra.mxu0 0.0
    %501 = vmatprep.subr.mxu0 0.0
    %502 = vmatpush1.msra.mxu0 0.0
    %503 = vmatprep.subr.mxu0 0.0
    %504 = vmatpush1.msra.mxu0 0.0
    %505 = vmatprep.subr.mxu0 0.0
    %506 = vmatpush1.msra.mxu0 0.0
    %507 = vmatprep.mubr.f32.mxu0 0.0
    %508 = vmatmul.mubr.f32.gmra.mrb[0].mxu0 %v254
    %v509 = vpop.f32.mrb[0].mxu0
    %v510 = vadd.f32 %v236, %v509
    %v511 = vpop.f32.mrb[0].mxu0
    %v512 = vadd.f32 %v240, %v511
    %513 = vmatprep.mubr.f32.mxu0 0.0
    %514 = vmatmul.mubr.f32.gmra.mrb[0].mxu0 %v257
    %v515 = vpop.f32.mrb[0].mxu0
    %v516 = vadd.f32 %v236, %v515
    %v517 = vpop.f32.mrb[0].mxu0
    %v518 = vadd.f32 %v240, %v517
    %519 = vmatprep.mubr.f32.mxu0 0.0
    %520 = vmatmul.mubr.f32.gmra.mrb[0].mxu0 %v260
    %v521 = vpop.f32.mrb[0].mxu0
    %v522 = vadd.f32 %v236, %v521
    %v523 = vpop.f32.mrb[0].mxu0
    %v524 = vadd.f32 %v240, %v523
    %525 = vmatprep.mubr.f32.mxu0 0.0
    %526 = vmatmul.mubr.f32.gmra.mrb[0].mxu0 %v263
    %v527 = vpop.f32.mrb[0].mxu0
    %v528 = vadd.f32 %v236, %v527
    %v529 = vpop.f32.mrb[0].mxu0
    %v530 = vadd.f32 %v240, %v529
    %531 = vdwg.mxu0
    %532 = vmatprep.subr.mxu0 0.0
    %533 = vmatpush1.msra.mxu0 %v163
    %534 = vmatprep.subr.mxu0 0.0
    %535 = vmatpush1.msra.mxu0 %v170
    %536 = vmatprep.subr.mxu0 0.0
    %537 = vmatpush1.msra.mxu0 %v177
    %538 = vmatprep.subr.mxu0 0.0
    %539 = vmatpush1.msra.mxu0 %v184
    %540 = vmatprep.subr.mxu0 0.0
    %541 = vmatpush1.msra.mxu0 %v191
    %542 = vmatprep.subr.mxu0 0.0
    %543 = vmatpush1.msra.mxu0 %v198
    %544 = vmatprep.subr.mxu0 0.0
    %545 = vmatpush1.msra.mxu0 %v205
    %546 = vmatprep.subr.mxu0 0.0
    %547 = vmatpush1.msra.mxu0 %v212
    %548 = vmatprep.subr.mxu0 0.0
    %549 = vmatpush1.msra.mxu0 0.0
    %550 = vmatprep.subr.mxu0 0.0
    %551 = vmatpush1.msra.mxu0 0.0
    %552 = vmatprep.subr.mxu0 0.0
    %553 = vmatpush1.msra.mxu0 0.0
    %554 = vmatprep.subr.mxu0 0.0
    %555 = vmatpush1.msra.mxu0 0.0
    %556 = vmatprep.subr.mxu0 0.0
    %557 = vmatpush1.msra.mxu0 0.0
    %558 = vmatprep.subr.mxu0 0.0
    %559 = vmatpush1.msra.mxu0 0.0
    %560 = vmatprep.subr.mxu0 0.0
    %561 = vmatpush1.msra.mxu0 0.0
    %562 = vmatprep.subr.mxu0 0.0
    %563 = vmatpush1.msra.mxu0 0.0
    %564 = vmatprep.subr.mxu0 0.0
    %565 = vmatpush1.msra.mxu0 0.0
    %566 = vmatprep.subr.mxu0 0.0
    %567 = vmatpush1.msra.mxu0 0.0
    %568 = vmatprep.subr.mxu0 0.0
    %569 = vmatpush1.msra.mxu0 0.0
    %570 = vmatprep.subr.mxu0 0.0
    %571 = vmatpush1.msra.mxu0 0.0
    %572 = vmatprep.subr.mxu0 0.0
    %573 = vmatpush1.msra.mxu0 0.0
    %574 = vmatprep.subr.mxu0 0.0
    %575 = vmatpush1.msra.mxu0 0.0
    %576 = vmatprep.subr.mxu0 0.0
    %577 = vmatpush1.msra.mxu0 0.0
    %578 = vmatprep.subr.mxu0 0.0
    %579 = vmatpush1.msra.mxu0 0.0
    %580 = vmatprep.subr.mxu0 0.0
    %581 = vmatpush1.msra.mxu0 0.0
    %582 = vmatprep.subr.mxu0 0.0
    %583 = vmatpush1.msra.mxu0 0.0
    %584 = vmatprep.subr.mxu0 0.0
    %585 = vmatpush1.msra.mxu0 0.0
    %586 = vmatprep.subr.mxu0 0.0
    %587 = vmatpush1.msra.mxu0 0.0
    %588 = vmatprep.subr.mxu0 0.0
    %589 = vmatpush1.msra.mxu0 0.0
    %590 = vmatprep.subr.mxu0 0.0
    %591 = vmatpush1.msra.mxu0 0.0
    %592 = vmatprep.subr.mxu0 0.0
    %593 = vmatpush1.msra.mxu0 0.0
    %594 = vmatprep.subr.mxu0 0.0
    %595 = vmatpush1.msra.mxu0 0.0
    %596 = vmatprep.mubr.f32.mxu0 0.0
    %597 = vmatmul.mubr.f32.gmra.mrb[0].mxu0 %v254
    %v598 = vpop.f32.mrb[0].mxu0
    %v599 = vadd.f32 %v244, %v598
    %v600 = vpop.f32.mrb[0].mxu0
    %601 = vmatprep.mubr.f32.mxu0 0.0
    %602 = vmatmul.mubr.f32.gmra.mrb[0].mxu0 %v257
    %v603 = vpop.f32.mrb[0].mxu0
    %v604 = vadd.f32 %v244, %v603
    %v605 = vpop.f32.mrb[0].mxu0
    %606 = vmatprep.mubr.f32.mxu0 0.0
    %607 = vmatmul.mubr.f32.gmra.mrb[0].mxu0 %v260
    %v608 = vpop.f32.mrb[0].mxu0
    %v609 = vadd.f32 %v244, %v608
    %v610 = vpop.f32.mrb[0].mxu0
    %611 = vmatprep.mubr.f32.mxu0 0.0
    %612 = vmatmul.mubr.f32.gmra.mrb[0].mxu0 %v263
    %v613 = vpop.f32.mrb[0].mxu0
    %v614 = vadd.f32 %v244, %v613
    %v615 = vpop.f32.mrb[0].mxu0
    %616 = vdwg.mxu0
    %vm617 = vcmp.gt.f32.partialorder %v332, 0.0
    %vm618 = vcmp.gt.f32.partialorder %v334, 0.0
    %vm619 = vcmp.gt.f32.partialorder %v421, 0.0
    %vm620 = vcmp.gt.f32.partialorder %v423, 0.0
    %vm621 = vcmp.gt.f32.partialorder %v510, 0.0
    %vm622 = vcmp.gt.f32.partialorder %v512, 0.0
    %vm623 = vcmp.gt.f32.partialorder %v599, 0.0
    %vm624 = vcmp.gt.f32.partialorder %v338, 0.0
    %vm625 = vcmp.gt.f32.partialorder %v340, 0.0
    %vm626 = vcmp.gt.f32.partialorder %v427, 0.0
    %vm627 = vcmp.gt.f32.partialorder %v429, 0.0
    %vm628 = vcmp.gt.f32.partialorder %v516, 0.0
    %vm629 = vcmp.gt.f32.partialorder %v518, 0.0
    %vm630 = vcmp.gt.f32.partialorder %v604, 0.0
    %vm631 = vcmp.gt.f32.partialorder %v344, 0.0
    %vm632 = vcmp.gt.f32.partialorder %v346, 0.0
    %vm633 = vcmp.gt.f32.partialorder %v433, 0.0
    %vm634 = vcmp.gt.f32.partialorder %v435, 0.0
    %vm635 = vcmp.gt.f32.partialorder %v522, 0.0
    %vm636 = vcmp.gt.f32.partialorder %v524, 0.0
    %vm637 = vcmp.gt.f32.partialorder %v609, 0.0
    %vm638 = vcmp.gt.f32.partialorder %v350, 0.0
    %vm639 = vcmp.gt.f32.partialorder %v352, 0.0
    %vm640 = vcmp.gt.f32.partialorder %v439, 0.0
    %vm641 = vcmp.gt.f32.partialorder %v441, 0.0
    %vm642 = vcmp.gt.f32.partialorder %v528, 0.0
    %vm643 = vcmp.gt.f32.partialorder %v530, 0.0
    %vm644 = vcmp.gt.f32.partialorder %v614, 0.0
    %v645 = vmul.f32 %v332, 0.01
    %v646 = vmul.f32 %v334, 0.01
    %v647 = vmul.f32 %v421, 0.01
    %v648 = vmul.f32 %v423, 0.01
    %v649 = vmul.f32 %v510, 0.01
    %v650 = vmul.f32 %v512, 0.01
    %v651 = vmul.f32 %v599, 0.01
    %v652 = vmul.f32 %v338, 0.01
    %v653 = vmul.f32 %v340, 0.01
    %v654 = vmul.f32 %v427, 0.01
    %v655 = vmul.f32 %v429, 0.01
    %v656 = vmul.f32 %v516, 0.01
    %v657 = vmul.f32 %v518, 0.01
    %v658 = vmul.f32 %v604, 0.01
    %v659 = vmul.f32 %v344, 0.01
    %v660 = vmul.f32 %v346, 0.01
    %v661 = vmul.f32 %v433, 0.01
    %v662 = vmul.f32 %v435, 0.01
    %v663 = vmul.f32 %v522, 0.01
    %v664 = vmul.f32 %v524, 0.01
    %v665 = vmul.f32 %v609, 0.01
    %v666 = vmul.f32 %v350, 0.01
    %v667 = vmul.f32 %v352, 0.01
    %v668 = vmul.f32 %v439, 0.01
    %v669 = vmul.f32 %v441, 0.01
    %v670 = vmul.f32 %v528, 0.01
    %v671 = vmul.f32 %v530, 0.01
    %v672 = vmul.f32 %v614, 0.01
    %v673 = vsel %vm617, %v332, %v645
    %v674 = vsel %vm618, %v334, %v646
    %v675 = vsel %vm619, %v421, %v647
    %v676 = vsel %vm620, %v423, %v648
    %v677 = vsel %vm621, %v510, %v649
    %v678 = vsel %vm622, %v512, %v650
    %v679 = vsel %vm623, %v599, %v651
    %v680 = vsel %vm624, %v338, %v652
    %v681 = vsel %vm625, %v340, %v653
    %v682 = vsel %vm626, %v427, %v654
    %v683 = vsel %vm627, %v429, %v655
    %v684 = vsel %vm628, %v516, %v656
    %v685 = vsel %vm629, %v518, %v657
    %v686 = vsel %vm630, %v604, %v658
    %v687 = vsel %vm631, %v344, %v659
    %v688 = vsel %vm632, %v346, %v660
    %v689 = vsel %vm633, %v433, %v661
    %v690 = vsel %vm634, %v435, %v662
    %v691 = vsel %vm635, %v522, %v663
    %v692 = vsel %vm636, %v524, %v664
    %v693 = vsel %vm637, %v609, %v665
    %v694 = vsel %vm638, %v350, %v666
    %v695 = vsel %vm639, %v352, %v667
    %v696 = vsel %vm640, %v439, %v668
    %v697 = vsel %vm641, %v441, %v669
    %v698 = vsel %vm642, %v528, %v670
    %v699 = vsel %vm643, %v530, %v671
    %v700 = vsel %vm644, %v614, %v672
    %v701 = vld [vmem:[#allocation7] sm:$0xff]
    %v702 = vld [vmem:[#allocation7 + $0x8] sm:$0xff]
    %v703 = vld [vmem:[#allocation7 + $0x10] sm:$0xff]
    %v704 = vld [vmem:[#allocation7 + $0x18] sm:$0xff]
    %v705 = vld [vmem:[#allocation7 + $0x20] sm:$0xff]
    %v706 = vld [vmem:[#allocation7 + $0x28] sm:$0xff]
    %v707 = vld [vmem:[#allocation7 + $0x30] sm:$0xff]
    %v708 = vld [vmem:[#allocation7 + $0x38] sm:$0xff]
    %v709 = vld [vmem:[#allocation7 + $0x40] sm:$0xff]
    %v710 = vld [vmem:[#allocation7 + $0x48] sm:$0xff]
    %v711 = vld [vmem:[#allocation7 + $0x50] sm:$0xff]
    %v712 = vld [vmem:[#allocation7 + $0x58] sm:$0xff]
    %v713 = vld [vmem:[#allocation7 + $0x60] sm:$0xff]
    %v714 = vld [vmem:[#allocation7 + $0x68] sm:$0xff]
    %v715 = vld [vmem:[#allocation7 + $0x70] sm:$0xff]
    %v716 = vld [vmem:[#allocation7 + $0x78] sm:$0xff]
    %v717 = vld [vmem:[#allocation7 + $0x80] sm:$0xff]
    %v718 = vld [vmem:[#allocation7 + $0x88] sm:$0xff]
    %v719 = vld [vmem:[#allocation7 + $0x90] sm:$0xff]
    %v720 = vld [vmem:[#allocation7 + $0x98] sm:$0xff]
    %v721 = vld [vmem:[#allocation7 + $0xa0] sm:$0xff]
    %v722 = vld [vmem:[#allocation7 + $0xa8] sm:$0xff]
    %v723 = vld [vmem:[#allocation7 + $0xb0] sm:$0xff]
    %v724 = vld [vmem:[#allocation7 + $0xb8] sm:$0xff]
    %v725 = vld [vmem:[#allocation7 + $0xc0] sm:$0xff]
    %v726 = vld [vmem:[#allocation7 + $0xc8] sm:$0xff]
    %v727 = vld [vmem:[#allocation7 + $0xd0] sm:$0xff]
    %v728 = vld [vmem:[#allocation7 + $0xd8] sm:$0xff]
    %v729 = vld [vmem:[#allocation7 + $0xe0] sm:$0xff]
    %v730 = vld [vmem:[#allocation7 + $0xe8] sm:$0xff]
    %v731 = vld [vmem:[#allocation7 + $0xf0] sm:$0xff]
    %v732 = vld [vmem:[#allocation7 + $0xf8] sm:$0xff]
    %v733 = vld [vmem:[#allocation7 + $0x100] sm:$0xff]
    %v734 = vld [vmem:[#allocation7 + $0x108] sm:$0xff]
    %v735 = vld [vmem:[#allocation7 + $0x110] sm:$0xff]
    %v736 = vld [vmem:[#allocation7 + $0x118] sm:$0xff]
    %v737 = vld [vmem:[#allocation7 + $0x120] sm:$0xff]
    %v738 = vld [vmem:[#allocation7 + $0x128] sm:$0xff]
    %v739 = vld [vmem:[#allocation7 + $0x130] sm:$0xff]
    %v740 = vld [vmem:[#allocation7 + $0x138] sm:$0xff]
    %v741 = vld [vmem:[#allocation7 + $0x140] sm:$0xff]
    %v742 = vld [vmem:[#allocation7 + $0x148] sm:$0xff]
    %v743 = vld [vmem:[#allocation7 + $0x150] sm:$0xff]
    %v744 = vld [vmem:[#allocation7 + $0x158] sm:$0xff]
    %v745 = vld [vmem:[#allocation7 + $0x160] sm:$0xff]
    %v746 = vld [vmem:[#allocation7 + $0x168] sm:$0xff]
    %v747 = vld [vmem:[#allocation7 + $0x170] sm:$0xff]
    %v748 = vld [vmem:[#allocation7 + $0x178] sm:$0xff]
    %v749 = vld [vmem:[#allocation7 + $0x180] sm:$0xff]
    %v750 = vld [vmem:[#allocation7 + $0x188] sm:$0xff]
    %v751 = vld [vmem:[#allocation7 + $0x190] sm:$0xff]
    %v752 = vld [vmem:[#allocation7 + $0x198] sm:$0xff]
    %v753 = vld [vmem:[#allocation7 + $0x1a0] sm:$0xff]
    %v754 = vld [vmem:[#allocation7 + $0x1a8] sm:$0xff]
    %v755 = vld [vmem:[#allocation7 + $0x1b0] sm:$0xff]
    %v756 = vld [vmem:[#allocation7 + $0x1b8] sm:$0xff]
    %v757 = vld [vmem:[#allocation7 + $0x1c0] sm:$0xff]
    %v758 = vld [vmem:[#allocation7 + $0x1c8] sm:$0xff]
    %v759 = vld [vmem:[#allocation7 + $0x1d0] sm:$0xff]
    %v760 = vld [vmem:[#allocation7 + $0x1d8] sm:$0xff]
    %v761 = vld [vmem:[#allocation7 + $0x1e0] sm:$0xff]
    %v762 = vld [vmem:[#allocation7 + $0x1e8] sm:$0xff]
    %v763 = vld [vmem:[#allocation7 + $0x1f0] sm:$0xff]
    %v764 = vld [vmem:[#allocation7 + $0x1f8] sm:$0xff]
    %v765 = vld [vmem:[#allocation7 + $0x200] sm:$0xff]
    %v766 = vld [vmem:[#allocation7 + $0x208] sm:$0xff]
    %v767 = vld [vmem:[#allocation7 + $0x210] sm:$0xff]
    %v768 = vld [vmem:[#allocation7 + $0x218] sm:$0xff]
    %v769 = vld [vmem:[#allocation7 + $0x220] sm:$0xff]
    %v770 = vld [vmem:[#allocation7 + $0x228] sm:$0xff]
    %v771 = vld [vmem:[#allocation7 + $0x230] sm:$0xff]
    %v772 = vld [vmem:[#allocation7 + $0x238] sm:$0xff]
    %v773 = vld [vmem:[#allocation7 + $0x240] sm:$0xff]
    %v774 = vld [vmem:[#allocation7 + $0x248] sm:$0xff]
    %v775 = vld [vmem:[#allocation7 + $0x250] sm:$0xff]
    %v776 = vld [vmem:[#allocation7 + $0x258] sm:$0xff]
    %v777 = vld [vmem:[#allocation7 + $0x260] sm:$0xff]
    %v778 = vld [vmem:[#allocation7 + $0x268] sm:$0xff]
    %v779 = vld [vmem:[#allocation7 + $0x270] sm:$0xff]
    %v780 = vld [vmem:[#allocation7 + $0x278] sm:$0xff]
    %v781 = vld [vmem:[#allocation7 + $0x280] sm:$0xff]
    %v782 = vld [vmem:[#allocation7 + $0x288] sm:$0xff]
    %v783 = vld [vmem:[#allocation7 + $0x290] sm:$0xff]
    %v784 = vld [vmem:[#allocation7 + $0x298] sm:$0xff]
    %v785 = vld [vmem:[#allocation7 + $0x2a0] sm:$0xff]
    %v786 = vld [vmem:[#allocation7 + $0x2a8] sm:$0xff]
    %v787 = vld [vmem:[#allocation7 + $0x2b0] sm:$0xff]
    %v788 = vld [vmem:[#allocation7 + $0x2b8] sm:$0xff]
    %v789 = vld [vmem:[#allocation7 + $0x2c0] sm:$0xff]
    %v790 = vld [vmem:[#allocation7 + $0x2c8] sm:$0xff]
    %v791 = vld [vmem:[#allocation7 + $0x2d0] sm:$0xff]
    %v792 = vld [vmem:[#allocation7 + $0x2d8] sm:$0xff]
    %v793 = vld [vmem:[#allocation7 + $0x2e0] sm:$0xff]
    %v794 = vld [vmem:[#allocation7 + $0x2e8] sm:$0xff]
    %v795 = vld [vmem:[#allocation7 + $0x2f0] sm:$0xff]
    %v796 = vld [vmem:[#allocation7 + $0x2f8] sm:$0xff]
    %v797 = vld [vmem:[#allocation7 + $0x300] sm:$0xff]
    %v798 = vld [vmem:[#allocation7 + $0x308] sm:$0xff]
    %v799 = vld [vmem:[#allocation7 + $0x310] sm:$0xff]
    %v800 = vld [vmem:[#allocation7 + $0x318] sm:$0xff]
    %v801 = vld [vmem:[#allocation7 + $0x320] sm:$0xff]
    %v802 = vld [vmem:[#allocation7 + $0x328] sm:$0xff]
    %v803 = vld [vmem:[#allocation7 + $0x330] sm:$0xff]
    %v804 = vld [vmem:[#allocation7 + $0x338] sm:$0xff]
    %v805 = vld [vmem:[#allocation7 + $0x340] sm:$0xff]
    %v806 = vld [vmem:[#allocation7 + $0x348] sm:$0xff]
    %v807 = vld [vmem:[#allocation7 + $0x350] sm:$0xff]
    %v808 = vld [vmem:[#allocation7 + $0x358] sm:$0xff]
    %v809 = vld [vmem:[#allocation7 + $0x360] sm:$0xff]
    %v810 = vld [vmem:[#allocation7 + $0x368] sm:$0xff]
    %v811 = vld [vmem:[#allocation7 + $0x370] sm:$0xff]
    %v812 = vld [vmem:[#allocation7 + $0x378] sm:$0xff]
    %813 = vmatprep.subr.mxu0 0.0
    %814 = vmatpush1.msra.mxu0 %v701
    %815 = vmatprep.subr.mxu0 0.0
    %816 = vmatpush1.msra.mxu0 %v702
    %817 = vmatprep.subr.mxu0 0.0
    %818 = vmatpush1.msra.mxu0 %v703
    %819 = vmatprep.subr.mxu0 0.0
    %820 = vmatpush1.msra.mxu0 %v704
    %821 = vmatprep.subr.mxu0 0.0
    %822 = vmatpush1.msra.mxu0 %v705
    %823 = vmatprep.subr.mxu0 0.0
    %824 = vmatpush1.msra.mxu0 %v706
    %825 = vmatprep.subr.mxu0 0.0
    %826 = vmatpush1.msra.mxu0 %v707
    %827 = vmatprep.subr.mxu0 0.0
    %828 = vmatpush1.msra.mxu0 %v708
    %829 = vmatprep.subr.mxu0 0.0
    %830 = vmatpush1.msra.mxu0 %v709
    %831 = vmatprep.subr.mxu0 0.0
    %832 = vmatpush1.msra.mxu0 %v710
    %833 = vmatprep.subr.mxu0 0.0
    %834 = vmatpush1.msra.mxu0 %v711
    %835 = vmatprep.subr.mxu0 0.0
    %836 = vmatpush1.msra.mxu0 %v712
    %837 = vmatprep.subr.mxu0 0.0
    %838 = vmatpush1.msra.mxu0 %v713
    %839 = vmatprep.subr.mxu0 0.0
    %840 = vmatpush1.msra.mxu0 %v714
    %841 = vmatprep.subr.mxu0 0.0
    %842 = vmatpush1.msra.mxu0 %v715
    %843 = vmatprep.subr.mxu0 0.0
    %844 = vmatpush1.msra.mxu0 %v716
    %845 = vmatprep.subr.mxu0 0.0
    %846 = vmatpush1.msra.mxu0 %v717
    %847 = vmatprep.subr.mxu0 0.0
    %848 = vmatpush1.msra.mxu0 %v718
    %849 = vmatprep.subr.mxu0 0.0
    %850 = vmatpush1.msra.mxu0 %v719
    %851 = vmatprep.subr.mxu0 0.0
    %852 = vmatpush1.msra.mxu0 %v720
    %853 = vmatprep.subr.mxu0 0.0
    %854 = vmatpush1.msra.mxu0 %v721
    %855 = vmatprep.subr.mxu0 0.0
    %856 = vmatpush1.msra.mxu0 %v722
    %857 = vmatprep.subr.mxu0 0.0
    %858 = vmatpush1.msra.mxu0 %v723
    %859 = vmatprep.subr.mxu0 0.0
    %860 = vmatpush1.msra.mxu0 %v724
    %861 = vmatprep.subr.mxu0 0.0
    %862 = vmatpush1.msra.mxu0 %v725
    %863 = vmatprep.subr.mxu0 0.0
    %864 = vmatpush1.msra.mxu0 %v726
    %865 = vmatprep.subr.mxu0 0.0
    %866 = vmatpush1.msra.mxu0 %v727
    %867 = vmatprep.subr.mxu0 0.0
    %868 = vmatpush1.msra.mxu0 %v728
    %869 = vmatprep.subr.mxu0 0.0
    %870 = vmatpush1.msra.mxu0 %v729
    %871 = vmatprep.subr.mxu0 0.0
    %872 = vmatpush1.msra.mxu0 %v730
    %873 = vmatprep.subr.mxu0 0.0
    %874 = vmatpush1.msra.mxu0 %v731
    %875 = vmatprep.subr.mxu0 0.0
    %876 = vmatpush1.msra.mxu0 %v732
    %877 = vmatprep.mubr.f32.mxu0 %v674
    %878 = vmatmul.mubr.f32.gmra.mrb[0].mxu0 %v673
    %v879 = vpop.f32.mrb[0].mxu0
    %v880 = vadd.f32 0.0, %v879
    %v881 = vpop.f32.mrb[0].mxu0
    %882 = vmatprep.mubr.f32.mxu0 %v681
    %883 = vmatmul.mubr.f32.gmra.mrb[0].mxu0 %v680
    %v884 = vpop.f32.mrb[0].mxu0
    %v885 = vadd.f32 0.0, %v884
    %v886 = vpop.f32.mrb[0].mxu0
    %887 = vmatprep.mubr.f32.mxu0 %v688
    %888 = vmatmul.mubr.f32.gmra.mrb[0].mxu0 %v687
    %v889 = vpop.f32.mrb[0].mxu0
    %v890 = vadd.f32 0.0, %v889
    %v891 = vpop.f32.mrb[0].mxu0
    %892 = vmatprep.mubr.f32.mxu0 %v695
    %893 = vmatmul.mubr.f32.gmra.mrb[0].mxu0 %v694
    %v894 = vpop.f32.mrb[0].mxu0
    %v895 = vadd.f32 0.0, %v894
    %v896 = vpop.f32.mrb[0].mxu0
    %897 = vdwg.mxu0
    %898 = vmatprep.subr.mxu0 0.0
    %899 = vmatpush1.msra.mxu0 %v733
    %900 = vmatprep.subr.mxu0 0.0
    %901 = vmatpush1.msra.mxu0 %v734
    %902 = vmatprep.subr.mxu0 0.0
    %903 = vmatpush1.msra.mxu0 %v735
    %904 = vmatprep.subr.mxu0 0.0
    %905 = vmatpush1.msra.mxu0 %v736
    %906 = vmatprep.subr.mxu0 0.0
    %907 = vmatpush1.msra.mxu0 %v737
    %908 = vmatprep.subr.mxu0 0.0
    %909 = vmatpush1.msra.mxu0 %v738
    %910 = vmatprep.subr.mxu0 0.0
    %911 = vmatpush1.msra.mxu0 %v739
    %912 = vmatprep.subr.mxu0 0.0
    %913 = vmatpush1.msra.mxu0 %v740
    %914 = vmatprep.subr.mxu0 0.0
    %915 = vmatpush1.msra.mxu0 %v741
    %916 = vmatprep.subr.mxu0 0.0
    %917 = vmatpush1.msra.mxu0 %v742
    %918 = vmatprep.subr.mxu0 0.0
    %919 = vmatpush1.msra.mxu0 %v743
    %920 = vmatprep.subr.mxu0 0.0
    %921 = vmatpush1.msra.mxu0 %v744
    %922 = vmatprep.subr.mxu0 0.0
    %923 = vmatpush1.msra.mxu0 %v745
    %924 = vmatprep.subr.mxu0 0.0
    %925 = vmatpush1.msra.mxu0 %v746
    %926 = vmatprep.subr.mxu0 0.0
    %927 = vmatpush1.msra.mxu0 %v747
    %928 = vmatprep.subr.mxu0 0.0
    %929 = vmatpush1.msra.mxu0 %v748
    %930 = vmatprep.subr.mxu0 0.0
    %931 = vmatpush1.msra.mxu0 %v749
    %932 = vmatprep.subr.mxu0 0.0
    %933 = vmatpush1.msra.mxu0 %v750
    %934 = vmatprep.subr.mxu0 0.0
    %935 = vmatpush1.msra.mxu0 %v751
    %936 = vmatprep.subr.mxu0 0.0
    %937 = vmatpush1.msra.mxu0 %v752
    %938 = vmatprep.subr.mxu0 0.0
    %939 = vmatpush1.msra.mxu0 %v753
    %940 = vmatprep.subr.mxu0 0.0
    %941 = vmatpush1.msra.mxu0 %v754
    %942 = vmatprep.subr.mxu0 0.0
    %943 = vmatpush1.msra.mxu0 %v755
    %944 = vmatprep.subr.mxu0 0.0
    %945 = vmatpush1.msra.mxu0 %v756
    %946 = vmatprep.subr.mxu0 0.0
    %947 = vmatpush1.msra.mxu0 %v757
    %948 = vmatprep.subr.mxu0 0.0
    %949 = vmatpush1.msra.mxu0 %v758
    %950 = vmatprep.subr.mxu0 0.0
    %951 = vmatpush1.msra.mxu0 %v759
    %952 = vmatprep.subr.mxu0 0.0
    %953 = vmatpush1.msra.mxu0 %v760
    %954 = vmatprep.subr.mxu0 0.0
    %955 = vmatpush1.msra.mxu0 %v761
    %956 = vmatprep.subr.mxu0 0.0
    %957 = vmatpush1.msra.mxu0 %v762
    %958 = vmatprep.subr.mxu0 0.0
    %959 = vmatpush1.msra.mxu0 %v763
    %960 = vmatprep.subr.mxu0 0.0
    %961 = vmatpush1.msra.mxu0 %v764
    %962 = vmatprep.mubr.f32.mxu0 %v676
    %963 = vmatmul.mubr.f32.gmra.mrb[0].mxu0 %v675
    %v964 = vpop.f32.mrb[0].mxu0
    %v965 = vadd.f32 %v880, %v964
    %v966 = vpop.f32.mrb[0].mxu0
    %967 = vmatprep.mubr.f32.mxu0 %v683
    %968 = vmatmul.mubr.f32.gmra.mrb[0].mxu0 %v682
    %v969 = vpop.f32.mrb[0].mxu0
    %v970 = vadd.f32 %v885, %v969
    %v971 = vpop.f32.mrb[0].mxu0
    %972 = vmatprep.mubr.f32.mxu0 %v690
    %973 = vmatmul.mubr.f32.gmra.mrb[0].mxu0 %v689
    %v974 = vpop.f32.mrb[0].mxu0
    %v975 = vadd.f32 %v890, %v974
    %v976 = vpop.f32.mrb[0].mxu0
    %977 = vmatprep.mubr.f32.mxu0 %v697
    %978 = vmatmul.mubr.f32.gmra.mrb[0].mxu0 %v696
    %v979 = vpop.f32.mrb[0].mxu0
    %v980 = vadd.f32 %v895, %v979
    %v981 = vpop.f32.mrb[0].mxu0
    %982 = vdwg.mxu0
    %983 = vmatprep.subr.mxu0 0.0
    %984 = vmatpush1.msra.mxu0 %v765
    %985 = vmatprep.subr.mxu0 0.0
    %986 = vmatpush1.msra.mxu0 %v766
    %987 = vmatprep.subr.mxu0 0.0
    %988 = vmatpush1.msra.mxu0 %v767
    %989 = vmatprep.subr.mxu0 0.0
    %990 = vmatpush1.msra.mxu0 %v768
    %991 = vmatprep.subr.mxu0 0.0
    %992 = vmatpush1.msra.mxu0 %v769
    %993 = vmatprep.subr.mxu0 0.0
    %994 = vmatpush1.msra.mxu0 %v770
    %995 = vmatprep.subr.mxu0 0.0
    %996 = vmatpush1.msra.mxu0 %v771
    %997 = vmatprep.subr.mxu0 0.0
    %998 = vmatpush1.msra.mxu0 %v772
    %999 = vmatprep.subr.mxu0 0.0
    %1000 = vmatpush1.msra.mxu0 %v773
    %1001 = vmatprep.subr.mxu0 0.0
    %1002 = vmatpush1.msra.mxu0 %v774
    %1003 = vmatprep.subr.mxu0 0.0
    %1004 = vmatpush1.msra.mxu0 %v775
    %1005 = vmatprep.subr.mxu0 0.0
    %1006 = vmatpush1.msra.mxu0 %v776
    %1007 = vmatprep.subr.mxu0 0.0
    %1008 = vmatpush1.msra.mxu0 %v777
    %1009 = vmatprep.subr.mxu0 0.0
    %1010 = vmatpush1.msra.mxu0 %v778
    %1011 = vmatprep.subr.mxu0 0.0
    %1012 = vmatpush1.msra.mxu0 %v779
    %1013 = vmatprep.subr.mxu0 0.0
    %1014 = vmatpush1.msra.mxu0 %v780
    %1015 = vmatprep.subr.mxu0 0.0
    %1016 = vmatpush1.msra.mxu0 %v781
    %1017 = vmatprep.subr.mxu0 0.0
    %1018 = vmatpush1.msra.mxu0 %v782
    %1019 = vmatprep.subr.mxu0 0.0
    %1020 = vmatpush1.msra.mxu0 %v783
    %1021 = vmatprep.subr.mxu0 0.0
    %1022 = vmatpush1.msra.mxu0 %v784
    %1023 = vmatprep.subr.mxu0 0.0
    %1024 = vmatpush1.msra.mxu0 %v785
    %1025 = vmatprep.subr.mxu0 0.0
    %1026 = vmatpush1.msra.mxu0 %v786
    %1027 = vmatprep.subr.mxu0 0.0
    %1028 = vmatpush1.msra.mxu0 %v787
    %1029 = vmatprep.subr.mxu0 0.0
    %1030 = vmatpush1.msra.mxu0 %v788
    %1031 = vmatprep.subr.mxu0 0.0
    %1032 = vmatpush1.msra.mxu0 %v789
    %1033 = vmatprep.subr.mxu0 0.0
    %1034 = vmatpush1.msra.mxu0 %v790
    %1035 = vmatprep.subr.mxu0 0.0
    %1036 = vmatpush1.msra.mxu0 %v791
    %1037 = vmatprep.subr.mxu0 0.0
    %1038 = vmatpush1.msra.mxu0 %v792
    %1039 = vmatprep.subr.mxu0 0.0
    %1040 = vmatpush1.msra.mxu0 %v793
    %1041 = vmatprep.subr.mxu0 0.0
    %1042 = vmatpush1.msra.mxu0 %v794
    %1043 = vmatprep.subr.mxu0 0.0
    %1044 = vmatpush1.msra.mxu0 %v795
    %1045 = vmatprep.subr.mxu0 0.0
    %1046 = vmatpush1.msra.mxu0 %v796
    %1047 = vmatprep.mubr.f32.mxu0 %v678
    %1048 = vmatmul.mubr.f32.gmra.mrb[0].mxu0 %v677
    %v1049 = vpop.f32.mrb[0].mxu0
    %v1050 = vadd.f32 %v965, %v1049
    %v1051 = vpop.f32.mrb[0].mxu0
    %1052 = vmatprep.mubr.f32.mxu0 %v685
    %1053 = vmatmul.mubr.f32.gmra.mrb[0].mxu0 %v684
    %v1054 = vpop.f32.mrb[0].mxu0
    %v1055 = vadd.f32 %v970, %v1054
    %v1056 = vpop.f32.mrb[0].mxu0
    %1057 = vmatprep.mubr.f32.mxu0 %v692
    %1058 = vmatmul.mubr.f32.gmra.mrb[0].mxu0 %v691
    %v1059 = vpop.f32.mrb[0].mxu0
    %v1060 = vadd.f32 %v975, %v1059
    %v1061 = vpop.f32.mrb[0].mxu0
    %1062 = vmatprep.mubr.f32.mxu0 %v699
    %1063 = vmatmul.mubr.f32.gmra.mrb[0].mxu0 %v698
    %v1064 = vpop.f32.mrb[0].mxu0
    %v1065 = vadd.f32 %v980, %v1064
    %v1066 = vpop.f32.mrb[0].mxu0
    %1067 = vdwg.mxu0
    %1068 = vmatprep.subr.mxu0 0.0
    %1069 = vmatpush1.msra.mxu0 %v797
    %1070 = vmatprep.subr.mxu0 0.0
    %1071 = vmatpush1.msra.mxu0 %v798
    %1072 = vmatprep.subr.mxu0 0.0
    %1073 = vmatpush1.msra.mxu0 %v799
    %1074 = vmatprep.subr.mxu0 0.0
    %1075 = vmatpush1.msra.mxu0 %v800
    %1076 = vmatprep.subr.mxu0 0.0
    %1077 = vmatpush1.msra.mxu0 %v801
    %1078 = vmatprep.subr.mxu0 0.0
    %1079 = vmatpush1.msra.mxu0 %v802
    %1080 = vmatprep.subr.mxu0 0.0
    %1081 = vmatpush1.msra.mxu0 %v803
    %1082 = vmatprep.subr.mxu0 0.0
    %1083 = vmatpush1.msra.mxu0 %v804
    %1084 = vmatprep.subr.mxu0 0.0
    %1085 = vmatpush1.msra.mxu0 %v805
    %1086 = vmatprep.subr.mxu0 0.0
    %1087 = vmatpush1.msra.mxu0 %v806
    %1088 = vmatprep.subr.mxu0 0.0
    %1089 = vmatpush1.msra.mxu0 %v807
    %1090 = vmatprep.subr.mxu0 0.0
    %1091 = vmatpush1.msra.mxu0 %v808
    %1092 = vmatprep.subr.mxu0 0.0
    %1093 = vmatpush1.msra.mxu0 %v809
    %1094 = vmatprep.subr.mxu0 0.0
    %1095 = vmatpush1.msra.mxu0 %v810
    %1096 = vmatprep.subr.mxu0 0.0
    %1097 = vmatpush1.msra.mxu0 %v811
    %1098 = vmatprep.subr.mxu0 0.0
    %1099 = vmatpush1.msra.mxu0 %v812
    %1100 = vmatprep.subr.mxu0 0.0
    %1101 = vmatpush1.msra.mxu0 0.0
    %1102 = vmatprep.subr.mxu0 0.0
    %1103 = vmatpush1.msra.mxu0 0.0
    %1104 = vmatprep.subr.mxu0 0.0
    %1105 = vmatpush1.msra.mxu0 0.0
    %1106 = vmatprep.subr.mxu0 0.0
    %1107 = vmatpush1.msra.mxu0 0.0
    %1108 = vmatprep.subr.mxu0 0.0
    %1109 = vmatpush1.msra.mxu0 0.0
    %1110 = vmatprep.subr.mxu0 0.0
    %1111 = vmatpush1.msra.mxu0 0.0
    %1112 = vmatprep.subr.mxu0 0.0
    %1113 = vmatpush1.msra.mxu0 0.0
    %1114 = vmatprep.subr.mxu0 0.0
    %1115 = vmatpush1.msra.mxu0 0.0
    %1116 = vmatprep.subr.mxu0 0.0
    %1117 = vmatpush1.msra.mxu0 0.0
    %1118 = vmatprep.subr.mxu0 0.0
    %1119 = vmatpush1.msra.mxu0 0.0
    %1120 = vmatprep.subr.mxu0 0.0
    %1121 = vmatpush1.msra.mxu0 0.0
    %1122 = vmatprep.subr.mxu0 0.0
    %1123 = vmatpush1.msra.mxu0 0.0
    %1124 = vmatprep.subr.mxu0 0.0
    %1125 = vmatpush1.msra.mxu0 0.0
    %1126 = vmatprep.subr.mxu0 0.0
    %1127 = vmatpush1.msra.mxu0 0.0
    %1128 = vmatprep.subr.mxu0 0.0
    %1129 = vmatpush1.msra.mxu0 0.0
    %1130 = vmatprep.subr.mxu0 0.0
    %1131 = vmatpush1.msra.mxu0 0.0
    %1132 = vmatprep.mubr.f32.mxu0 0.0
    %1133 = vmatmul.mubr.f32.gmra.mrb[0].mxu0 %v679
    %v1134 = vpop.f32.mrb[0].mxu0
    %v1135 = vadd.f32 %v1050, %v1134
    %v1136 = vpop.f32.mrb[0].mxu0
    %1137 = vmatprep.mubr.f32.mxu0 0.0
    %1138 = vmatmul.mubr.f32.gmra.mrb[0].mxu0 %v686
    %v1139 = vpop.f32.mrb[0].mxu0
    %v1140 = vadd.f32 %v1055, %v1139
    %v1141 = vpop.f32.mrb[0].mxu0
    %1142 = vmatprep.mubr.f32.mxu0 0.0
    %1143 = vmatmul.mubr.f32.gmra.mrb[0].mxu0 %v693
    %v1144 = vpop.f32.mrb[0].mxu0
    %v1145 = vadd.f32 %v1060, %v1144
    %v1146 = vpop.f32.mrb[0].mxu0
    %1147 = vmatprep.mubr.f32.mxu0 0.0
    %1148 = vmatmul.mubr.f32.gmra.mrb[0].mxu0 %v700
    %v1149 = vpop.f32.mrb[0].mxu0
    %v1150 = vadd.f32 %v1065, %v1149
    %v1151 = vpop.f32.mrb[0].mxu0
    %1152 = vdwg.mxu0
    %v1153 = vld [vmem:[#allocation8] sm:$0xff]
    %v1154 = vld [vmem:[#allocation8 + $0x8] sm:$0xff]
    %v1155 = vld [vmem:[#allocation8 + $0x10] sm:$0xff]
    %v1156 = vld [vmem:[#allocation8 + $0x18] sm:$0xff]
    %v1157 = vld [vmem:[#allocation8 + $0x20] sm:$0xff]
    %v1158 = vld [vmem:[#allocation8 + $0x28] sm:$0xff]
    %v1159 = vld [vmem:[#allocation8 + $0x30] sm:$0xff]
    %v1160 = vld [vmem:[#allocation8 + $0x38] sm:$0xff]
    %v1161 = vld [vmem:[#allocation8 + $0x40] sm:$0xff]
    %v1162 = vld [vmem:[#allocation8 + $0x48] sm:$0xff]
    %v1163 = vld [vmem:[#allocation8 + $0x50] sm:$0xff]
    %v1164 = vld [vmem:[#allocation8 + $0x58] sm:$0xff]
    %v1165 = vld [vmem:[#allocation8 + $0x60] sm:$0xff]
    %v1166 = vld [vmem:[#allocation8 + $0x68] sm:$0xff]
    %v1167 = vld [vmem:[#allocation8 + $0x70] sm:$0xff]
    %v1168 = vld [vmem:[#allocation8 + $0x78] sm:$0xff]
    %s1169 = scalar_lea.vmem [#allocation8], 128
    %v1170 = vld [vmem:[%s1169] sm:$0xff]
    %v1171 = vld [vmem:[%s1169 + $0x8] sm:$0xff]
    %v1172 = vld [vmem:[%s1169 + $0x10] sm:$0xff]
    %v1173 = vld [vmem:[%s1169 + $0x18] sm:$0xff]
    %v1174 = vld [vmem:[%s1169 + $0x20] sm:$0xff]
    %v1175 = vld [vmem:[%s1169 + $0x28] sm:$0xff]
    %v1176 = vld [vmem:[%s1169 + $0x30] sm:$0xff]
    %v1177 = vld [vmem:[%s1169 + $0x38] sm:$0xff]
    %v1178 = vld [vmem:[%s1169 + $0x40] sm:$0xff]
    %v1179 = vld [vmem:[%s1169 + $0x48] sm:$0xff]
    %v1180 = vld [vmem:[%s1169 + $0x50] sm:$0xff]
    %v1181 = vld [vmem:[%s1169 + $0x58] sm:$0xff]
    %v1182 = vld [vmem:[%s1169 + $0x60] sm:$0xff]
    %v1183 = vld [vmem:[%s1169 + $0x68] sm:$0xff]
    %v1184 = vld [vmem:[%s1169 + $0x70] sm:$0xff]
    %v1185 = vld [vmem:[%s1169 + $0x78] sm:$0xff]
    %1186 = vmatprep.subr.mxu0 0.0
    %1187 = vmatpush1.msra.mxu0 %v1170
    %1188 = vmatprep.subr.mxu0 0.0
    %1189 = vmatpush1.msra.mxu0 %v1171
    %1190 = vmatprep.subr.mxu0 0.0
    %1191 = vmatpush1.msra.mxu0 %v1172
    %1192 = vmatprep.subr.mxu0 0.0
    %1193 = vmatpush1.msra.mxu0 %v1173
    %1194 = vmatprep.subr.mxu0 0.0
    %1195 = vmatpush1.msra.mxu0 %v1174
    %1196 = vmatprep.subr.mxu0 0.0
    %1197 = vmatpush1.msra.mxu0 %v1175
    %1198 = vmatprep.subr.mxu0 0.0
    %1199 = vmatpush1.msra.mxu0 %v1176
    %1200 = vmatprep.subr.mxu0 0.0
    %1201 = vmatpush1.msra.mxu0 %v1177
    %1202 = vmatprep.subr.mxu0 0.0
    %1203 = vmatpush1.msra.mxu0 %v1178
    %1204 = vmatprep.subr.mxu0 0.0
    %1205 = vmatpush1.msra.mxu0 %v1179
    %1206 = vmatprep.subr.mxu0 0.0
    %1207 = vmatpush1.msra.mxu0 %v1180
    %1208 = vmatprep.subr.mxu0 0.0
    %1209 = vmatpush1.msra.mxu0 %v1181
    %1210 = vmatprep.subr.mxu0 0.0
    %1211 = vmatpush1.msra.mxu0 %v1182
    %1212 = vmatprep.subr.mxu0 0.0
    %1213 = vmatpush1.msra.mxu0 %v1183
    %1214 = vmatprep.subr.mxu0 0.0
    %1215 = vmatpush1.msra.mxu0 %v1184
    %1216 = vmatprep.subr.mxu0 0.0
    %1217 = vmatpush1.msra.mxu0 %v1185
    %1218 = vmatprep.subr.mxu0 0.0
    %1219 = vmatpush1.msra.mxu0 0.0
    %1220 = vmatprep.subr.mxu0 0.0
    %1221 = vmatpush1.msra.mxu0 0.0
    %1222 = vmatprep.subr.mxu0 0.0
    %1223 = vmatpush1.msra.mxu0 0.0
    %1224 = vmatprep.subr.mxu0 0.0
    %1225 = vmatpush1.msra.mxu0 0.0
    %1226 = vmatprep.subr.mxu0 0.0
    %1227 = vmatpush1.msra.mxu0 0.0
    %1228 = vmatprep.subr.mxu0 0.0
    %1229 = vmatpush1.msra.mxu0 0.0
    %1230 = vmatprep.subr.mxu0 0.0
    %1231 = vmatpush1.msra.mxu0 0.0
    %1232 = vmatprep.subr.mxu0 0.0
    %1233 = vmatpush1.msra.mxu0 0.0
    %1234 = vmatprep.subr.mxu0 0.0
    %1235 = vmatpush1.msra.mxu0 0.0
    %1236 = vmatprep.subr.mxu0 0.0
    %1237 = vmatpush1.msra.mxu0 0.0
    %1238 = vmatprep.subr.mxu0 0.0
    %1239 = vmatpush1.msra.mxu0 0.0
    %1240 = vmatprep.subr.mxu0 0.0
    %1241 = vmatpush1.msra.mxu0 0.0
    %1242 = vmatprep.subr.mxu0 0.0
    %1243 = vmatpush1.msra.mxu0 0.0
    %1244 = vmatprep.subr.mxu0 0.0
    %1245 = vmatpush1.msra.mxu0 0.0
    %1246 = vmatprep.subr.mxu0 0.0
    %1247 = vmatpush1.msra.mxu0 0.0
    %1248 = vmatprep.subr.mxu0 0.0
    %1249 = vmatpush1.msra.mxu0 0.0
    %1250 = vmatprep.mubr.f32.mxu0 0.0
    %1251 = vmatmul.mubr.f32.gmra.mrb[0].mxu0 %v1140
    %v1252 = vpop.f32.mrb[0].mxu0
    %v1253 = vadd.f32 0.0, %v1252
    %v1254 = vpop.f32.mrb[0].mxu0
    %1255 = vdwg.mxu0
    %1256 = vmatprep.subr.mxu0 0.0
    %1257 = vmatpush1.msra.mxu0 %v1153
    %1258 = vmatprep.subr.mxu0 0.0
    %1259 = vmatpush1.msra.mxu0 %v1154
    %1260 = vmatprep.subr.mxu0 0.0
    %1261 = vmatpush1.msra.mxu0 %v1155
    %1262 = vmatprep.subr.mxu0 0.0
    %1263 = vmatpush1.msra.mxu0 %v1156
    %1264 = vmatprep.subr.mxu0 0.0
    %1265 = vmatpush1.msra.mxu0 %v1157
    %1266 = vmatprep.subr.mxu0 0.0
    %1267 = vmatpush1.msra.mxu0 %v1158
    %1268 = vmatprep.subr.mxu0 0.0
    %1269 = vmatpush1.msra.mxu0 %v1159
    %1270 = vmatprep.subr.mxu0 0.0
    %1271 = vmatpush1.msra.mxu0 %v1160
    %1272 = vmatprep.subr.mxu0 0.0
    %1273 = vmatpush1.msra.mxu0 %v1161
    %1274 = vmatprep.subr.mxu0 0.0
    %1275 = vmatpush1.msra.mxu0 %v1162
    %1276 = vmatprep.subr.mxu0 0.0
    %1277 = vmatpush1.msra.mxu0 %v1163
    %1278 = vmatprep.subr.mxu0 0.0
    %1279 = vmatpush1.msra.mxu0 %v1164
    %1280 = vmatprep.subr.mxu0 0.0
    %1281 = vmatpush1.msra.mxu0 %v1165
    %1282 = vmatprep.subr.mxu0 0.0
    %1283 = vmatpush1.msra.mxu0 %v1166
    %1284 = vmatprep.subr.mxu0 0.0
    %1285 = vmatpush1.msra.mxu0 %v1167
    %1286 = vmatprep.subr.mxu0 0.0
    %1287 = vmatpush1.msra.mxu0 %v1168
    %1288 = vmatprep.subr.mxu0 0.0
    %1289 = vmatpush1.msra.mxu0 0.0
    %1290 = vmatprep.subr.mxu0 0.0
    %1291 = vmatpush1.msra.mxu0 0.0
    %1292 = vmatprep.subr.mxu0 0.0
    %1293 = vmatpush1.msra.mxu0 0.0
    %1294 = vmatprep.subr.mxu0 0.0
    %1295 = vmatpush1.msra.mxu0 0.0
    %1296 = vmatprep.subr.mxu0 0.0
    %1297 = vmatpush1.msra.mxu0 0.0
    %1298 = vmatprep.subr.mxu0 0.0
    %1299 = vmatpush1.msra.mxu0 0.0
    %1300 = vmatprep.subr.mxu0 0.0
    %1301 = vmatpush1.msra.mxu0 0.0
    %1302 = vmatprep.subr.mxu0 0.0
    %1303 = vmatpush1.msra.mxu0 0.0
    %1304 = vmatprep.subr.mxu0 0.0
    %1305 = vmatpush1.msra.mxu0 0.0
    %1306 = vmatprep.subr.mxu0 0.0
    %1307 = vmatpush1.msra.mxu0 0.0
    %1308 = vmatprep.subr.mxu0 0.0
    %1309 = vmatpush1.msra.mxu0 0.0
    %1310 = vmatprep.subr.mxu0 0.0
    %1311 = vmatpush1.msra.mxu0 0.0
    %1312 = vmatprep.subr.mxu0 0.0
    %1313 = vmatpush1.msra.mxu0 0.0
    %1314 = vmatprep.subr.mxu0 0.0
    %1315 = vmatpush1.msra.mxu0 0.0
    %1316 = vmatprep.subr.mxu0 0.0
    %1317 = vmatpush1.msra.mxu0 0.0
    %1318 = vmatprep.subr.mxu0 0.0
    %1319 = vmatpush1.msra.mxu0 0.0
    %1320 = vmatprep.mubr.f32.mxu0 0.0
    %1321 = vmatmul.mubr.f32.gmra.mrb[0].mxu0 %v1135
    %v1322 = vpop.f32.mrb[0].mxu0
    %v1323 = vadd.f32 %v1253, %v1322
    %v1324 = vpop.f32.mrb[0].mxu0
    %1325 = vdwg.mxu0
    %s1326 = scalar_lea.vmem [#allocation8], 256
    %v1327 = vld [vmem:[%s1326] sm:$0xff]
    %v1328 = vld [vmem:[%s1326 + $0x8] sm:$0xff]
    %v1329 = vld [vmem:[%s1326 + $0x10] sm:$0xff]
    %v1330 = vld [vmem:[%s1326 + $0x18] sm:$0xff]
    %v1331 = vld [vmem:[%s1326 + $0x20] sm:$0xff]
    %v1332 = vld [vmem:[%s1326 + $0x28] sm:$0xff]
    %v1333 = vld [vmem:[%s1326 + $0x30] sm:$0xff]
    %v1334 = vld [vmem:[%s1326 + $0x38] sm:$0xff]
    %v1335 = vld [vmem:[%s1326 + $0x40] sm:$0xff]
    %v1336 = vld [vmem:[%s1326 + $0x48] sm:$0xff]
    %v1337 = vld [vmem:[%s1326 + $0x50] sm:$0xff]
    %v1338 = vld [vmem:[%s1326 + $0x58] sm:$0xff]
    %v1339 = vld [vmem:[%s1326 + $0x60] sm:$0xff]
    %v1340 = vld [vmem:[%s1326 + $0x68] sm:$0xff]
    %v1341 = vld [vmem:[%s1326 + $0x70] sm:$0xff]
    %v1342 = vld [vmem:[%s1326 + $0x78] sm:$0xff]
    %1343 = vmatprep.subr.mxu0 0.0
    %1344 = vmatpush1.msra.mxu0 %v1327
    %1345 = vmatprep.subr.mxu0 0.0
    %1346 = vmatpush1.msra.mxu0 %v1328
    %1347 = vmatprep.subr.mxu0 0.0
    %1348 = vmatpush1.msra.mxu0 %v1329
    %1349 = vmatprep.subr.mxu0 0.0
    %1350 = vmatpush1.msra.mxu0 %v1330
    %1351 = vmatprep.subr.mxu0 0.0
    %1352 = vmatpush1.msra.mxu0 %v1331
    %1353 = vmatprep.subr.mxu0 0.0
    %1354 = vmatpush1.msra.mxu0 %v1332
    %1355 = vmatprep.subr.mxu0 0.0
    %1356 = vmatpush1.msra.mxu0 %v1333
    %1357 = vmatprep.subr.mxu0 0.0
    %1358 = vmatpush1.msra.mxu0 %v1334
    %1359 = vmatprep.subr.mxu0 0.0
    %1360 = vmatpush1.msra.mxu0 %v1335
    %1361 = vmatprep.subr.mxu0 0.0
    %1362 = vmatpush1.msra.mxu0 %v1336
    %1363 = vmatprep.subr.mxu0 0.0
    %1364 = vmatpush1.msra.mxu0 %v1337
    %1365 = vmatprep.subr.mxu0 0.0
    %1366 = vmatpush1.msra.mxu0 %v1338
    %1367 = vmatprep.subr.mxu0 0.0
    %1368 = vmatpush1.msra.mxu0 %v1339
    %1369 = vmatprep.subr.mxu0 0.0
    %1370 = vmatpush1.msra.mxu0 %v1340
    %1371 = vmatprep.subr.mxu0 0.0
    %1372 = vmatpush1.msra.mxu0 %v1341
    %1373 = vmatprep.subr.mxu0 0.0
    %1374 = vmatpush1.msra.mxu0 %v1342
    %1375 = vmatprep.subr.mxu0 0.0
    %1376 = vmatpush1.msra.mxu0 0.0
    %1377 = vmatprep.subr.mxu0 0.0
    %1378 = vmatpush1.msra.mxu0 0.0
    %1379 = vmatprep.subr.mxu0 0.0
    %1380 = vmatpush1.msra.mxu0 0.0
    %1381 = vmatprep.subr.mxu0 0.0
    %1382 = vmatpush1.msra.mxu0 0.0
    %1383 = vmatprep.subr.mxu0 0.0
    %1384 = vmatpush1.msra.mxu0 0.0
    %1385 = vmatprep.subr.mxu0 0.0
    %1386 = vmatpush1.msra.mxu0 0.0
    %1387 = vmatprep.subr.mxu0 0.0
    %1388 = vmatpush1.msra.mxu0 0.0
    %1389 = vmatprep.subr.mxu0 0.0
    %1390 = vmatpush1.msra.mxu0 0.0
    %1391 = vmatprep.subr.mxu0 0.0
    %1392 = vmatpush1.msra.mxu0 0.0
    %1393 = vmatprep.subr.mxu0 0.0
    %1394 = vmatpush1.msra.mxu0 0.0
    %1395 = vmatprep.subr.mxu0 0.0
    %1396 = vmatpush1.msra.mxu0 0.0
    %1397 = vmatprep.subr.mxu0 0.0
    %1398 = vmatpush1.msra.mxu0 0.0
    %1399 = vmatprep.subr.mxu0 0.0
    %1400 = vmatpush1.msra.mxu0 0.0
    %1401 = vmatprep.subr.mxu0 0.0
    %1402 = vmatpush1.msra.mxu0 0.0
    %1403 = vmatprep.subr.mxu0 0.0
    %1404 = vmatpush1.msra.mxu0 0.0
    %1405 = vmatprep.subr.mxu0 0.0
    %1406 = vmatpush1.msra.mxu0 0.0
    %1407 = vmatprep.mubr.f32.mxu0 0.0
    %1408 = vmatmul.mubr.f32.gmra.mrb[0].mxu0 %v1145
    %v1409 = vpop.f32.mrb[0].mxu0
    %v1410 = vadd.f32 0.0, %v1409
    %v1411 = vpop.f32.mrb[0].mxu0
    %1412 = vdwg.mxu0
    %v1413 = vadd.f32 %v1323, %v1410
    %s1414 = scalar_lea.vmem [#allocation8], 384
    %v1415 = vld [vmem:[%s1414] sm:$0xff]
    %v1416 = vld [vmem:[%s1414 + $0x8] sm:$0xff]
    %v1417 = vld [vmem:[%s1414 + $0x10] sm:$0xff]
    %v1418 = vld [vmem:[%s1414 + $0x18] sm:$0xff]
    %v1419 = vld [vmem:[%s1414 + $0x20] sm:$0xff]
    %v1420 = vld [vmem:[%s1414 + $0x28] sm:$0xff]
    %v1421 = vld [vmem:[%s1414 + $0x30] sm:$0xff]
    %v1422 = vld [vmem:[%s1414 + $0x38] sm:$0xff]
    %v1423 = vld [vmem:[%s1414 + $0x40] sm:$0xff]
    %v1424 = vld [vmem:[%s1414 + $0x48] sm:$0xff]
    %v1425 = vld [vmem:[%s1414 + $0x50] sm:$0xff]
    %v1426 = vld [vmem:[%s1414 + $0x58] sm:$0xff]
    %v1427 = vld [vmem:[%s1414 + $0x60] sm:$0xff]
    %v1428 = vld [vmem:[%s1414 + $0x68] sm:$0xff]
    %v1429 = vld [vmem:[%s1414 + $0x70] sm:$0xff]
    %v1430 = vld [vmem:[%s1414 + $0x78] sm:$0xff]
    %1431 = vmatprep.subr.mxu0 0.0
    %1432 = vmatpush1.msra.mxu0 %v1415
    %1433 = vmatprep.subr.mxu0 0.0
    %1434 = vmatpush1.msra.mxu0 %v1416
    %1435 = vmatprep.subr.mxu0 0.0
    %1436 = vmatpush1.msra.mxu0 %v1417
    %1437 = vmatprep.subr.mxu0 0.0
    %1438 = vmatpush1.msra.mxu0 %v1418
    %1439 = vmatprep.subr.mxu0 0.0
    %1440 = vmatpush1.msra.mxu0 %v1419
    %1441 = vmatprep.subr.mxu0 0.0
    %1442 = vmatpush1.msra.mxu0 %v1420
    %1443 = vmatprep.subr.mxu0 0.0
    %1444 = vmatpush1.msra.mxu0 %v1421
    %1445 = vmatprep.subr.mxu0 0.0
    %1446 = vmatpush1.msra.mxu0 %v1422
    %1447 = vmatprep.subr.mxu0 0.0
    %1448 = vmatpush1.msra.mxu0 %v1423
    %1449 = vmatprep.subr.mxu0 0.0
    %1450 = vmatpush1.msra.mxu0 %v1424
    %1451 = vmatprep.subr.mxu0 0.0
    %1452 = vmatpush1.msra.mxu0 %v1425
    %1453 = vmatprep.subr.mxu0 0.0
    %1454 = vmatpush1.msra.mxu0 %v1426
    %1455 = vmatprep.subr.mxu0 0.0
    %1456 = vmatpush1.msra.mxu0 %v1427
    %1457 = vmatprep.subr.mxu0 0.0
    %1458 = vmatpush1.msra.mxu0 %v1428
    %1459 = vmatprep.subr.mxu0 0.0
    %1460 = vmatpush1.msra.mxu0 %v1429
    %1461 = vmatprep.subr.mxu0 0.0
    %1462 = vmatpush1.msra.mxu0 %v1430
    %1463 = vmatprep.subr.mxu0 0.0
    %1464 = vmatpush1.msra.mxu0 0.0
    %1465 = vmatprep.subr.mxu0 0.0
    %1466 = vmatpush1.msra.mxu0 0.0
    %1467 = vmatprep.subr.mxu0 0.0
    %1468 = vmatpush1.msra.mxu0 0.0
    %1469 = vmatprep.subr.mxu0 0.0
    %1470 = vmatpush1.msra.mxu0 0.0
    %1471 = vmatprep.subr.mxu0 0.0
    %1472 = vmatpush1.msra.mxu0 0.0
    %1473 = vmatprep.subr.mxu0 0.0
    %1474 = vmatpush1.msra.mxu0 0.0
    %1475 = vmatprep.subr.mxu0 0.0
    %1476 = vmatpush1.msra.mxu0 0.0
    %1477 = vmatprep.subr.mxu0 0.0
    %1478 = vmatpush1.msra.mxu0 0.0
    %1479 = vmatprep.subr.mxu0 0.0
    %1480 = vmatpush1.msra.mxu0 0.0
    %1481 = vmatprep.subr.mxu0 0.0
    %1482 = vmatpush1.msra.mxu0 0.0
    %1483 = vmatprep.subr.mxu0 0.0
    %1484 = vmatpush1.msra.mxu0 0.0
    %1485 = vmatprep.subr.mxu0 0.0
    %1486 = vmatpush1.msra.mxu0 0.0
    %1487 = vmatprep.subr.mxu0 0.0
    %1488 = vmatpush1.msra.mxu0 0.0
    %1489 = vmatprep.subr.mxu0 0.0
    %1490 = vmatpush1.msra.mxu0 0.0
    %1491 = vmatprep.subr.mxu0 0.0
    %1492 = vmatpush1.msra.mxu0 0.0
    %1493 = vmatprep.subr.mxu0 0.0
    %1494 = vmatpush1.msra.mxu0 0.0
    %1495 = vmatprep.mubr.f32.mxu0 0.0
    %1496 = vmatmul.mubr.f32.gmra.mrb[0].mxu0 %v1150
    %v1497 = vpop.f32.mrb[0].mxu0
    %v1498 = vadd.f32 0.0, %v1497
    %v1499 = vpop.f32.mrb[0].mxu0
    %1500 = vdwg.mxu0
    %v1501 = vadd.f32 %v1413, %v1498
    %v1502 = vld [vmem:[#allocation16 + $0x1] ss:$0 sm:$0xff]
    %v1503 = vadd.f32 %v1501, %v1502
    %vm1504 = vcmp.gt.f32.partialorder %v1503, 0.0
    %v1505 = vmul.f32 %v1503, 0.01
    %v1506 = vsel %vm1504, %v1503, %v1505
    %v1507 = vld [vmem:[#allocation10] sm:$0xff]
    %v1508 = vld [vmem:[#allocation10 + $0x8] sm:$0xff]
    %v1509 = vld [vmem:[#allocation10 + $0x10] sm:$0xff]
    %v1510 = vld [vmem:[#allocation10 + $0x18] sm:$0xff]
    %v1511 = vld [vmem:[#allocation10 + $0x20] sm:$0xff]
    %v1512 = vld [vmem:[#allocation10 + $0x28] sm:$0xff]
    %v1513 = vld [vmem:[#allocation10 + $0x30] sm:$0xff]
    %v1514 = vld [vmem:[#allocation10 + $0x38] sm:$0xff]
    %v1515 = vld [vmem:[#allocation10 + $0x40] sm:$0xff]
    %v1516 = vld [vmem:[#allocation10 + $0x48] sm:$0xff]
    %v1517 = vld [vmem:[#allocation10 + $0x50] sm:$0xff]
    %v1518 = vld [vmem:[#allocation10 + $0x58] sm:$0xff]
    %v1519 = vld [vmem:[#allocation10 + $0x60] sm:$0xff]
    %v1520 = vld [vmem:[#allocation10 + $0x68] sm:$0xff]
    %v1521 = vld [vmem:[#allocation10 + $0x70] sm:$0xff]
    %v1522 = vld [vmem:[#allocation10 + $0x78] sm:$0xff]
    %s1523 = scalar_lea.vmem [#allocation10], 128
    %v1524 = vld [vmem:[%s1523] sm:$0xff]
    %v1525 = vld [vmem:[%s1523 + $0x8] sm:$0xff]
    %v1526 = vld [vmem:[%s1523 + $0x10] sm:$0xff]
    %v1527 = vld [vmem:[%s1523 + $0x18] sm:$0xff]
    %v1528 = vld [vmem:[%s1523 + $0x20] sm:$0xff]
    %v1529 = vld [vmem:[%s1523 + $0x28] sm:$0xff]
    %v1530 = vld [vmem:[%s1523 + $0x30] sm:$0xff]
    %v1531 = vld [vmem:[%s1523 + $0x38] sm:$0xff]
    %v1532 = vld [vmem:[%s1523 + $0x40] sm:$0xff]
    %v1533 = vld [vmem:[%s1523 + $0x48] sm:$0xff]
    %v1534 = vld [vmem:[%s1523 + $0x50] sm:$0xff]
    %v1535 = vld [vmem:[%s1523 + $0x58] sm:$0xff]
    %v1536 = vld [vmem:[%s1523 + $0x60] sm:$0xff]
    %v1537 = vld [vmem:[%s1523 + $0x68] sm:$0xff]
    %v1538 = vld [vmem:[%s1523 + $0x70] sm:$0xff]
    %v1539 = vld [vmem:[%s1523 + $0x78] sm:$0xff]
    %1540 = vmatprep.subr.mxu0 0.0
    %1541 = vmatpush1.msra.mxu0 %v1524
    %1542 = vmatprep.subr.mxu0 0.0
    %1543 = vmatpush1.msra.mxu0 %v1525
    %1544 = vmatprep.subr.mxu0 0.0
    %1545 = vmatpush1.msra.mxu0 %v1526
    %1546 = vmatprep.subr.mxu0 0.0
    %1547 = vmatpush1.msra.mxu0 %v1527
    %1548 = vmatprep.subr.mxu0 0.0
    %1549 = vmatpush1.msra.mxu0 %v1528
    %1550 = vmatprep.subr.mxu0 0.0
    %1551 = vmatpush1.msra.mxu0 %v1529
    %1552 = vmatprep.subr.mxu0 0.0
    %1553 = vmatpush1.msra.mxu0 %v1530
    %1554 = vmatprep.subr.mxu0 0.0
    %1555 = vmatpush1.msra.mxu0 %v1531
    %1556 = vmatprep.subr.mxu0 0.0
    %1557 = vmatpush1.msra.mxu0 %v1532
    %1558 = vmatprep.subr.mxu0 0.0
    %1559 = vmatpush1.msra.mxu0 %v1533
    %1560 = vmatprep.subr.mxu0 0.0
    %1561 = vmatpush1.msra.mxu0 %v1534
    %1562 = vmatprep.subr.mxu0 0.0
    %1563 = vmatpush1.msra.mxu0 %v1535
    %1564 = vmatprep.subr.mxu0 0.0
    %1565 = vmatpush1.msra.mxu0 %v1536
    %1566 = vmatprep.subr.mxu0 0.0
    %1567 = vmatpush1.msra.mxu0 %v1537
    %1568 = vmatprep.subr.mxu0 0.0
    %1569 = vmatpush1.msra.mxu0 %v1538
    %1570 = vmatprep.subr.mxu0 0.0
    %1571 = vmatpush1.msra.mxu0 %v1539
    %1572 = vmatprep.subr.mxu0 0.0
    %1573 = vmatpush1.msra.mxu0 0.0
    %1574 = vmatprep.subr.mxu0 0.0
    %1575 = vmatpush1.msra.mxu0 0.0
    %1576 = vmatprep.subr.mxu0 0.0
    %1577 = vmatpush1.msra.mxu0 0.0
    %1578 = vmatprep.subr.mxu0 0.0
    %1579 = vmatpush1.msra.mxu0 0.0
    %1580 = vmatprep.subr.mxu0 0.0
    %1581 = vmatpush1.msra.mxu0 0.0
    %1582 = vmatprep.subr.mxu0 0.0
    %1583 = vmatpush1.msra.mxu0 0.0
    %1584 = vmatprep.subr.mxu0 0.0
    %1585 = vmatpush1.msra.mxu0 0.0
    %1586 = vmatprep.subr.mxu0 0.0
    %1587 = vmatpush1.msra.mxu0 0.0
    %1588 = vmatprep.subr.mxu0 0.0
    %1589 = vmatpush1.msra.mxu0 0.0
    %1590 = vmatprep.subr.mxu0 0.0
    %1591 = vmatpush1.msra.mxu0 0.0
    %1592 = vmatprep.subr.mxu0 0.0
    %1593 = vmatpush1.msra.mxu0 0.0
    %1594 = vmatprep.subr.mxu0 0.0
    %1595 = vmatpush1.msra.mxu0 0.0
    %1596 = vmatprep.subr.mxu0 0.0
    %1597 = vmatpush1.msra.mxu0 0.0
    %1598 = vmatprep.subr.mxu0 0.0
    %1599 = vmatpush1.msra.mxu0 0.0
    %1600 = vmatprep.subr.mxu0 0.0
    %1601 = vmatpush1.msra.mxu0 0.0
    %1602 = vmatprep.subr.mxu0 0.0
    %1603 = vmatpush1.msra.mxu0 0.0
    %1604 = vmatprep.mubr.f32.mxu0 0.0
    %1605 = vmatmul.mubr.f32.gmra.mrb[0].mxu0 %v1140
    %v1606 = vpop.f32.mrb[0].mxu0
    %v1607 = vadd.f32 0.0, %v1606
    %v1608 = vpop.f32.mrb[0].mxu0
    %1609 = vdwg.mxu0
    %1610 = vmatprep.subr.mxu0 0.0
    %1611 = vmatpush1.msra.mxu0 %v1507
    %1612 = vmatprep.subr.mxu0 0.0
    %1613 = vmatpush1.msra.mxu0 %v1508
    %1614 = vmatprep.subr.mxu0 0.0
    %1615 = vmatpush1.msra.mxu0 %v1509
    %1616 = vmatprep.subr.mxu0 0.0
    %1617 = vmatpush1.msra.mxu0 %v1510
    %1618 = vmatprep.subr.mxu0 0.0
    %1619 = vmatpush1.msra.mxu0 %v1511
    %1620 = vmatprep.subr.mxu0 0.0
    %1621 = vmatpush1.msra.mxu0 %v1512
    %1622 = vmatprep.subr.mxu0 0.0
    %1623 = vmatpush1.msra.mxu0 %v1513
    %1624 = vmatprep.subr.mxu0 0.0
    %1625 = vmatpush1.msra.mxu0 %v1514
    %1626 = vmatprep.subr.mxu0 0.0
    %1627 = vmatpush1.msra.mxu0 %v1515
    %1628 = vmatprep.subr.mxu0 0.0
    %1629 = vmatpush1.msra.mxu0 %v1516
    %1630 = vmatprep.subr.mxu0 0.0
    %1631 = vmatpush1.msra.mxu0 %v1517
    %1632 = vmatprep.subr.mxu0 0.0
    %1633 = vmatpush1.msra.mxu0 %v1518
    %1634 = vmatprep.subr.mxu0 0.0
    %1635 = vmatpush1.msra.mxu0 %v1519
    %1636 = vmatprep.subr.mxu0 0.0
    %1637 = vmatpush1.msra.mxu0 %v1520
    %1638 = vmatprep.subr.mxu0 0.0
    %1639 = vmatpush1.msra.mxu0 %v1521
    %1640 = vmatprep.subr.mxu0 0.0
    %1641 = vmatpush1.msra.mxu0 %v1522
    %1642 = vmatprep.subr.mxu0 0.0
    %1643 = vmatpush1.msra.mxu0 0.0
    %1644 = vmatprep.subr.mxu0 0.0
    %1645 = vmatpush1.msra.mxu0 0.0
    %1646 = vmatprep.subr.mxu0 0.0
    %1647 = vmatpush1.msra.mxu0 0.0
    %1648 = vmatprep.subr.mxu0 0.0
    %1649 = vmatpush1.msra.mxu0 0.0
    %1650 = vmatprep.subr.mxu0 0.0
    %1651 = vmatpush1.msra.mxu0 0.0
    %1652 = vmatprep.subr.mxu0 0.0
    %1653 = vmatpush1.msra.mxu0 0.0
    %1654 = vmatprep.subr.mxu0 0.0
    %1655 = vmatpush1.msra.mxu0 0.0
    %1656 = vmatprep.subr.mxu0 0.0
    %1657 = vmatpush1.msra.mxu0 0.0
    %1658 = vmatprep.subr.mxu0 0.0
    %1659 = vmatpush1.msra.mxu0 0.0
    %1660 = vmatprep.subr.mxu0 0.0
    %1661 = vmatpush1.msra.mxu0 0.0
    %1662 = vmatprep.subr.mxu0 0.0
    %1663 = vmatpush1.msra.mxu0 0.0
    %1664 = vmatprep.subr.mxu0 0.0
    %1665 = vmatpush1.msra.mxu0 0.0
    %1666 = vmatprep.subr.mxu0 0.0
    %1667 = vmatpush1.msra.mxu0 0.0
    %1668 = vmatprep.subr.mxu0 0.0
    %1669 = vmatpush1.msra.mxu0 0.0
    %1670 = vmatprep.subr.mxu0 0.0
    %1671 = vmatpush1.msra.mxu0 0.0
    %1672 = vmatprep.subr.mxu0 0.0
    %1673 = vmatpush1.msra.mxu0 0.0
    %1674 = vmatprep.mubr.f32.mxu0 0.0
    %1675 = vmatmul.mubr.f32.gmra.mrb[0].mxu0 %v1135
    %v1676 = vpop.f32.mrb[0].mxu0
    %v1677 = vadd.f32 %v1607, %v1676
    %v1678 = vpop.f32.mrb[0].mxu0
    %1679 = vdwg.mxu0
    %v1680 = vld [vmem:[#allocation16 + $0x2] ss:$0 sm:$0xff]
    %v1681 = vadd.f32 %v1677, %v1680
    %vm1682 = vcmp.gt.f32.partialorder %v1681, 0.0
    %v1683 = vmul.f32 %v1681, 0.01
    %v1684 = vsel %vm1682, %v1681, %v1683
    %1685 = vmatprep.subr.mxu0 0.0
    %1686 = vmatpush1.msra.mxu0 %v1524
    %1687 = vmatprep.subr.mxu0 0.0
    %1688 = vmatpush1.msra.mxu0 %v1525
    %1689 = vmatprep.subr.mxu0 0.0
    %1690 = vmatpush1.msra.mxu0 %v1526
    %1691 = vmatprep.subr.mxu0 0.0
    %1692 = vmatpush1.msra.mxu0 %v1527
    %1693 = vmatprep.subr.mxu0 0.0
    %1694 = vmatpush1.msra.mxu0 %v1528
    %1695 = vmatprep.subr.mxu0 0.0
    %1696 = vmatpush1.msra.mxu0 %v1529
    %1697 = vmatprep.subr.mxu0 0.0
    %1698 = vmatpush1.msra.mxu0 %v1530
    %1699 = vmatprep.subr.mxu0 0.0
    %1700 = vmatpush1.msra.mxu0 %v1531
    %1701 = vmatprep.subr.mxu0 0.0
    %1702 = vmatpush1.msra.mxu0 %v1532
    %1703 = vmatprep.subr.mxu0 0.0
    %1704 = vmatpush1.msra.mxu0 %v1533
    %1705 = vmatprep.subr.mxu0 0.0
    %1706 = vmatpush1.msra.mxu0 %v1534
    %1707 = vmatprep.subr.mxu0 0.0
    %1708 = vmatpush1.msra.mxu0 %v1535
    %1709 = vmatprep.subr.mxu0 0.0
    %1710 = vmatpush1.msra.mxu0 %v1536
    %1711 = vmatprep.subr.mxu0 0.0
    %1712 = vmatpush1.msra.mxu0 %v1537
    %1713 = vmatprep.subr.mxu0 0.0
    %1714 = vmatpush1.msra.mxu0 %v1538
    %1715 = vmatprep.subr.mxu0 0.0
    %1716 = vmatpush1.msra.mxu0 %v1539
    %1717 = vmatprep.subr.mxu0 0.0
    %1718 = vmatpush1.msra.mxu0 0.0
    %1719 = vmatprep.subr.mxu0 0.0
    %1720 = vmatpush1.msra.mxu0 0.0
    %1721 = vmatprep.subr.mxu0 0.0
    %1722 = vmatpush1.msra.mxu0 0.0
    %1723 = vmatprep.subr.mxu0 0.0
    %1724 = vmatpush1.msra.mxu0 0.0
    %1725 = vmatprep.subr.mxu0 0.0
    %1726 = vmatpush1.msra.mxu0 0.0
    %1727 = vmatprep.subr.mxu0 0.0
    %1728 = vmatpush1.msra.mxu0 0.0
    %1729 = vmatprep.subr.mxu0 0.0
    %1730 = vmatpush1.msra.mxu0 0.0
    %1731 = vmatprep.subr.mxu0 0.0
    %1732 = vmatpush1.msra.mxu0 0.0
    %1733 = vmatprep.subr.mxu0 0.0
    %1734 = vmatpush1.msra.mxu0 0.0
    %1735 = vmatprep.subr.mxu0 0.0
    %1736 = vmatpush1.msra.mxu0 0.0
    %1737 = vmatprep.subr.mxu0 0.0
    %1738 = vmatpush1.msra.mxu0 0.0
    %1739 = vmatprep.subr.mxu0 0.0
    %1740 = vmatpush1.msra.mxu0 0.0
    %1741 = vmatprep.subr.mxu0 0.0
    %1742 = vmatpush1.msra.mxu0 0.0
    %1743 = vmatprep.subr.mxu0 0.0
    %1744 = vmatpush1.msra.mxu0 0.0
    %1745 = vmatprep.subr.mxu0 0.0
    %1746 = vmatpush1.msra.mxu0 0.0
    %1747 = vmatprep.subr.mxu0 0.0
    %1748 = vmatpush1.msra.mxu0 0.0
    %1749 = vmatprep.mubr.f32.mxu0 0.0
    %1750 = vmatmul.mubr.f32.gmra.mrb[0].mxu0 %v1150
    %v1751 = vpop.f32.mrb[0].mxu0
    %v1752 = vadd.f32 0.0, %v1751
    %v1753 = vpop.f32.mrb[0].mxu0
    %1754 = vdwg.mxu0
    %1755 = vmatprep.subr.mxu0 0.0
    %1756 = vmatpush1.msra.mxu0 %v1507
    %1757 = vmatprep.subr.mxu0 0.0
    %1758 = vmatpush1.msra.mxu0 %v1508
    %1759 = vmatprep.subr.mxu0 0.0
    %1760 = vmatpush1.msra.mxu0 %v1509
    %1761 = vmatprep.subr.mxu0 0.0
    %1762 = vmatpush1.msra.mxu0 %v1510
    %1763 = vmatprep.subr.mxu0 0.0
    %1764 = vmatpush1.msra.mxu0 %v1511
    %1765 = vmatprep.subr.mxu0 0.0
    %1766 = vmatpush1.msra.mxu0 %v1512
    %1767 = vmatprep.subr.mxu0 0.0
    %1768 = vmatpush1.msra.mxu0 %v1513
    %1769 = vmatprep.subr.mxu0 0.0
    %1770 = vmatpush1.msra.mxu0 %v1514
    %1771 = vmatprep.subr.mxu0 0.0
    %1772 = vmatpush1.msra.mxu0 %v1515
    %1773 = vmatprep.subr.mxu0 0.0
    %1774 = vmatpush1.msra.mxu0 %v1516
    %1775 = vmatprep.subr.mxu0 0.0
    %1776 = vmatpush1.msra.mxu0 %v1517
    %1777 = vmatprep.subr.mxu0 0.0
    %1778 = vmatpush1.msra.mxu0 %v1518
    %1779 = vmatprep.subr.mxu0 0.0
    %1780 = vmatpush1.msra.mxu0 %v1519
    %1781 = vmatprep.subr.mxu0 0.0
    %1782 = vmatpush1.msra.mxu0 %v1520
    %1783 = vmatprep.subr.mxu0 0.0
    %1784 = vmatpush1.msra.mxu0 %v1521
    %1785 = vmatprep.subr.mxu0 0.0
    %1786 = vmatpush1.msra.mxu0 %v1522
    %1787 = vmatprep.subr.mxu0 0.0
    %1788 = vmatpush1.msra.mxu0 0.0
    %1789 = vmatprep.subr.mxu0 0.0
    %1790 = vmatpush1.msra.mxu0 0.0
    %1791 = vmatprep.subr.mxu0 0.0
    %1792 = vmatpush1.msra.mxu0 0.0
    %1793 = vmatprep.subr.mxu0 0.0
    %1794 = vmatpush1.msra.mxu0 0.0
    %1795 = vmatprep.subr.mxu0 0.0
    %1796 = vmatpush1.msra.mxu0 0.0
    %1797 = vmatprep.subr.mxu0 0.0
    %1798 = vmatpush1.msra.mxu0 0.0
    %1799 = vmatprep.subr.mxu0 0.0
    %1800 = vmatpush1.msra.mxu0 0.0
    %1801 = vmatprep.subr.mxu0 0.0
    %1802 = vmatpush1.msra.mxu0 0.0
    %1803 = vmatprep.subr.mxu0 0.0
    %1804 = vmatpush1.msra.mxu0 0.0
    %1805 = vmatprep.subr.mxu0 0.0
    %1806 = vmatpush1.msra.mxu0 0.0
    %1807 = vmatprep.subr.mxu0 0.0
    %1808 = vmatpush1.msra.mxu0 0.0
    %1809 = vmatprep.subr.mxu0 0.0
    %1810 = vmatpush1.msra.mxu0 0.0
    %1811 = vmatprep.subr.mxu0 0.0
    %1812 = vmatpush1.msra.mxu0 0.0
    %1813 = vmatprep.subr.mxu0 0.0
    %1814 = vmatpush1.msra.mxu0 0.0
    %1815 = vmatprep.subr.mxu0 0.0
    %1816 = vmatpush1.msra.mxu0 0.0
    %1817 = vmatprep.subr.mxu0 0.0
    %1818 = vmatpush1.msra.mxu0 0.0
    %1819 = vmatprep.mubr.f32.mxu0 0.0
    %1820 = vmatmul.mubr.f32.gmra.mrb[0].mxu0 %v1145
    %v1821 = vpop.f32.mrb[0].mxu0
    %v1822 = vadd.f32 %v1752, %v1821
    %v1823 = vpop.f32.mrb[0].mxu0
    %1824 = vdwg.mxu0
    %v1825 = vadd.f32 %v1822, %v1680
    %vm1826 = vcmp.gt.f32.partialorder %v1825, 0.0
    %v1827 = vmul.f32 %v1825, 0.01
    %v1828 = vsel %vm1826, %v1825, %v1827
    %v1829 = vld [vmem:[#allocation11] sm:$0xff]
    %v1830 = vld [vmem:[#allocation11 + $0x8] sm:$0xff]
    %v1831 = vld [vmem:[#allocation11 + $0x10] sm:$0xff]
    %v1832 = vld [vmem:[#allocation11 + $0x18] sm:$0xff]
    %v1833 = vld [vmem:[#allocation11 + $0x20] sm:$0xff]
    %v1834 = vld [vmem:[#allocation11 + $0x28] sm:$0xff]
    %v1835 = vld [vmem:[#allocation11 + $0x30] sm:$0xff]
    %v1836 = vld [vmem:[#allocation11 + $0x38] sm:$0xff]
    %v1837 = vld [vmem:[#allocation11 + $0x40] sm:$0xff]
    %v1838 = vld [vmem:[#allocation11 + $0x48] sm:$0xff]
    %v1839 = vld [vmem:[#allocation11 + $0x50] sm:$0xff]
    %v1840 = vld [vmem:[#allocation11 + $0x58] sm:$0xff]
    %v1841 = vld [vmem:[#allocation11 + $0x60] sm:$0xff]
    %v1842 = vld [vmem:[#allocation11 + $0x68] sm:$0xff]
    %v1843 = vld [vmem:[#allocation11 + $0x70] sm:$0xff]
    %v1844 = vld [vmem:[#allocation11 + $0x78] sm:$0xff]
    %s1845 = scalar_lea.vmem [#allocation11], 128
    %v1846 = vld [vmem:[%s1845] sm:$0xff]
    %v1847 = vld [vmem:[%s1845 + $0x8] sm:$0xff]
    %v1848 = vld [vmem:[%s1845 + $0x10] sm:$0xff]
    %v1849 = vld [vmem:[%s1845 + $0x18] sm:$0xff]
    %v1850 = vld [vmem:[%s1845 + $0x20] sm:$0xff]
    %v1851 = vld [vmem:[%s1845 + $0x28] sm:$0xff]
    %v1852 = vld [vmem:[%s1845 + $0x30] sm:$0xff]
    %v1853 = vld [vmem:[%s1845 + $0x38] sm:$0xff]
    %v1854 = vld [vmem:[%s1845 + $0x40] sm:$0xff]
    %v1855 = vld [vmem:[%s1845 + $0x48] sm:$0xff]
    %v1856 = vld [vmem:[%s1845 + $0x50] sm:$0xff]
    %v1857 = vld [vmem:[%s1845 + $0x58] sm:$0xff]
    %v1858 = vld [vmem:[%s1845 + $0x60] sm:$0xff]
    %v1859 = vld [vmem:[%s1845 + $0x68] sm:$0xff]
    %v1860 = vld [vmem:[%s1845 + $0x70] sm:$0xff]
    %v1861 = vld [vmem:[%s1845 + $0x78] sm:$0xff]
    %1862 = vmatprep.subr.mxu0 0.0
    %1863 = vmatpush1.msra.mxu0 %v1846
    %1864 = vmatprep.subr.mxu0 0.0
    %1865 = vmatpush1.msra.mxu0 %v1847
    %1866 = vmatprep.subr.mxu0 0.0
    %1867 = vmatpush1.msra.mxu0 %v1848
    %1868 = vmatprep.subr.mxu0 0.0
    %1869 = vmatpush1.msra.mxu0 %v1849
    %1870 = vmatprep.subr.mxu0 0.0
    %1871 = vmatpush1.msra.mxu0 %v1850
    %1872 = vmatprep.subr.mxu0 0.0
    %1873 = vmatpush1.msra.mxu0 %v1851
    %1874 = vmatprep.subr.mxu0 0.0
    %1875 = vmatpush1.msra.mxu0 %v1852
    %1876 = vmatprep.subr.mxu0 0.0
    %1877 = vmatpush1.msra.mxu0 %v1853
    %1878 = vmatprep.subr.mxu0 0.0
    %1879 = vmatpush1.msra.mxu0 %v1854
    %1880 = vmatprep.subr.mxu0 0.0
    %1881 = vmatpush1.msra.mxu0 %v1855
    %1882 = vmatprep.subr.mxu0 0.0
    %1883 = vmatpush1.msra.mxu0 %v1856
    %1884 = vmatprep.subr.mxu0 0.0
    %1885 = vmatpush1.msra.mxu0 %v1857
    %1886 = vmatprep.subr.mxu0 0.0
    %1887 = vmatpush1.msra.mxu0 %v1858
    %1888 = vmatprep.subr.mxu0 0.0
    %1889 = vmatpush1.msra.mxu0 %v1859
    %1890 = vmatprep.subr.mxu0 0.0
    %1891 = vmatpush1.msra.mxu0 %v1860
    %1892 = vmatprep.subr.mxu0 0.0
    %1893 = vmatpush1.msra.mxu0 %v1861
    %1894 = vmatprep.subr.mxu0 0.0
    %1895 = vmatpush1.msra.mxu0 0.0
    %1896 = vmatprep.subr.mxu0 0.0
    %1897 = vmatpush1.msra.mxu0 0.0
    %1898 = vmatprep.subr.mxu0 0.0
    %1899 = vmatpush1.msra.mxu0 0.0
    %1900 = vmatprep.subr.mxu0 0.0
    %1901 = vmatpush1.msra.mxu0 0.0
    %1902 = vmatprep.subr.mxu0 0.0
    %1903 = vmatpush1.msra.mxu0 0.0
    %1904 = vmatprep.subr.mxu0 0.0
    %1905 = vmatpush1.msra.mxu0 0.0
    %1906 = vmatprep.subr.mxu0 0.0
    %1907 = vmatpush1.msra.mxu0 0.0
    %1908 = vmatprep.subr.mxu0 0.0
    %1909 = vmatpush1.msra.mxu0 0.0
    %1910 = vmatprep.subr.mxu0 0.0
    %1911 = vmatpush1.msra.mxu0 0.0
    %1912 = vmatprep.subr.mxu0 0.0
    %1913 = vmatpush1.msra.mxu0 0.0
    %1914 = vmatprep.subr.mxu0 0.0
    %1915 = vmatpush1.msra.mxu0 0.0
    %1916 = vmatprep.subr.mxu0 0.0
    %1917 = vmatpush1.msra.mxu0 0.0
    %1918 = vmatprep.subr.mxu0 0.0
    %1919 = vmatpush1.msra.mxu0 0.0
    %1920 = vmatprep.subr.mxu0 0.0
    %1921 = vmatpush1.msra.mxu0 0.0
    %1922 = vmatprep.subr.mxu0 0.0
    %1923 = vmatpush1.msra.mxu0 0.0
    %1924 = vmatprep.subr.mxu0 0.0
    %1925 = vmatpush1.msra.mxu0 0.0
    %1926 = vmatprep.mubr.f32.mxu0 0.0
    %1927 = vmatmul.mubr.f32.gmra.mrb[0].mxu0 %v1684
    %v1928 = vpop.f32.mrb[0].mxu0
    %v1929 = vadd.f32 0.0, %v1928
    %v1930 = vpop.f32.mrb[0].mxu0
    %1931 = vdwg.mxu0
    %1932 = vmatprep.subr.mxu0 0.0
    %1933 = vmatpush1.msra.mxu0 %v1829
    %1934 = vmatprep.subr.mxu0 0.0
    %1935 = vmatpush1.msra.mxu0 %v1830
    %1936 = vmatprep.subr.mxu0 0.0
    %1937 = vmatpush1.msra.mxu0 %v1831
    %1938 = vmatprep.subr.mxu0 0.0
    %1939 = vmatpush1.msra.mxu0 %v1832
    %1940 = vmatprep.subr.mxu0 0.0
    %1941 = vmatpush1.msra.mxu0 %v1833
    %1942 = vmatprep.subr.mxu0 0.0
    %1943 = vmatpush1.msra.mxu0 %v1834
    %1944 = vmatprep.subr.mxu0 0.0
    %1945 = vmatpush1.msra.mxu0 %v1835
    %1946 = vmatprep.subr.mxu0 0.0
    %1947 = vmatpush1.msra.mxu0 %v1836
    %1948 = vmatprep.subr.mxu0 0.0
    %1949 = vmatpush1.msra.mxu0 %v1837
    %1950 = vmatprep.subr.mxu0 0.0
    %1951 = vmatpush1.msra.mxu0 %v1838
    %1952 = vmatprep.subr.mxu0 0.0
    %1953 = vmatpush1.msra.mxu0 %v1839
    %1954 = vmatprep.subr.mxu0 0.0
    %1955 = vmatpush1.msra.mxu0 %v1840
    %1956 = vmatprep.subr.mxu0 0.0
    %1957 = vmatpush1.msra.mxu0 %v1841
    %1958 = vmatprep.subr.mxu0 0.0
    %1959 = vmatpush1.msra.mxu0 %v1842
    %1960 = vmatprep.subr.mxu0 0.0
    %1961 = vmatpush1.msra.mxu0 %v1843
    %1962 = vmatprep.subr.mxu0 0.0
    %1963 = vmatpush1.msra.mxu0 %v1844
    %1964 = vmatprep.subr.mxu0 0.0
    %1965 = vmatpush1.msra.mxu0 0.0
    %1966 = vmatprep.subr.mxu0 0.0
    %1967 = vmatpush1.msra.mxu0 0.0
    %1968 = vmatprep.subr.mxu0 0.0
    %1969 = vmatpush1.msra.mxu0 0.0
    %1970 = vmatprep.subr.mxu0 0.0
    %1971 = vmatpush1.msra.mxu0 0.0
    %1972 = vmatprep.subr.mxu0 0.0
    %1973 = vmatpush1.msra.mxu0 0.0
    %1974 = vmatprep.subr.mxu0 0.0
    %1975 = vmatpush1.msra.mxu0 0.0
    %1976 = vmatprep.subr.mxu0 0.0
    %1977 = vmatpush1.msra.mxu0 0.0
    %1978 = vmatprep.subr.mxu0 0.0
    %1979 = vmatpush1.msra.mxu0 0.0
    %1980 = vmatprep.subr.mxu0 0.0
    %1981 = vmatpush1.msra.mxu0 0.0
    %1982 = vmatprep.subr.mxu0 0.0
    %1983 = vmatpush1.msra.mxu0 0.0
    %1984 = vmatprep.subr.mxu0 0.0
    %1985 = vmatpush1.msra.mxu0 0.0
    %1986 = vmatprep.subr.mxu0 0.0
    %1987 = vmatpush1.msra.mxu0 0.0
    %1988 = vmatprep.subr.mxu0 0.0
    %1989 = vmatpush1.msra.mxu0 0.0
    %1990 = vmatprep.subr.mxu0 0.0
    %1991 = vmatpush1.msra.mxu0 0.0
    %1992 = vmatprep.subr.mxu0 0.0
    %1993 = vmatpush1.msra.mxu0 0.0
    %1994 = vmatprep.subr.mxu0 0.0
    %1995 = vmatpush1.msra.mxu0 0.0
    %1996 = vmatprep.mubr.f32.mxu0 0.0
    %1997 = vmatmul.mubr.f32.gmra.mrb[0].mxu0 %v1506
    %v1998 = vpop.f32.mrb[0].mxu0
    %v1999 = vadd.f32 %v1929, %v1998
    %v2000 = vpop.f32.mrb[0].mxu0
    %2001 = vdwg.mxu0
    %s2002 = scalar_lea.vmem [#allocation11], 256
    %v2003 = vld [vmem:[%s2002] sm:$0xff]
    %v2004 = vld [vmem:[%s2002 + $0x8] sm:$0xff]
    %v2005 = vld [vmem:[%s2002 + $0x10] sm:$0xff]
    %v2006 = vld [vmem:[%s2002 + $0x18] sm:$0xff]
    %v2007 = vld [vmem:[%s2002 + $0x20] sm:$0xff]
    %v2008 = vld [vmem:[%s2002 + $0x28] sm:$0xff]
    %v2009 = vld [vmem:[%s2002 + $0x30] sm:$0xff]
    %v2010 = vld [vmem:[%s2002 + $0x38] sm:$0xff]
    %v2011 = vld [vmem:[%s2002 + $0x40] sm:$0xff]
    %v2012 = vld [vmem:[%s2002 + $0x48] sm:$0xff]
    %v2013 = vld [vmem:[%s2002 + $0x50] sm:$0xff]
    %v2014 = vld [vmem:[%s2002 + $0x58] sm:$0xff]
    %v2015 = vld [vmem:[%s2002 + $0x60] sm:$0xff]
    %v2016 = vld [vmem:[%s2002 + $0x68] sm:$0xff]
    %v2017 = vld [vmem:[%s2002 + $0x70] sm:$0xff]
    %v2018 = vld [vmem:[%s2002 + $0x78] sm:$0xff]
    %2019 = vmatprep.subr.mxu0 0.0
    %2020 = vmatpush1.msra.mxu0 %v2003
    %2021 = vmatprep.subr.mxu0 0.0
    %2022 = vmatpush1.msra.mxu0 %v2004
    %2023 = vmatprep.subr.mxu0 0.0
    %2024 = vmatpush1.msra.mxu0 %v2005
    %2025 = vmatprep.subr.mxu0 0.0
    %2026 = vmatpush1.msra.mxu0 %v2006
    %2027 = vmatprep.subr.mxu0 0.0
    %2028 = vmatpush1.msra.mxu0 %v2007
    %2029 = vmatprep.subr.mxu0 0.0
    %2030 = vmatpush1.msra.mxu0 %v2008
    %2031 = vmatprep.subr.mxu0 0.0
    %2032 = vmatpush1.msra.mxu0 %v2009
    %2033 = vmatprep.subr.mxu0 0.0
    %2034 = vmatpush1.msra.mxu0 %v2010
    %2035 = vmatprep.subr.mxu0 0.0
    %2036 = vmatpush1.msra.mxu0 %v2011
    %2037 = vmatprep.subr.mxu0 0.0
    %2038 = vmatpush1.msra.mxu0 %v2012
    %2039 = vmatprep.subr.mxu0 0.0
    %2040 = vmatpush1.msra.mxu0 %v2013
    %2041 = vmatprep.subr.mxu0 0.0
    %2042 = vmatpush1.msra.mxu0 %v2014
    %2043 = vmatprep.subr.mxu0 0.0
    %2044 = vmatpush1.msra.mxu0 %v2015
    %2045 = vmatprep.subr.mxu0 0.0
    %2046 = vmatpush1.msra.mxu0 %v2016
    %2047 = vmatprep.subr.mxu0 0.0
    %2048 = vmatpush1.msra.mxu0 %v2017
    %2049 = vmatprep.subr.mxu0 0.0
    %2050 = vmatpush1.msra.mxu0 %v2018
    %2051 = vmatprep.subr.mxu0 0.0
    %2052 = vmatpush1.msra.mxu0 0.0
    %2053 = vmatprep.subr.mxu0 0.0
    %2054 = vmatpush1.msra.mxu0 0.0
    %2055 = vmatprep.subr.mxu0 0.0
    %2056 = vmatpush1.msra.mxu0 0.0
    %2057 = vmatprep.subr.mxu0 0.0
    %2058 = vmatpush1.msra.mxu0 0.0
    %2059 = vmatprep.subr.mxu0 0.0
    %2060 = vmatpush1.msra.mxu0 0.0
    %2061 = vmatprep.subr.mxu0 0.0
    %2062 = vmatpush1.msra.mxu0 0.0
    %2063 = vmatprep.subr.mxu0 0.0
    %2064 = vmatpush1.msra.mxu0 0.0
    %2065 = vmatprep.subr.mxu0 0.0
    %2066 = vmatpush1.msra.mxu0 0.0
    %2067 = vmatprep.subr.mxu0 0.0
    %2068 = vmatpush1.msra.mxu0 0.0
    %2069 = vmatprep.subr.mxu0 0.0
    %2070 = vmatpush1.msra.mxu0 0.0
    %2071 = vmatprep.subr.mxu0 0.0
    %2072 = vmatpush1.msra.mxu0 0.0
    %2073 = vmatprep.subr.mxu0 0.0
    %2074 = vmatpush1.msra.mxu0 0.0
    %2075 = vmatprep.subr.mxu0 0.0
    %2076 = vmatpush1.msra.mxu0 0.0
    %2077 = vmatprep.subr.mxu0 0.0
    %2078 = vmatpush1.msra.mxu0 0.0
    %2079 = vmatprep.subr.mxu0 0.0
    %2080 = vmatpush1.msra.mxu0 0.0
    %2081 = vmatprep.subr.mxu0 0.0
    %2082 = vmatpush1.msra.mxu0 0.0
    %2083 = vmatprep.mubr.f32.mxu0 0.0
    %2084 = vmatmul.mubr.f32.gmra.mrb[0].mxu0 %v1828
    %v2085 = vpop.f32.mrb[0].mxu0
    %v2086 = vadd.f32 0.0, %v2085
    %v2087 = vpop.f32.mrb[0].mxu0
    %2088 = vdwg.mxu0
    %v2089 = vadd.f32 %v1999, %v2086
    %v2090 = vld [vmem:[#allocation16 + $0x3] ss:$0 sm:$0xff]
    %v2091 = vadd.f32 %v2089, %v2090
    %vm2092 = vcmp.gt.f32.partialorder %v2091, 0.0
    %v2093 = vmul.f32 %v2091, 0.01
    %v2094 = vsel %vm2092, %v2091, %v2093
    %v2095 = vld [vmem:[#allocation13] sm:$0xff]
    %v2096 = vld [vmem:[#allocation13 + $0x8] sm:$0xff]
    %v2097 = vld [vmem:[#allocation13 + $0x10] sm:$0xff]
    %v2098 = vld [vmem:[#allocation13 + $0x18] sm:$0xff]
    %v2099 = vld [vmem:[#allocation13 + $0x20] sm:$0xff]
    %v2100 = vld [vmem:[#allocation13 + $0x28] sm:$0xff]
    %v2101 = vld [vmem:[#allocation13 + $0x30] sm:$0xff]
    %v2102 = vld [vmem:[#allocation13 + $0x38] sm:$0xff]
    %v2103 = vld [vmem:[#allocation13 + $0x40] sm:$0xff]
    %v2104 = vld [vmem:[#allocation13 + $0x48] sm:$0xff]
    %v2105 = vld [vmem:[#allocation13 + $0x50] sm:$0xff]
    %v2106 = vld [vmem:[#allocation13 + $0x58] sm:$0xff]
    %v2107 = vld [vmem:[#allocation13 + $0x60] sm:$0xff]
    %v2108 = vld [vmem:[#allocation13 + $0x68] sm:$0xff]
    %v2109 = vld [vmem:[#allocation13 + $0x70] sm:$0xff]
    %v2110 = vld [vmem:[#allocation13 + $0x78] sm:$0xff]
    %v2111 = vld [vmem:[#allocation16 + $0x4] ss:$0 sm:$0xff]
    %2112 = vmatprep.subr.mxu0 0.0
    %2113 = vmatpush1.msra.mxu0 %v2095
    %2114 = vmatprep.subr.mxu0 0.0
    %2115 = vmatpush1.msra.mxu0 %v2096
    %2116 = vmatprep.subr.mxu0 0.0
    %2117 = vmatpush1.msra.mxu0 %v2097
    %2118 = vmatprep.subr.mxu0 0.0
    %2119 = vmatpush1.msra.mxu0 %v2098
    %2120 = vmatprep.subr.mxu0 0.0
    %2121 = vmatpush1.msra.mxu0 %v2099
    %2122 = vmatprep.subr.mxu0 0.0
    %2123 = vmatpush1.msra.mxu0 %v2100
    %2124 = vmatprep.subr.mxu0 0.0
    %2125 = vmatpush1.msra.mxu0 %v2101
    %2126 = vmatprep.subr.mxu0 0.0
    %2127 = vmatpush1.msra.mxu0 %v2102
    %2128 = vmatprep.subr.mxu0 0.0
    %2129 = vmatpush1.msra.mxu0 %v2103
    %2130 = vmatprep.subr.mxu0 0.0
    %2131 = vmatpush1.msra.mxu0 %v2104
    %2132 = vmatprep.subr.mxu0 0.0
    %2133 = vmatpush1.msra.mxu0 %v2105
    %2134 = vmatprep.subr.mxu0 0.0
    %2135 = vmatpush1.msra.mxu0 %v2106
    %2136 = vmatprep.subr.mxu0 0.0
    %2137 = vmatpush1.msra.mxu0 %v2107
    %2138 = vmatprep.subr.mxu0 0.0
    %2139 = vmatpush1.msra.mxu0 %v2108
    %2140 = vmatprep.subr.mxu0 0.0
    %2141 = vmatpush1.msra.mxu0 %v2109
    %2142 = vmatprep.subr.mxu0 0.0
    %2143 = vmatpush1.msra.mxu0 %v2110
    %2144 = vmatprep.subr.mxu0 0.0
    %2145 = vmatpush1.msra.mxu0 0.0
    %2146 = vmatprep.subr.mxu0 0.0
    %2147 = vmatpush1.msra.mxu0 0.0
    %2148 = vmatprep.subr.mxu0 0.0
    %2149 = vmatpush1.msra.mxu0 0.0
    %2150 = vmatprep.subr.mxu0 0.0
    %2151 = vmatpush1.msra.mxu0 0.0
    %2152 = vmatprep.subr.mxu0 0.0
    %2153 = vmatpush1.msra.mxu0 0.0
    %2154 = vmatprep.subr.mxu0 0.0
    %2155 = vmatpush1.msra.mxu0 0.0
    %2156 = vmatprep.subr.mxu0 0.0
    %2157 = vmatpush1.msra.mxu0 0.0
    %2158 = vmatprep.subr.mxu0 0.0
    %2159 = vmatpush1.msra.mxu0 0.0
    %2160 = vmatprep.subr.mxu0 0.0
    %2161 = vmatpush1.msra.mxu0 0.0
    %2162 = vmatprep.subr.mxu0 0.0
    %2163 = vmatpush1.msra.mxu0 0.0
    %2164 = vmatprep.subr.mxu0 0.0
    %2165 = vmatpush1.msra.mxu0 0.0
    %2166 = vmatprep.subr.mxu0 0.0
    %2167 = vmatpush1.msra.mxu0 0.0
    %2168 = vmatprep.subr.mxu0 0.0
    %2169 = vmatpush1.msra.mxu0 0.0
    %2170 = vmatprep.subr.mxu0 0.0
    %2171 = vmatpush1.msra.mxu0 0.0
    %2172 = vmatprep.subr.mxu0 0.0
    %2173 = vmatpush1.msra.mxu0 0.0
    %2174 = vmatprep.subr.mxu0 0.0
    %2175 = vmatpush1.msra.mxu0 0.0
    %2176 = vmatprep.mubr.f32.mxu0 0.0
    %2177 = vmatmul.mubr.f32.gmra.mrb[0].mxu0 %v2094
    %v2178 = vpop.f32.mrb[0].mxu0
    %v2179 = vadd.f32 %v2111, %v2178
    %v2180 = vpop.f32.mrb[0].mxu0
    %2181 = vdwg.mxu0
    %v2182 = vmax.f32 %v2179, 0.0
    %v2183 = vld [vmem:[#allocation14] sm:$0xff]
    %v2184 = vld [vmem:[#allocation14 + $0x8] sm:$0xff]
    %v2185 = vld [vmem:[#allocation14 + $0x10] sm:$0xff]
    %v2186 = vld [vmem:[#allocation14 + $0x18] sm:$0xff]
    %v2187 = vld [vmem:[#allocation14 + $0x20] sm:$0xff]
    %v2188 = vld [vmem:[#allocation14 + $0x28] sm:$0xff]
    %v2189 = vld [vmem:[#allocation14 + $0x30] sm:$0xff]
    %v2190 = vld [vmem:[#allocation14 + $0x38] sm:$0xff]
    %v2191 = vld [vmem:[#allocation14 + $0x40] sm:$0xff]
    %v2192 = vld [vmem:[#allocation14 + $0x48] sm:$0xff]
    %v2193 = vld [vmem:[#allocation14 + $0x50] sm:$0xff]
    %v2194 = vld [vmem:[#allocation14 + $0x58] sm:$0xff]
    %v2195 = vld [vmem:[#allocation14 + $0x60] sm:$0xff]
    %v2196 = vld [vmem:[#allocation14 + $0x68] sm:$0xff]
    %v2197 = vld [vmem:[#allocation14 + $0x70] sm:$0xff]
    %v2198 = vld [vmem:[#allocation14 + $0x78] sm:$0xff]
    %v2199 = vld [vmem:[#allocation16 + $0x5] ss:$0 sm:$0xff]
    %2200 = vmatprep.subr.mxu0 0.0
    %2201 = vmatpush1.msra.mxu0 %v2183
    %2202 = vmatprep.subr.mxu0 0.0
    %2203 = vmatpush1.msra.mxu0 %v2184
    %2204 = vmatprep.subr.mxu0 0.0
    %2205 = vmatpush1.msra.mxu0 %v2185
    %2206 = vmatprep.subr.mxu0 0.0
    %2207 = vmatpush1.msra.mxu0 %v2186
    %2208 = vmatprep.subr.mxu0 0.0
    %2209 = vmatpush1.msra.mxu0 %v2187
    %2210 = vmatprep.subr.mxu0 0.0
    %2211 = vmatpush1.msra.mxu0 %v2188
    %2212 = vmatprep.subr.mxu0 0.0
    %2213 = vmatpush1.msra.mxu0 %v2189
    %2214 = vmatprep.subr.mxu0 0.0
    %2215 = vmatpush1.msra.mxu0 %v2190
    %2216 = vmatprep.subr.mxu0 0.0
    %2217 = vmatpush1.msra.mxu0 %v2191
    %2218 = vmatprep.subr.mxu0 0.0
    %2219 = vmatpush1.msra.mxu0 %v2192
    %2220 = vmatprep.subr.mxu0 0.0
    %2221 = vmatpush1.msra.mxu0 %v2193
    %2222 = vmatprep.subr.mxu0 0.0
    %2223 = vmatpush1.msra.mxu0 %v2194
    %2224 = vmatprep.subr.mxu0 0.0
    %2225 = vmatpush1.msra.mxu0 %v2195
    %2226 = vmatprep.subr.mxu0 0.0
    %2227 = vmatpush1.msra.mxu0 %v2196
    %2228 = vmatprep.subr.mxu0 0.0
    %2229 = vmatpush1.msra.mxu0 %v2197
    %2230 = vmatprep.subr.mxu0 0.0
    %2231 = vmatpush1.msra.mxu0 %v2198
    %2232 = vmatprep.subr.mxu0 0.0
    %2233 = vmatpush1.msra.mxu0 0.0
    %2234 = vmatprep.subr.mxu0 0.0
    %2235 = vmatpush1.msra.mxu0 0.0
    %2236 = vmatprep.subr.mxu0 0.0
    %2237 = vmatpush1.msra.mxu0 0.0
    %2238 = vmatprep.subr.mxu0 0.0
    %2239 = vmatpush1.msra.mxu0 0.0
    %2240 = vmatprep.subr.mxu0 0.0
    %2241 = vmatpush1.msra.mxu0 0.0
    %2242 = vmatprep.subr.mxu0 0.0
    %2243 = vmatpush1.msra.mxu0 0.0
    %2244 = vmatprep.subr.mxu0 0.0
    %2245 = vmatpush1.msra.mxu0 0.0
    %2246 = vmatprep.subr.mxu0 0.0
    %2247 = vmatpush1.msra.mxu0 0.0
    %2248 = vmatprep.subr.mxu0 0.0
    %2249 = vmatpush1.msra.mxu0 0.0
    %2250 = vmatprep.subr.mxu0 0.0
    %2251 = vmatpush1.msra.mxu0 0.0
    %2252 = vmatprep.subr.mxu0 0.0
    %2253 = vmatpush1.msra.mxu0 0.0
    %2254 = vmatprep.subr.mxu0 0.0
    %2255 = vmatpush1.msra.mxu0 0.0
    %2256 = vmatprep.subr.mxu0 0.0
    %2257 = vmatpush1.msra.mxu0 0.0
    %2258 = vmatprep.subr.mxu0 0.0
    %2259 = vmatpush1.msra.mxu0 0.0
    %2260 = vmatprep.subr.mxu0 0.0
    %2261 = vmatpush1.msra.mxu0 0.0
    %2262 = vmatprep.subr.mxu0 0.0
    %2263 = vmatpush1.msra.mxu0 0.0
    %2264 = vmatprep.mubr.f32.mxu0 0.0
    %2265 = vmatmul.mubr.f32.gmra.mrb[0].mxu0 %v2182
    %v2266 = vpop.f32.mrb[0].mxu0
    %v2267 = vadd.f32 %v2199, %v2266
    %v2268 = vpop.f32.mrb[0].mxu0
    %2269 = vdwg.mxu0
    %2270 = vst [vmem:[#allocation17] sm:$0xff] %v2267
    // Predicated region
    $region74: #{tpu_custom_call.1} parent=1 // pred_check
      _
    $region75: #{tpu_custom_call.1} parent=1 // pred_check_branch
      %2272 = sbr.rel (0) target = $region77
    $region76: #{tpu_custom_call.1} parent=1 // pred_region
      %s2274 = ssub.s32 128, 128
      %2275 = vsyncadd [#allocation4], %s2274
      %s2277 = sshll.u32 [#allocation17], 4
      %s2278 = int_to_ptr.vmem [resolvable:$true] %s2277
      %2280 = dma.vmem_to_hbm [thread:$0]  %s2278, 128, %s9, [#allocation4]
    $region77: #{tpu_custom_call.1} parent=1 // pred_fallthru
      _
    // Predicated region
    $region78: #{tpu_custom_call.1} parent=1 // pred_check
      _
    $region79: #{tpu_custom_call.1} parent=1 // pred_check_branch
      %2282 = sbr.rel (0) target = $region81
    $region80: #{tpu_custom_call.1} parent=1 // pred_region
      %2283 = dma.done [#allocation4], 128
    $region81: #{tpu_custom_call.1} parent=1 // pred_fallthru
      _
    %2284 = vsyncpa [#allocation3], 1
    %2285 = vsyncpa [#allocation6], 1
    %2286 = vsyncpa [#allocation9], 1
    %2287 = vsyncpa [#allocation12], 1
    %2288 = vsyncpa [#allocation15], 1
    %2289 = vsyncpa [#allocation4], 1

</llo_original>
